<compile_context>
chip_gen: v5e
topology: v5e:2x2
jax: 0.10.0
libtpu: 0.0.40
codegen_flags: <defaults>
</compile_context>

<pallas_src>
import numpy as np
import jax
import jax.numpy as jnp
from jax.experimental import pallas as pl
from jax.experimental.pallas import tpu as pltpu


MAX_DEPOOLS = [True, False, True, False, True, False, True, False]


# ------------------------------ fused kernel ------------------------------

def _decoder_kernel(x_ref, i0_ref, i1_ref, i2_ref, i3_ref,
                    rd0_ref, rd1_ref, rd2_ref, rd3_ref,
                    rc0_ref, rc1_ref, rc2_ref, rc3_ref,
                    tg0_ref, tg1_ref, tg2_ref, tg3_ref,
                    wb1_ref, wb3_ref, wb5_ref,
                    sh1_ref, sh3_ref, sh5_ref,
                    wr_ref, rs_ref, b_ref, o_ref):
    """Whole decoder for one block of S samples; everything stays in VMEM."""
    f32 = jnp.float32

    def mm(a, b):
        return jnp.dot(a, b, preferred_element_type=f32)

    def unpool(a, idx_ref, rd_ref, rc_ref, tg_ref):
        # MaxUnpool2d(kernel_size=2) on an (S*H, W*E) slab:
        #   row 2x upsample  = constant (2SH, SH) 0/1 matmul (per-sample blocks)
        #   col 2x upsample  = constant (WE, 2WE) 0/1 matmul
        #   keep only the positions named by the pooling index (exact f32
        #   equality: indices are small ints copied exactly through the 0/1
        #   matmuls).
        # TODO(synk): indices are assumed window-local (as MaxPool2d(2)
        # produces); arbitrary out-of-window indices would need a scatter.
        rd = rd_ref[...]
        rc = rc_ref[...]
        xu = mm(mm(rd, a), rc)                 # value path
        iu = mm(mm(rd, idx_ref[...]), rc)      # index path (exact copies)
        return jnp.where(iu == tg_ref[...], xu, jnp.zeros_like(xu))

    def conv_s1(a, wb_ref, sh_ref):
        # ConvTranspose2d(k=3, s=1, p=1, bias=False) on an (S*H, W*E) slab:
        # 3 block-Toeplitz column matmuls (one per kh tap) + 2 per-sample
        # row-shift matmuls (kh=1 needs no shift).
        out = mm(a, wb_ref[1])
        out = out + mm(sh_ref[0], mm(a, wb_ref[0]))
        out = out + mm(sh_ref[1], mm(a, wb_ref[2]))
        return out

    h = x_ref[...]                                       # (S, E)
    h = unpool(h, i0_ref, rd0_ref, rc0_ref, tg0_ref)     # (2S, 2E)
    h = conv_s1(h, wb1_ref, sh1_ref)                     # (2S, 2E)
    h = unpool(h, i1_ref, rd1_ref, rc1_ref, tg1_ref)     # (4S, 4E)
    h = conv_s1(h, wb3_ref, sh3_ref)                     # (4S, 4E)
    h = unpool(h, i2_ref, rd2_ref, rc2_ref, tg2_ref)     # (8S, 8E)
    h = conv_s1(h, wb5_ref, sh5_ref)                     # (8S, 8E)
    h = unpool(h, i3_ref, rd3_ref, rc3_ref, tg3_ref)     # (16S, 16E)

    # ConvTranspose2d(k=3, s=2, p=1, bias=True) evaluated directly at output
    # resolution: out = bias + sum_kh RS[kh] @ (h @ WR[kh]); lane-dense store.
    acc = mm(rs_ref[0], mm(h, wr_ref[0]))
    acc = acc + mm(rs_ref[1], mm(h, wr_ref[1]))
    acc = acc + mm(rs_ref[2], mm(h, wr_ref[2]))
    o_ref[...] = (acc + b_ref[...]).astype(o_ref.dtype)


# --------------------- constant builders (wrapper glue) ---------------------

def _row_dup(S, H):
    # (2SH, SH): out_row s*2H+oh reads in_row s*H + oh//2 (per-sample 2x rows).
    d = np.repeat(np.eye(H, dtype=np.float32), 2, axis=0)
    return np.kron(np.eye(S, dtype=np.float32), d)


def _col_dup(W, C):
    # (W*C, 2W*C): duplicates every C-wide lane block (column 2x upsample).
    u = np.repeat(np.eye(W, dtype=np.float32), 2, axis=1)
    return np.kron(u, np.eye(C, dtype=np.float32))


def _unpool_target(S, H, W, C):
    # (2SH, 2WC): flat output index named by each output position, tiled S x.
    oh = np.arange(2 * H, dtype=np.int64)[:, None]
    ow = np.arange(2 * W * C, dtype=np.int64)[None, :] // C
    t = (oh * (2 * W) + ow).astype(np.float32)
    return np.tile(t, (S, 1))


def _conv_s1_weights(w_pt, W):
    # ConvTranspose2d(k=3, s=1, p=1) column weights, one per kh tap:
    #   WB[kh][iw*Ci+ci, ow*Co+co] = w[ci, co, kh, ow-iw+1]  (tri-diag blocks)
    w = np.asarray(w_pt, dtype=np.float32)
    mats = []
    for kh in range(3):
        m = np.zeros((W * w.shape[0], W * w.shape[1]), np.float32)
        for kw in range(3):
            m += np.kron(np.eye(W, k=kw - 1, dtype=np.float32), w[:, :, kh, kw])
        mats.append(m)
    return np.stack(mats)                                 # (3, W*Ci, W*Co)


def _conv_s1_shifts(S, H):
    # Per-sample row-shift matrices for kh=0 (read row oh+1) and kh=2 (oh-1).
    lo = np.kron(np.eye(S, dtype=np.float32), np.eye(H, k=1, dtype=np.float32))
    hi = np.kron(np.eye(S, dtype=np.float32), np.eye(H, k=-1, dtype=np.float32))
    return np.stack([lo, hi])                              # (2, SH, SH)


def _conv_s2_weights(w_pt, win, wout):
    # ConvTranspose2d(k=3, s=2, p=1) column weights per kh:
    #   WR[kh][iw*Ci+ci, ow*Co+co] = w[ci, co, kh, kw] with ow = 2*iw - 1 + kw.
    w = np.asarray(w_pt, dtype=np.float32)
    mats = []
    for kh in range(3):
        m = np.zeros((win * w.shape[0], wout * w.shape[1]), np.float32)
        for kw in range(3):
            g = np.zeros((win, wout), np.float32)
            for iw in range(win):
                ow = 2 * iw - 1 + kw
                if 0 <= ow < wout:
                    g[iw, ow] = 1.0
            m += np.kron(g, w[:, :, kh, kw])
        mats.append(m)
    return np.stack(mats)                                  # (3, win*Ci, wout*Co)


def _conv_s2_row_spread(S, hin, hout):
    # RS[kh][s*hout+oh, s*hin+ih] = 1 iff oh = 2*ih - 1 + kh and 0<=ih<hin.
    mats = []
    for kh in range(3):
        r = np.zeros((hout, hin), np.float32)
        for oh in range(hout):
            t = oh + 1 - kh
            if t >= 0 and t % 2 == 0 and t // 2 < hin:
                r[oh, t // 2] = 1.0
        mats.append(np.kron(np.eye(S, dtype=np.float32), r))
    return np.stack(mats)                                  # (3, S*hout, S*hin)


def _pick_batch(N, s_max=8):
    # Largest divisor of N <= s_max, preferring to keep the grid length >= 2
    # (so v7x can shard blocks across its 2 TensorCores).
    divs = [d for d in range(1, min(N, s_max) + 1) if N % d == 0]
    pref = [d for d in divs if N // d >= 2] or divs
    return max(pref)


# ------------------------------ decoder forward ------------------------------

def decoder_forward(params, x, indices, sizes, s_max=8):
    """Mirrors DecoderDeconvAerialPastis.forward with one fused Pallas kernel.

    x: (B, T, embed_dim); indices: list of 4 NHWC int32 pooling-index maps;
    sizes: list of 10 (H, W) tuples (two are deleted, as in the PyTorch code).
    Returns (B, T, in_channels, H_out, W_out).
    """
    sizes = list(sizes)
    del sizes[-3]
    del sizes[-2]
    B, T, E = x.shape
    N = B * T
    Co = params["w7"].shape[1]

    # static architecture checks (spatial sizes must be compile-time constants)
    assert tuple(sizes[0]) == (2, 2) and tuple(sizes[1]) == tuple(sizes[0])
    assert tuple(sizes[2]) == (2 * sizes[1][0], 2 * sizes[1][1])
    assert tuple(sizes[3]) == tuple(sizes[2])
    assert tuple(sizes[4]) == (2 * sizes[3][0], 2 * sizes[3][1])
    assert tuple(sizes[5]) == tuple(sizes[4])
    assert tuple(sizes[6]) == (2 * sizes[5][0], 2 * sizes[5][1])
    hin, win = sizes[6]
    hout, wout = sizes[7]

    S = _pick_batch(N, s_max)
    G = N // S

    # Input geometry (H, W) of the four MaxUnpool2d layers.
    geo = [(1, 1), tuple(sizes[1]), tuple(sizes[3]), tuple(sizes[5])]

    # ---- constants folded from weights / structure (wrapper glue) ----
    rds = [jnp.asarray(_row_dup(S, h)) for (h, w) in geo]
    rcs = [jnp.asarray(_col_dup(w, E)) for (h, w) in geo]
    tgs = [jnp.asarray(_unpool_target(S, h, w, E)) for (h, w) in geo]
    wb1 = jnp.asarray(_conv_s1_weights(params["w1"], sizes[1][1]))
    wb3 = jnp.asarray(_conv_s1_weights(params["w3"], sizes[3][1]))
    wb5 = jnp.asarray(_conv_s1_weights(params["w5"], sizes[5][1]))
    sh1 = jnp.asarray(_conv_s1_shifts(S, sizes[1][0]))
    sh3 = jnp.asarray(_conv_s1_shifts(S, sizes[3][0]))
    sh5 = jnp.asarray(_conv_s1_shifts(S, sizes[5][0]))
    wr = jnp.asarray(_conv_s2_weights(params["w7"], win, wout))
    rsf = jnp.asarray(_conv_s2_row_spread(S, hin, hout))
    bia = jnp.asarray(np.tile(np.asarray(params["b7"], np.float32),
                              wout).reshape(1, wout * Co))

    # ---- lane-dense (G, S*rows, W*C) layouts (cheap HBM reshapes) ----
    x_in = x.reshape(G, S, E).astype(jnp.float32)
    idx_in = []
    for k, idx in enumerate(indices):
        Hk, Wk = geo[k]
        idx_in.append(idx.reshape(G, S * Hk, Wk * E).astype(jnp.float32))

    blk3 = lambda n: (n, 0, 0)
    c2 = lambda n: (0, 0)
    c3 = lambda n: (0, 0, 0)

    in_specs = (
        [pl.BlockSpec((None, S, E), blk3)]
        + [pl.BlockSpec((None,) + tuple(a.shape[1:]), blk3) for a in idx_in]
        + [pl.BlockSpec(tuple(a.shape), c2) for a in rds]
        + [pl.BlockSpec(tuple(a.shape), c2) for a in rcs]
        + [pl.BlockSpec(tuple(a.shape), c2) for a in tgs]
        + [pl.BlockSpec(tuple(a.shape), c3) for a in (wb1, wb3, wb5)]
        + [pl.BlockSpec(tuple(a.shape), c3) for a in (sh1, sh3, sh5)]
        + [pl.BlockSpec(tuple(wr.shape), c3),
           pl.BlockSpec(tuple(rsf.shape), c3),
           pl.BlockSpec(tuple(bia.shape), c2)]
    )

    # advisory cost estimate (per review)
    def _mmf(m, k, n):
        return 2 * m * k * n
    flops = 0
    for (h, w) in geo:
        ri, ro, li, lo = S * h, 2 * S * h, w * E, 2 * w * E
        flops += 2 * (_mmf(ro, ri, li) + _mmf(ro, li, lo))
    for (h, w) in (tuple(sizes[1]), tuple(sizes[3]), tuple(sizes[5])):
        r, l = S * h, w * E
        flops += 3 * _mmf(r, l, l) + 2 * _mmf(r, r, l)
    flops += 3 * (_mmf(S * hin, win * E, wout * Co)
                  + _mmf(S * hout, S * hin, wout * Co))
    flops *= G
    bytes_in = 4 * (int(x_in.size) + sum(int(a.size) for a in idx_in)
                    + sum(int(a.size) for a in rds + rcs + tgs)
                    + int(wb1.size) + int(wb3.size) + int(wb5.size)
                    + int(sh1.size) + int(sh3.size) + int(sh5.size)
                    + int(wr.size) + int(rsf.size) + int(bia.size))
    bytes_out = 4 * G * S * hout * wout * Co
    cost = pl.CostEstimate(flops=int(flops), transcendentals=0,
                           bytes_accessed=int(bytes_in + bytes_out))

    out3 = pl.pallas_call(
        _decoder_kernel,
        out_shape=jax.ShapeDtypeStruct((G, S * hout, wout * Co), jnp.float32),
        grid=(G,),
        in_specs=in_specs,
        out_specs=pl.BlockSpec((None, S * hout, wout * Co), blk3),
        compiler_params=pltpu.CompilerParams(
            dimension_semantics=("parallel",),
            vmem_limit_bytes=32 * 1024 * 1024),
        cost_estimate=cost,
    )(x_in, *idx_in, *rds, *rcs, *tgs,
      wb1, wb3, wb5, sh1, sh3, sh5, wr, rsf, bia)

    return out3.reshape(B, T, hout, wout, Co).transpose(0, 1, 4, 2, 3)


# --------------------------- pure-JAX reference ---------------------------

def _flip_tr(w_pt):
    # PyTorch ConvTranspose2d weight (Cin, Cout, kh, kw) -> HWIO conv weight,
    # spatially flipped (transpose-conv == conv with flipped kernel).
    return jnp.transpose(w_pt[:, :, ::-1, ::-1], (2, 3, 0, 1))


def _ref_unpool(x, idx, out_hw):
    N, H, W, C = x.shape
    Ho, Wo = out_hw
    out = jnp.zeros((N, Ho * Wo, C), x.dtype)
    n_i = jnp.arange(N)[:, None, None]
    c_i = jnp.arange(C)[None, None, :]
    out = out.at[n_i, idx.reshape(N, H * W, C), c_i].set(x.reshape(N, H * W, C))
    return out.reshape(N, Ho, Wo, C)


def _ref_conv_t(x, w_pt, bias, stride, out_hw):
    Cout = w_pt.shape[1]
    Ho, Wo = out_hw
    H = x.shape[1]
    pad_lo = 3 - 1 - 1
    op = Ho - ((H - 1) * stride - 2 * 1 + 3)
    out = jax.lax.conv_general_dilated(
        x, _flip_tr(w_pt), window_strides=(1, 1),
        padding=[(pad_lo, pad_lo + op), (pad_lo, pad_lo + op)],
        lhs_dilation=(stride, stride),
        dimension_numbers=("NHWC", "HWIO", "NHWC"))
    if bias is not None:
        out = out + bias.reshape(1, 1, 1, Cout)
    return out


def decoder_forward_ref(params, x, indices, sizes):
    sizes = list(sizes)
    del sizes[-3]
    del sizes[-2]
    B, T, E = x.shape
    h = x.reshape(B * T, 1, 1, E)
    conv_ws = [params["w1"], params["w3"], params["w5"], params["w7"]]
    c = 0
    conv_i = 0
    for i in range(8):
        if MAX_DEPOOLS[i]:
            h = _ref_unpool(h, indices[c], sizes[i])
            c += 1
        elif i < 7:
            h = _ref_conv_t(h, conv_ws[conv_i], None, 1, sizes[i])
            conv_i += 1
        else:
            h = _ref_conv_t(h, conv_ws[conv_i], params["b7"], 2, sizes[i])
    N, Ho, Wo, Co = h.shape
    return h.reshape(B, T, Ho, Wo, Co).transpose(0, 1, 4, 2, 3)


# ----------------------------------- main -----------------------------------

if __name__ == "__main__":
    B, T, E, IN_CH = 2, 2, 32, 4               # small shapes: embed_dim=32, in_channels=4
    key = jax.random.PRNGKey(0)
    k = jax.random.split(key, 12)

    x = jax.random.normal(k[0], (B, T, E), jnp.float32)
    params = {
        "w1": 0.1 * jax.random.normal(k[1], (E, E, 3, 3), jnp.float32),
        "w3": 0.1 * jax.random.normal(k[2], (E, E, 3, 3), jnp.float32),
        "w5": 0.1 * jax.random.normal(k[3], (E, E, 3, 3), jnp.float32),
        "w7": 0.1 * jax.random.normal(k[4], (E, IN_CH, 3, 3), jnp.float32),
        "b7": 0.01 * jax.random.normal(k[5], (IN_CH,), jnp.float32),
    }
    N = B * T

    def make_idx(kk, H, W, Wout):
        k1, k2 = jax.random.split(kk)
        dh = jax.random.randint(k1, (N, H, W, E), 0, 2)
        dw = jax.random.randint(k2, (N, H, W, E), 0, 2)
        hh = jnp.arange(H).reshape(1, H, 1, 1)
        ww = jnp.arange(W).reshape(1, 1, W, 1)
        return ((2 * hh + dh) * Wout + (2 * ww + dw)).astype(jnp.int32)

    # Pooling indices for the 4 MaxUnpool2d layers (inputs 1x1, 2x2, 4x4, 8x8).
    indices = [
        make_idx(k[6], 1, 1, 2),
        make_idx(k[7], 2, 2, 4),
        make_idx(k[8], 4, 4, 8),
        make_idx(k[9], 8, 8, 16),
    ]
    # Pre-deletion sizes list (the two dummies are removed inside the forward,
    # matching `del sizes[-3]; del sizes[-2]` in the PyTorch module).
    sizes = [(2, 2), (2, 2), (4, 4), (4, 4), (8, 8), (8, 8), (16, 16),
             (99, 99), (99, 99), (32, 32)]

    out = decoder_forward(params, x, indices, sizes)
    out = jax.block_until_ready(out)
    assert out.shape == (B, T, IN_CH, 32, 32), out.shape

    ref = decoder_forward_ref(params, x, indices, sizes)
    err = float(jnp.max(jnp.abs(out - ref)))
    assert jnp.allclose(out, ref, rtol=1e-4, atol=1e-4), err

    print("KERNEL_OK")
</pallas_src>

<mosaic_0001>
module attributes {stable_mosaic.version = 11 : i64} {
  func.func @_decoder_kernel(%arg0: i32, %arg1: memref<1x2x32xf32, #tpu.memory_space<vmem>>, %arg2: memref<1x2x32xf32, #tpu.memory_space<vmem>>, %arg3: memref<1x4x64xf32, #tpu.memory_space<vmem>>, %arg4: memref<1x8x128xf32, #tpu.memory_space<vmem>>, %arg5: memref<1x16x256xf32, #tpu.memory_space<vmem>>, %arg6: memref<4x2xf32, #tpu.memory_space<vmem>>, %arg7: memref<8x4xf32, #tpu.memory_space<vmem>>, %arg8: memref<16x8xf32, #tpu.memory_space<vmem>>, %arg9: memref<32x16xf32, #tpu.memory_space<vmem>>, %arg10: memref<32x64xf32, #tpu.memory_space<vmem>>, %arg11: memref<64x128xf32, #tpu.memory_space<vmem>>, %arg12: memref<128x256xf32, #tpu.memory_space<vmem>>, %arg13: memref<256x512xf32, #tpu.memory_space<vmem>>, %arg14: memref<4x64xf32, #tpu.memory_space<vmem>>, %arg15: memref<8x128xf32, #tpu.memory_space<vmem>>, %arg16: memref<16x256xf32, #tpu.memory_space<vmem>>, %arg17: memref<32x512xf32, #tpu.memory_space<vmem>>, %arg18: memref<3x64x64xf32, #tpu.memory_space<vmem>>, %arg19: memref<3x128x128xf32, #tpu.memory_space<vmem>>, %arg20: memref<3x256x256xf32, #tpu.memory_space<vmem>>, %arg21: memref<2x4x4xf32, #tpu.memory_space<vmem>>, %arg22: memref<2x8x8xf32, #tpu.memory_space<vmem>>, %arg23: memref<2x16x16xf32, #tpu.memory_space<vmem>>, %arg24: memref<3x512x128xf32, #tpu.memory_space<vmem>>, %arg25: memref<3x64x32xf32, #tpu.memory_space<vmem>>, %arg26: memref<1x128xf32, #tpu.memory_space<vmem>>, %arg27: memref<1x64x128xf32, #tpu.memory_space<vmem>>) attributes {dimension_semantics = [#tpu.dimension_semantics<parallel>], iteration_bounds = array<i64: 2>, scalar_prefetch = 0 : i64, scratch_operands = 0 : i64, tpu.core_type = #tpu.core_type<tc>, window_params = [{transform_indices = @transform_0, window_bounds = array<i64: 1, 2, 32>}, {transform_indices = @transform_1, window_bounds = array<i64: 1, 2, 32>}, {transform_indices = @transform_2, window_bounds = array<i64: 1, 4, 64>}, {transform_indices = @transform_3, window_bounds = array<i64: 1, 8, 128>}, {transform_indices = @transform_4, window_bounds = array<i64: 1, 16, 256>}, {pipeline_mode = #tpu.pipeline_mode<synchronous>, transform_indices = @transform_5, window_bounds = array<i64: 4, 2>}, {pipeline_mode = #tpu.pipeline_mode<synchronous>, transform_indices = @transform_6, window_bounds = array<i64: 8, 4>}, {pipeline_mode = #tpu.pipeline_mode<synchronous>, transform_indices = @transform_7, window_bounds = array<i64: 16, 8>}, {pipeline_mode = #tpu.pipeline_mode<synchronous>, transform_indices = @transform_8, window_bounds = array<i64: 32, 16>}, {pipeline_mode = #tpu.pipeline_mode<synchronous>, transform_indices = @transform_9, window_bounds = array<i64: 32, 64>}, {pipeline_mode = #tpu.pipeline_mode<synchronous>, transform_indices = @transform_10, window_bounds = array<i64: 64, 128>}, {pipeline_mode = #tpu.pipeline_mode<synchronous>, transform_indices = @transform_11, window_bounds = array<i64: 128, 256>}, {pipeline_mode = #tpu.pipeline_mode<synchronous>, transform_indices = @transform_12, window_bounds = array<i64: 256, 512>}, {pipeline_mode = #tpu.pipeline_mode<synchronous>, transform_indices = @transform_13, window_bounds = array<i64: 4, 64>}, {pipeline_mode = #tpu.pipeline_mode<synchronous>, transform_indices = @transform_14, window_bounds = array<i64: 8, 128>}, {pipeline_mode = #tpu.pipeline_mode<synchronous>, transform_indices = @transform_15, window_bounds = array<i64: 16, 256>}, {pipeline_mode = #tpu.pipeline_mode<synchronous>, transform_indices = @transform_16, window_bounds = array<i64: 32, 512>}, {pipeline_mode = #tpu.pipeline_mode<synchronous>, transform_indices = @transform_17, window_bounds = array<i64: 3, 64, 64>}, {pipeline_mode = #tpu.pipeline_mode<synchronous>, transform_indices = @transform_18, window_bounds = array<i64: 3, 128, 128>}, {pipeline_mode = #tpu.pipeline_mode<synchronous>, transform_indices = @transform_19, window_bounds = array<i64: 3, 256, 256>}, {pipeline_mode = #tpu.pipeline_mode<synchronous>, transform_indices = @transform_20, window_bounds = array<i64: 2, 4, 4>}, {pipeline_mode = #tpu.pipeline_mode<synchronous>, transform_indices = @transform_21, window_bounds = array<i64: 2, 8, 8>}, {pipeline_mode = #tpu.pipeline_mode<synchronous>, transform_indices = @transform_22, window_bounds = array<i64: 2, 16, 16>}, {pipeline_mode = #tpu.pipeline_mode<synchronous>, transform_indices = @transform_23, window_bounds = array<i64: 3, 512, 128>}, {pipeline_mode = #tpu.pipeline_mode<synchronous>, transform_indices = @transform_24, window_bounds = array<i64: 3, 64, 32>}, {pipeline_mode = #tpu.pipeline_mode<synchronous>, transform_indices = @transform_25, window_bounds = array<i64: 1, 128>}, {transform_indices = @transform_26, window_bounds = array<i64: 1, 64, 128>}]} {
    %c0 = arith.constant 0 : index
    %c0_0 = arith.constant 0 : index
    %c0_1 = arith.constant 0 : index
    %0 = vector.load %arg1[%c0, %c0_0, %c0_1] : memref<1x2x32xf32, #tpu.memory_space<vmem>>, vector<1x2x32xf32>
    %1 = vector.shape_cast %0 : vector<1x2x32xf32> to vector<2x32xf32>
    %c0_2 = arith.constant 0 : index
    %c0_3 = arith.constant 0 : index
    %2 = vector.load %arg6[%c0_2, %c0_3] : memref<4x2xf32, #tpu.memory_space<vmem>>, vector<4x2xf32>
    %c0_4 = arith.constant 0 : index
    %c0_5 = arith.constant 0 : index
    %3 = vector.load %arg10[%c0_4, %c0_5] : memref<32x64xf32, #tpu.memory_space<vmem>>, vector<32x64xf32>
    %cst = arith.constant dense<0.000000e+00> : vector<4x32xf32>
    %4 = tpu.matmul %2, %1, %cst {dimension_numbers = #tpu.dot_dimension_numbers<[1], [0], [0], [1], [0, 0, 1, 1], [], []>} : vector<4x2xf32>, vector<2x32xf32>, vector<4x32xf32> -> vector<4x32xf32>
    %cst_6 = arith.constant dense<0.000000e+00> : vector<4x64xf32>
    %5 = tpu.matmul %4, %3, %cst_6 {dimension_numbers = #tpu.dot_dimension_numbers<[1], [0], [0], [1], [0, 0, 1, 1], [], []>} : vector<4x32xf32>, vector<32x64xf32>, vector<4x64xf32> -> vector<4x64xf32>
    %c0_7 = arith.constant 0 : index
    %c0_8 = arith.constant 0 : index
    %c0_9 = arith.constant 0 : index
    %6 = vector.load %arg2[%c0_7, %c0_8, %c0_9] : memref<1x2x32xf32, #tpu.memory_space<vmem>>, vector<1x2x32xf32>
    %7 = vector.shape_cast %6 : vector<1x2x32xf32> to vector<2x32xf32>
    %cst_10 = arith.constant dense<0.000000e+00> : vector<4x32xf32>
    %8 = tpu.matmul %2, %7, %cst_10 {dimension_numbers = #tpu.dot_dimension_numbers<[1], [0], [0], [1], [0, 0, 1, 1], [], []>} : vector<4x2xf32>, vector<2x32xf32>, vector<4x32xf32> -> vector<4x32xf32>
    %cst_11 = arith.constant dense<0.000000e+00> : vector<4x64xf32>
    %9 = tpu.matmul %8, %3, %cst_11 {dimension_numbers = #tpu.dot_dimension_numbers<[1], [0], [0], [1], [0, 0, 1, 1], [], []>} : vector<4x32xf32>, vector<32x64xf32>, vector<4x64xf32> -> vector<4x64xf32>
    %c0_12 = arith.constant 0 : index
    %c0_13 = arith.constant 0 : index
    %10 = vector.load %arg14[%c0_12, %c0_13] : memref<4x64xf32, #tpu.memory_space<vmem>>, vector<4x64xf32>
    %11 = arith.cmpf oeq, %9, %10 : vector<4x64xf32>
    %cst_14 = arith.constant 0.000000e+00 : f32
    %12 = vector.broadcast %cst_14 : f32 to vector<4x64xf32>
    %13 = arith.select %11, %5, %12 : vector<4x64xi1>, vector<4x64xf32>
    %c1 = arith.constant 1 : index
    %c0_15 = arith.constant 0 : index
    %c0_16 = arith.constant 0 : index
    %14 = vector.load %arg18[%c1, %c0_15, %c0_16] : memref<3x64x64xf32, #tpu.memory_space<vmem>>, vector<1x64x64xf32>
    %15 = vector.shape_cast %14 : vector<1x64x64xf32> to vector<64x64xf32>
    %cst_17 = arith.constant dense<0.000000e+00> : vector<4x64xf32>
    %16 = tpu.matmul %13, %15, %cst_17 {dimension_numbers = #tpu.dot_dimension_numbers<[1], [0], [0], [1], [0, 0, 1, 1], [], []>} : vector<4x64xf32>, vector<64x64xf32>, vector<4x64xf32> -> vector<4x64xf32>
    %c0_18 = arith.constant 0 : index
    %c0_19 = arith.constant 0 : index
    %c0_20 = arith.constant 0 : index
    %17 = vector.load %arg21[%c0_18, %c0_19, %c0_20] : memref<2x4x4xf32, #tpu.memory_space<vmem>>, vector<1x4x4xf32>
    %18 = vector.shape_cast %17 : vector<1x4x4xf32> to vector<4x4xf32>
    %c0_21 = arith.constant 0 : index
    %c0_22 = arith.constant 0 : index
    %c0_23 = arith.constant 0 : index
    %19 = vector.load %arg18[%c0_21, %c0_22, %c0_23] : memref<3x64x64xf32, #tpu.memory_space<vmem>>, vector<1x64x64xf32>
    %20 = vector.shape_cast %19 : vector<1x64x64xf32> to vector<64x64xf32>
    %cst_24 = arith.constant dense<0.000000e+00> : vector<4x64xf32>
    %21 = tpu.matmul %13, %20, %cst_24 {dimension_numbers = #tpu.dot_dimension_numbers<[1], [0], [0], [1], [0, 0, 1, 1], [], []>} : vector<4x64xf32>, vector<64x64xf32>, vector<4x64xf32> -> vector<4x64xf32>
    %cst_25 = arith.constant dense<0.000000e+00> : vector<4x64xf32>
    %22 = tpu.matmul %18, %21, %cst_25 {dimension_numbers = #tpu.dot_dimension_numbers<[1], [0], [0], [1], [0, 0, 1, 1], [], []>} : vector<4x4xf32>, vector<4x64xf32>, vector<4x64xf32> -> vector<4x64xf32>
    %23 = arith.addf %16, %22 : vector<4x64xf32>
    %c1_26 = arith.constant 1 : index
    %c0_27 = arith.constant 0 : index
    %c0_28 = arith.constant 0 : index
    %24 = vector.load %arg21[%c1_26, %c0_27, %c0_28] : memref<2x4x4xf32, #tpu.memory_space<vmem>>, vector<1x4x4xf32>
    %25 = vector.shape_cast %24 : vector<1x4x4xf32> to vector<4x4xf32>
    %c2 = arith.constant 2 : index
    %c0_29 = arith.constant 0 : index
    %c0_30 = arith.constant 0 : index
    %26 = vector.load %arg18[%c2, %c0_29, %c0_30] : memref<3x64x64xf32, #tpu.memory_space<vmem>>, vector<1x64x64xf32>
    %27 = vector.shape_cast %26 : vector<1x64x64xf32> to vector<64x64xf32>
    %cst_31 = arith.constant dense<0.000000e+00> : vector<4x64xf32>
    %28 = tpu.matmul %13, %27, %cst_31 {dimension_numbers = #tpu.dot_dimension_numbers<[1], [0], [0], [1], [0, 0, 1, 1], [], []>} : vector<4x64xf32>, vector<64x64xf32>, vector<4x64xf32> -> vector<4x64xf32>
    %cst_32 = arith.constant dense<0.000000e+00> : vector<4x64xf32>
    %29 = tpu.matmul %25, %28, %cst_32 {dimension_numbers = #tpu.dot_dimension_numbers<[1], [0], [0], [1], [0, 0, 1, 1], [], []>} : vector<4x4xf32>, vector<4x64xf32>, vector<4x64xf32> -> vector<4x64xf32>
    %30 = arith.addf %23, %29 : vector<4x64xf32>
    %c0_33 = arith.constant 0 : index
    %c0_34 = arith.constant 0 : index
    %31 = vector.load %arg7[%c0_33, %c0_34] : memref<8x4xf32, #tpu.memory_space<vmem>>, vector<8x4xf32>
    %c0_35 = arith.constant 0 : index
    %c0_36 = arith.constant 0 : index
    %32 = vector.load %arg11[%c0_35, %c0_36] : memref<64x128xf32, #tpu.memory_space<vmem>>, vector<64x128xf32>
    %cst_37 = arith.constant dense<0.000000e+00> : vector<8x64xf32>
    %33 = tpu.matmul %31, %30, %cst_37 {dimension_numbers = #tpu.dot_dimension_numbers<[1], [0], [0], [1], [0, 0, 1, 1], [], []>} : vector<8x4xf32>, vector<4x64xf32>, vector<8x64xf32> -> vector<8x64xf32>
    %cst_38 = arith.constant dense<0.000000e+00> : vector<8x128xf32>
    %34 = tpu.matmul %33, %32, %cst_38 {dimension_numbers = #tpu.dot_dimension_numbers<[1], [0], [0], [1], [0, 0, 1, 1], [], []>} : vector<8x64xf32>, vector<64x128xf32>, vector<8x128xf32> -> vector<8x128xf32>
    %c0_39 = arith.constant 0 : index
    %c0_40 = arith.constant 0 : index
    %c0_41 = arith.constant 0 : index
    %35 = vector.load %arg3[%c0_39, %c0_40, %c0_41] : memref<1x4x64xf32, #tpu.memory_space<vmem>>, vector<1x4x64xf32>
    %36 = vector.shape_cast %35 : vector<1x4x64xf32> to vector<4x64xf32>
    %cst_42 = arith.constant dense<0.000000e+00> : vector<8x64xf32>
    %37 = tpu.matmul %31, %36, %cst_42 {dimension_numbers = #tpu.dot_dimension_numbers<[1], [0], [0], [1], [0, 0, 1, 1], [], []>} : vector<8x4xf32>, vector<4x64xf32>, vector<8x64xf32> -> vector<8x64xf32>
    %cst_43 = arith.constant dense<0.000000e+00> : vector<8x128xf32>
    %38 = tpu.matmul %37, %32, %cst_43 {dimension_numbers = #tpu.dot_dimension_numbers<[1], [0], [0], [1], [0, 0, 1, 1], [], []>} : vector<8x64xf32>, vector<64x128xf32>, vector<8x128xf32> -> vector<8x128xf32>
    %c0_44 = arith.constant 0 : index
    %c0_45 = arith.constant 0 : index
    %39 = vector.load %arg15[%c0_44, %c0_45] : memref<8x128xf32, #tpu.memory_space<vmem>>, vector<8x128xf32>
    %40 = arith.cmpf oeq, %38, %39 : vector<8x128xf32>
    %cst_46 = arith.constant 0.000000e+00 : f32
    %41 = vector.broadcast %cst_46 : f32 to vector<8x128xf32>
    %42 = arith.select %40, %34, %41 : vector<8x128xi1>, vector<8x128xf32>
    %c1_47 = arith.constant 1 : index
    %c0_48 = arith.constant 0 : index
    %c0_49 = arith.constant 0 : index
    %43 = vector.load %arg19[%c1_47, %c0_48, %c0_49] : memref<3x128x128xf32, #tpu.memory_space<vmem>>, vector<1x128x128xf32>
    %44 = vector.shape_cast %43 : vector<1x128x128xf32> to vector<128x128xf32>
    %cst_50 = arith.constant dense<0.000000e+00> : vector<8x128xf32>
    %45 = tpu.matmul %42, %44, %cst_50 {dimension_numbers = #tpu.dot_dimension_numbers<[1], [0], [0], [1], [0, 0, 1, 1], [], []>} : vector<8x128xf32>, vector<128x128xf32>, vector<8x128xf32> -> vector<8x128xf32>
    %c0_51 = arith.constant 0 : index
    %c0_52 = arith.constant 0 : index
    %c0_53 = arith.constant 0 : index
    %46 = vector.load %arg22[%c0_51, %c0_52, %c0_53] : memref<2x8x8xf32, #tpu.memory_space<vmem>>, vector<1x8x8xf32>
    %47 = vector.shape_cast %46 : vector<1x8x8xf32> to vector<8x8xf32>
    %c0_54 = arith.constant 0 : index
    %c0_55 = arith.constant 0 : index
    %c0_56 = arith.constant 0 : index
    %48 = vector.load %arg19[%c0_54, %c0_55, %c0_56] : memref<3x128x128xf32, #tpu.memory_space<vmem>>, vector<1x128x128xf32>
    %49 = vector.shape_cast %48 : vector<1x128x128xf32> to vector<128x128xf32>
    %cst_57 = arith.constant dense<0.000000e+00> : vector<8x128xf32>
    %50 = tpu.matmul %42, %49, %cst_57 {dimension_numbers = #tpu.dot_dimension_numbers<[1], [0], [0], [1], [0, 0, 1, 1], [], []>} : vector<8x128xf32>, vector<128x128xf32>, vector<8x128xf32> -> vector<8x128xf32>
    %cst_58 = arith.constant dense<0.000000e+00> : vector<8x128xf32>
    %51 = tpu.matmul %47, %50, %cst_58 {dimension_numbers = #tpu.dot_dimension_numbers<[1], [0], [0], [1], [0, 0, 1, 1], [], []>} : vector<8x8xf32>, vector<8x128xf32>, vector<8x128xf32> -> vector<8x128xf32>
    %52 = arith.addf %45, %51 : vector<8x128xf32>
    %c1_59 = arith.constant 1 : index
    %c0_60 = arith.constant 0 : index
    %c0_61 = arith.constant 0 : index
    %53 = vector.load %arg22[%c1_59, %c0_60, %c0_61] : memref<2x8x8xf32, #tpu.memory_space<vmem>>, vector<1x8x8xf32>
    %54 = vector.shape_cast %53 : vector<1x8x8xf32> to vector<8x8xf32>
    %c2_62 = arith.constant 2 : index
    %c0_63 = arith.constant 0 : index
    %c0_64 = arith.constant 0 : index
    %55 = vector.load %arg19[%c2_62, %c0_63, %c0_64] : memref<3x128x128xf32, #tpu.memory_space<vmem>>, vector<1x128x128xf32>
    %56 = vector.shape_cast %55 : vector<1x128x128xf32> to vector<128x128xf32>
    %cst_65 = arith.constant dense<0.000000e+00> : vector<8x128xf32>
    %57 = tpu.matmul %42, %56, %cst_65 {dimension_numbers = #tpu.dot_dimension_numbers<[1], [0], [0], [1], [0, 0, 1, 1], [], []>} : vector<8x128xf32>, vector<128x128xf32>, vector<8x128xf32> -> vector<8x128xf32>
    %cst_66 = arith.constant dense<0.000000e+00> : vector<8x128xf32>
    %58 = tpu.matmul %54, %57, %cst_66 {dimension_numbers = #tpu.dot_dimension_numbers<[1], [0], [0], [1], [0, 0, 1, 1], [], []>} : vector<8x8xf32>, vector<8x128xf32>, vector<8x128xf32> -> vector<8x128xf32>
    %59 = arith.addf %52, %58 : vector<8x128xf32>
    %c0_67 = arith.constant 0 : index
    %c0_68 = arith.constant 0 : index
    %60 = vector.load %arg8[%c0_67, %c0_68] : memref<16x8xf32, #tpu.memory_space<vmem>>, vector<16x8xf32>
    %c0_69 = arith.constant 0 : index
    %c0_70 = arith.constant 0 : index
    %61 = vector.load %arg12[%c0_69, %c0_70] : memref<128x256xf32, #tpu.memory_space<vmem>>, vector<128x256xf32>
    %cst_71 = arith.constant dense<0.000000e+00> : vector<16x128xf32>
    %62 = tpu.matmul %60, %59, %cst_71 {dimension_numbers = #tpu.dot_dimension_numbers<[1], [0], [0], [1], [0, 0, 1, 1], [], []>} : vector<16x8xf32>, vector<8x128xf32>, vector<16x128xf32> -> vector<16x128xf32>
    %cst_72 = arith.constant dense<0.000000e+00> : vector<16x256xf32>
    %63 = tpu.matmul %62, %61, %cst_72 {dimension_numbers = #tpu.dot_dimension_numbers<[1], [0], [0], [1], [0, 0, 1, 1], [], []>} : vector<16x128xf32>, vector<128x256xf32>, vector<16x256xf32> -> vector<16x256xf32>
    %c0_73 = arith.constant 0 : index
    %c0_74 = arith.constant 0 : index
    %c0_75 = arith.constant 0 : index
    %64 = vector.load %arg4[%c0_73, %c0_74, %c0_75] : memref<1x8x128xf32, #tpu.memory_space<vmem>>, vector<1x8x128xf32>
    %65 = vector.shape_cast %64 : vector<1x8x128xf32> to vector<8x128xf32>
    %cst_76 = arith.constant dense<0.000000e+00> : vector<16x128xf32>
    %66 = tpu.matmul %60, %65, %cst_76 {dimension_numbers = #tpu.dot_dimension_numbers<[1], [0], [0], [1], [0, 0, 1, 1], [], []>} : vector<16x8xf32>, vector<8x128xf32>, vector<16x128xf32> -> vector<16x128xf32>
    %cst_77 = arith.constant dense<0.000000e+00> : vector<16x256xf32>
    %67 = tpu.matmul %66, %61, %cst_77 {dimension_numbers = #tpu.dot_dimension_numbers<[1], [0], [0], [1], [0, 0, 1, 1], [], []>} : vector<16x128xf32>, vector<128x256xf32>, vector<16x256xf32> -> vector<16x256xf32>
    %c0_78 = arith.constant 0 : index
    %c0_79 = arith.constant 0 : index
    %68 = vector.load %arg16[%c0_78, %c0_79] : memref<16x256xf32, #tpu.memory_space<vmem>>, vector<16x256xf32>
    %69 = arith.cmpf oeq, %67, %68 : vector<16x256xf32>
    %cst_80 = arith.constant 0.000000e+00 : f32
    %70 = vector.broadcast %cst_80 : f32 to vector<16x256xf32>
    %71 = arith.select %69, %63, %70 : vector<16x256xi1>, vector<16x256xf32>
    %c1_81 = arith.constant 1 : index
    %c0_82 = arith.constant 0 : index
    %c0_83 = arith.constant 0 : index
    %72 = vector.load %arg20[%c1_81, %c0_82, %c0_83] : memref<3x256x256xf32, #tpu.memory_space<vmem>>, vector<1x256x256xf32>
    %73 = vector.shape_cast %72 : vector<1x256x256xf32> to vector<256x256xf32>
    %cst_84 = arith.constant dense<0.000000e+00> : vector<16x256xf32>
    %74 = tpu.matmul %71, %73, %cst_84 {dimension_numbers = #tpu.dot_dimension_numbers<[1], [0], [0], [1], [0, 0, 1, 1], [], []>} : vector<16x256xf32>, vector<256x256xf32>, vector<16x256xf32> -> vector<16x256xf32>
    %c0_85 = arith.constant 0 : index
    %c0_86 = arith.constant 0 : index
    %c0_87 = arith.constant 0 : index
    %75 = vector.load %arg23[%c0_85, %c0_86, %c0_87] : memref<2x16x16xf32, #tpu.memory_space<vmem>>, vector<1x16x16xf32>
    %76 = vector.shape_cast %75 : vector<1x16x16xf32> to vector<16x16xf32>
    %c0_88 = arith.constant 0 : index
    %c0_89 = arith.constant 0 : index
    %c0_90 = arith.constant 0 : index
    %77 = vector.load %arg20[%c0_88, %c0_89, %c0_90] : memref<3x256x256xf32, #tpu.memory_space<vmem>>, vector<1x256x256xf32>
    %78 = vector.shape_cast %77 : vector<1x256x256xf32> to vector<256x256xf32>
    %cst_91 = arith.constant dense<0.000000e+00> : vector<16x256xf32>
    %79 = tpu.matmul %71, %78, %cst_91 {dimension_numbers = #tpu.dot_dimension_numbers<[1], [0], [0], [1], [0, 0, 1, 1], [], []>} : vector<16x256xf32>, vector<256x256xf32>, vector<16x256xf32> -> vector<16x256xf32>
    %cst_92 = arith.constant dense<0.000000e+00> : vector<16x256xf32>
    %80 = tpu.matmul %76, %79, %cst_92 {dimension_numbers = #tpu.dot_dimension_numbers<[1], [0], [0], [1], [0, 0, 1, 1], [], []>} : vector<16x16xf32>, vector<16x256xf32>, vector<16x256xf32> -> vector<16x256xf32>
    %81 = arith.addf %74, %80 : vector<16x256xf32>
    %c1_93 = arith.constant 1 : index
    %c0_94 = arith.constant 0 : index
    %c0_95 = arith.constant 0 : index
    %82 = vector.load %arg23[%c1_93, %c0_94, %c0_95] : memref<2x16x16xf32, #tpu.memory_space<vmem>>, vector<1x16x16xf32>
    %83 = vector.shape_cast %82 : vector<1x16x16xf32> to vector<16x16xf32>
    %c2_96 = arith.constant 2 : index
    %c0_97 = arith.constant 0 : index
    %c0_98 = arith.constant 0 : index
    %84 = vector.load %arg20[%c2_96, %c0_97, %c0_98] : memref<3x256x256xf32, #tpu.memory_space<vmem>>, vector<1x256x256xf32>
    %85 = vector.shape_cast %84 : vector<1x256x256xf32> to vector<256x256xf32>
    %cst_99 = arith.constant dense<0.000000e+00> : vector<16x256xf32>
    %86 = tpu.matmul %71, %85, %cst_99 {dimension_numbers = #tpu.dot_dimension_numbers<[1], [0], [0], [1], [0, 0, 1, 1], [], []>} : vector<16x256xf32>, vector<256x256xf32>, vector<16x256xf32> -> vector<16x256xf32>
    %cst_100 = arith.constant dense<0.000000e+00> : vector<16x256xf32>
    %87 = tpu.matmul %83, %86, %cst_100 {dimension_numbers = #tpu.dot_dimension_numbers<[1], [0], [0], [1], [0, 0, 1, 1], [], []>} : vector<16x16xf32>, vector<16x256xf32>, vector<16x256xf32> -> vector<16x256xf32>
    %88 = arith.addf %81, %87 : vector<16x256xf32>
    %c0_101 = arith.constant 0 : index
    %c0_102 = arith.constant 0 : index
    %89 = vector.load %arg9[%c0_101, %c0_102] : memref<32x16xf32, #tpu.memory_space<vmem>>, vector<32x16xf32>
    %c0_103 = arith.constant 0 : index
    %c0_104 = arith.constant 0 : index
    %90 = vector.load %arg13[%c0_103, %c0_104] : memref<256x512xf32, #tpu.memory_space<vmem>>, vector<256x512xf32>
    %cst_105 = arith.constant dense<0.000000e+00> : vector<32x256xf32>
    %91 = tpu.matmul %89, %88, %cst_105 {dimension_numbers = #tpu.dot_dimension_numbers<[1], [0], [0], [1], [0, 0, 1, 1], [], []>} : vector<32x16xf32>, vector<16x256xf32>, vector<32x256xf32> -> vector<32x256xf32>
    %cst_106 = arith.constant dense<0.000000e+00> : vector<32x512xf32>
    %92 = tpu.matmul %91, %90, %cst_106 {dimension_numbers = #tpu.dot_dimension_numbers<[1], [0], [0], [1], [0, 0, 1, 1], [], []>} : vector<32x256xf32>, vector<256x512xf32>, vector<32x512xf32> -> vector<32x512xf32>
    %c0_107 = arith.constant 0 : index
    %c0_108 = arith.constant 0 : index
    %c0_109 = arith.constant 0 : index
    %93 = vector.load %arg5[%c0_107, %c0_108, %c0_109] : memref<1x16x256xf32, #tpu.memory_space<vmem>>, vector<1x16x256xf32>
    %94 = vector.shape_cast %93 : vector<1x16x256xf32> to vector<16x256xf32>
    %cst_110 = arith.constant dense<0.000000e+00> : vector<32x256xf32>
    %95 = tpu.matmul %89, %94, %cst_110 {dimension_numbers = #tpu.dot_dimension_numbers<[1], [0], [0], [1], [0, 0, 1, 1], [], []>} : vector<32x16xf32>, vector<16x256xf32>, vector<32x256xf32> -> vector<32x256xf32>
    %cst_111 = arith.constant dense<0.000000e+00> : vector<32x512xf32>
    %96 = tpu.matmul %95, %90, %cst_111 {dimension_numbers = #tpu.dot_dimension_numbers<[1], [0], [0], [1], [0, 0, 1, 1], [], []>} : vector<32x256xf32>, vector<256x512xf32>, vector<32x512xf32> -> vector<32x512xf32>
    %c0_112 = arith.constant 0 : index
    %c0_113 = arith.constant 0 : index
    %97 = vector.load %arg17[%c0_112, %c0_113] : memref<32x512xf32, #tpu.memory_space<vmem>>, vector<32x512xf32>
    %98 = arith.cmpf oeq, %96, %97 : vector<32x512xf32>
    %cst_114 = arith.constant 0.000000e+00 : f32
    %99 = vector.broadcast %cst_114 : f32 to vector<32x512xf32>
    %100 = arith.select %98, %92, %99 : vector<32x512xi1>, vector<32x512xf32>
    %c0_115 = arith.constant 0 : index
    %c0_116 = arith.constant 0 : index
    %c0_117 = arith.constant 0 : index
    %101 = vector.load %arg25[%c0_115, %c0_116, %c0_117] : memref<3x64x32xf32, #tpu.memory_space<vmem>>, vector<1x64x32xf32>
    %102 = vector.shape_cast %101 : vector<1x64x32xf32> to vector<64x32xf32>
    %c0_118 = arith.constant 0 : index
    %c0_119 = arith.constant 0 : index
    %c0_120 = arith.constant 0 : index
    %103 = vector.load %arg24[%c0_118, %c0_119, %c0_120] : memref<3x512x128xf32, #tpu.memory_space<vmem>>, vector<1x512x128xf32>
    %104 = vector.shape_cast %103 : vector<1x512x128xf32> to vector<512x128xf32>
    %cst_121 = arith.constant dense<0.000000e+00> : vector<32x128xf32>
    %105 = tpu.matmul %100, %104, %cst_121 {dimension_numbers = #tpu.dot_dimension_numbers<[1], [0], [0], [1], [0, 0, 1, 1], [], []>} : vector<32x512xf32>, vector<512x128xf32>, vector<32x128xf32> -> vector<32x128xf32>
    %cst_122 = arith.constant dense<0.000000e+00> : vector<64x128xf32>
    %106 = tpu.matmul %102, %105, %cst_122 {dimension_numbers = #tpu.dot_dimension_numbers<[1], [0], [0], [1], [0, 0, 1, 1], [], []>} : vector<64x32xf32>, vector<32x128xf32>, vector<64x128xf32> -> vector<64x128xf32>
    %c1_123 = arith.constant 1 : index
    %c0_124 = arith.constant 0 : index
    %c0_125 = arith.constant 0 : index
    %107 = vector.load %arg25[%c1_123, %c0_124, %c0_125] : memref<3x64x32xf32, #tpu.memory_space<vmem>>, vector<1x64x32xf32>
    %108 = vector.shape_cast %107 : vector<1x64x32xf32> to vector<64x32xf32>
    %c1_126 = arith.constant 1 : index
    %c0_127 = arith.constant 0 : index
    %c0_128 = arith.constant 0 : index
    %109 = vector.load %arg24[%c1_126, %c0_127, %c0_128] : memref<3x512x128xf32, #tpu.memory_space<vmem>>, vector<1x512x128xf32>
    %110 = vector.shape_cast %109 : vector<1x512x128xf32> to vector<512x128xf32>
    %cst_129 = arith.constant dense<0.000000e+00> : vector<32x128xf32>
    %111 = tpu.matmul %100, %110, %cst_129 {dimension_numbers = #tpu.dot_dimension_numbers<[1], [0], [0], [1], [0, 0, 1, 1], [], []>} : vector<32x512xf32>, vector<512x128xf32>, vector<32x128xf32> -> vector<32x128xf32>
    %cst_130 = arith.constant dense<0.000000e+00> : vector<64x128xf32>
    %112 = tpu.matmul %108, %111, %cst_130 {dimension_numbers = #tpu.dot_dimension_numbers<[1], [0], [0], [1], [0, 0, 1, 1], [], []>} : vector<64x32xf32>, vector<32x128xf32>, vector<64x128xf32> -> vector<64x128xf32>
    %113 = arith.addf %106, %112 : vector<64x128xf32>
    %c2_131 = arith.constant 2 : index
    %c0_132 = arith.constant 0 : index
    %c0_133 = arith.constant 0 : index
    %114 = vector.load %arg25[%c2_131, %c0_132, %c0_133] : memref<3x64x32xf32, #tpu.memory_space<vmem>>, vector<1x64x32xf32>
    %115 = vector.shape_cast %114 : vector<1x64x32xf32> to vector<64x32xf32>
    %c2_134 = arith.constant 2 : index
    %c0_135 = arith.constant 0 : index
    %c0_136 = arith.constant 0 : index
    %116 = vector.load %arg24[%c2_134, %c0_135, %c0_136] : memref<3x512x128xf32, #tpu.memory_space<vmem>>, vector<1x512x128xf32>
    %117 = vector.shape_cast %116 : vector<1x512x128xf32> to vector<512x128xf32>
    %cst_137 = arith.constant dense<0.000000e+00> : vector<32x128xf32>
    %118 = tpu.matmul %100, %117, %cst_137 {dimension_numbers = #tpu.dot_dimension_numbers<[1], [0], [0], [1], [0, 0, 1, 1], [], []>} : vector<32x512xf32>, vector<512x128xf32>, vector<32x128xf32> -> vector<32x128xf32>
    %cst_138 = arith.constant dense<0.000000e+00> : vector<64x128xf32>
    %119 = tpu.matmul %115, %118, %cst_138 {dimension_numbers = #tpu.dot_dimension_numbers<[1], [0], [0], [1], [0, 0, 1, 1], [], []>} : vector<64x32xf32>, vector<32x128xf32>, vector<64x128xf32> -> vector<64x128xf32>
    %120 = arith.addf %113, %119 : vector<64x128xf32>
    %c0_139 = arith.constant 0 : index
    %c0_140 = arith.constant 0 : index
    %121 = vector.load %arg26[%c0_139, %c0_140] : memref<1x128xf32, #tpu.memory_space<vmem>>, vector<1x128xf32>
    %122 = vector.broadcast %121 : vector<1x128xf32> to vector<64x128xf32>
    %123 = arith.addf %120, %122 : vector<64x128xf32>
    %c0_141 = arith.constant 0 : index
    %c0_142 = arith.constant 0 : index
    %c0_143 = arith.constant 0 : index
    %124 = vector.load %arg27[%c0_141, %c0_142, %c0_143] : memref<1x64x128xf32, #tpu.memory_space<vmem>>, vector<1x64x128xf32>
    %125 = vector.shape_cast %124 : vector<1x64x128xf32> to vector<64x128xf32>
    %126 = vector.shape_cast %123 : vector<64x128xf32> to vector<1x64x128xf32>
    tpu.vector_store %arg27[%c0_141, %c0_142, %c0_143], %126 {strides = array<i32>} : memref<1x64x128xf32, #tpu.memory_space<vmem>>, vector<1x64x128xf32>,
    return
  }
  func.func @transform_0(%arg0: i32) -> (i32, i32, i32) {
    %c0_i32 = arith.constant 0 : i32
    %c0_i32_0 = arith.constant 0 : i32
    %c0_i32_1 = arith.constant 0 : i32
    return %arg0, %c0_i32, %c0_i32_0 : i32, i32, i32
  }
  func.func @transform_1(%arg0: i32) -> (i32, i32, i32) {
    %c0_i32 = arith.constant 0 : i32
    %c0_i32_0 = arith.constant 0 : i32
    %c0_i32_1 = arith.constant 0 : i32
    return %arg0, %c0_i32, %c0_i32_0 : i32, i32, i32
  }
  func.func @transform_2(%arg0: i32) -> (i32, i32, i32) {
    %c0_i32 = arith.constant 0 : i32
    %c0_i32_0 = arith.constant 0 : i32
    %c0_i32_1 = arith.constant 0 : i32
    return %arg0, %c0_i32, %c0_i32_0 : i32, i32, i32
  }
  func.func @transform_3(%arg0: i32) -> (i32, i32, i32) {
    %c0_i32 = arith.constant 0 : i32
    %c0_i32_0 = arith.constant 0 : i32
    %c0_i32_1 = arith.constant 0 : i32
    return %arg0, %c0_i32, %c0_i32_0 : i32, i32, i32
  }
  func.func @transform_4(%arg0: i32) -> (i32, i32, i32) {
    %c0_i32 = arith.constant 0 : i32
    %c0_i32_0 = arith.constant 0 : i32
    %c0_i32_1 = arith.constant 0 : i32
    return %arg0, %c0_i32, %c0_i32_0 : i32, i32, i32
  }
  func.func @transform_5(%arg0: i32) -> (i32, i32) {
    %c0_i32 = arith.constant 0 : i32
    %c0_i32_0 = arith.constant 0 : i32
    %c0_i32_1 = arith.constant 0 : i32
    return %c0_i32, %c0_i32_0 : i32, i32
  }
  func.func @transform_6(%arg0: i32) -> (i32, i32) {
    %c0_i32 = arith.constant 0 : i32
    %c0_i32_0 = arith.constant 0 : i32
    %c0_i32_1 = arith.constant 0 : i32
    return %c0_i32, %c0_i32_0 : i32, i32
  }
  func.func @transform_7(%arg0: i32) -> (i32, i32) {
    %c0_i32 = arith.constant 0 : i32
    %c0_i32_0 = arith.constant 0 : i32
    %c0_i32_1 = arith.constant 0 : i32
    return %c0_i32, %c0_i32_0 : i32, i32
  }
  func.func @transform_8(%arg0: i32) -> (i32, i32) {
    %c0_i32 = arith.constant 0 : i32
    %c0_i32_0 = arith.constant 0 : i32
    %c0_i32_1 = arith.constant 0 : i32
    return %c0_i32, %c0_i32_0 : i32, i32
  }
  func.func @transform_9(%arg0: i32) -> (i32, i32) {
    %c0_i32 = arith.constant 0 : i32
    %c0_i32_0 = arith.constant 0 : i32
    %c0_i32_1 = arith.constant 0 : i32
    return %c0_i32, %c0_i32_0 : i32, i32
  }
  func.func @transform_10(%arg0: i32) -> (i32, i32) {
    %c0_i32 = arith.constant 0 : i32
    %c0_i32_0 = arith.constant 0 : i32
    %c0_i32_1 = arith.constant 0 : i32
    return %c0_i32, %c0_i32_0 : i32, i32
  }
  func.func @transform_11(%arg0: i32) -> (i32, i32) {
    %c0_i32 = arith.constant 0 : i32
    %c0_i32_0 = arith.constant 0 : i32
    %c0_i32_1 = arith.constant 0 : i32
    return %c0_i32, %c0_i32_0 : i32, i32
  }
  func.func @transform_12(%arg0: i32) -> (i32, i32) {
    %c0_i32 = arith.constant 0 : i32
    %c0_i32_0 = arith.constant 0 : i32
    %c0_i32_1 = arith.constant 0 : i32
    return %c0_i32, %c0_i32_0 : i32, i32
  }
  func.func @transform_13(%arg0: i32) -> (i32, i32) {
    %c0_i32 = arith.constant 0 : i32
    %c0_i32_0 = arith.constant 0 : i32
    %c0_i32_1 = arith.constant 0 : i32
    return %c0_i32, %c0_i32_0 : i32, i32
  }
  func.func @transform_14(%arg0: i32) -> (i32, i32) {
    %c0_i32 = arith.constant 0 : i32
    %c0_i32_0 = arith.constant 0 : i32
    %c0_i32_1 = arith.constant 0 : i32
    return %c0_i32, %c0_i32_0 : i32, i32
  }
  func.func @transform_15(%arg0: i32) -> (i32, i32) {
    %c0_i32 = arith.constant 0 : i32
    %c0_i32_0 = arith.constant 0 : i32
    %c0_i32_1 = arith.constant 0 : i32
    return %c0_i32, %c0_i32_0 : i32, i32
  }
  func.func @transform_16(%arg0: i32) -> (i32, i32) {
    %c0_i32 = arith.constant 0 : i32
    %c0_i32_0 = arith.constant 0 : i32
    %c0_i32_1 = arith.constant 0 : i32
    return %c0_i32, %c0_i32_0 : i32, i32
  }
  func.func @transform_17(%arg0: i32) -> (i32, i32, i32) {
    %c0_i32 = arith.constant 0 : i32
    %c0_i32_0 = arith.constant 0 : i32
    %c0_i32_1 = arith.constant 0 : i32
    %c0_i32_2 = arith.constant 0 : i32
    return %c0_i32, %c0_i32_0, %c0_i32_1 : i32, i32, i32
  }
  func.func @transform_18(%arg0: i32) -> (i32, i32, i32) {
    %c0_i32 = arith.constant 0 : i32
    %c0_i32_0 = arith.constant 0 : i32
    %c0_i32_1 = arith.constant 0 : i32
    %c0_i32_2 = arith.constant 0 : i32
    return %c0_i32, %c0_i32_0, %c0_i32_1 : i32, i32, i32
  }
  func.func @transform_19(%arg0: i32) -> (i32, i32, i32) {
    %c0_i32 = arith.constant 0 : i32
    %c0_i32_0 = arith.constant 0 : i32
    %c0_i32_1 = arith.constant 0 : i32
    %c0_i32_2 = arith.constant 0 : i32
    return %c0_i32, %c0_i32_0, %c0_i32_1 : i32, i32, i32
  }
  func.func @transform_20(%arg0: i32) -> (i32, i32, i32) {
    %c0_i32 = arith.constant 0 : i32
    %c0_i32_0 = arith.constant 0 : i32
    %c0_i32_1 = arith.constant 0 : i32
    %c0_i32_2 = arith.constant 0 : i32
    return %c0_i32, %c0_i32_0, %c0_i32_1 : i32, i32, i32
  }
  func.func @transform_21(%arg0: i32) -> (i32, i32, i32) {
    %c0_i32 = arith.constant 0 : i32
    %c0_i32_0 = arith.constant 0 : i32
    %c0_i32_1 = arith.constant 0 : i32
    %c0_i32_2 = arith.constant 0 : i32
    return %c0_i32, %c0_i32_0, %c0_i32_1 : i32, i32, i32
  }
  func.func @transform_22(%arg0: i32) -> (i32, i32, i32) {
    %c0_i32 = arith.constant 0 : i32
    %c0_i32_0 = arith.constant 0 : i32
    %c0_i32_1 = arith.constant 0 : i32
    %c0_i32_2 = arith.constant 0 : i32
    return %c0_i32, %c0_i32_0, %c0_i32_1 : i32, i32, i32
  }
  func.func @transform_23(%arg0: i32) -> (i32, i32, i32) {
    %c0_i32 = arith.constant 0 : i32
    %c0_i32_0 = arith.constant 0 : i32
    %c0_i32_1 = arith.constant 0 : i32
    %c0_i32_2 = arith.constant 0 : i32
    return %c0_i32, %c0_i32_0, %c0_i32_1 : i32, i32, i32
  }
  func.func @transform_24(%arg0: i32) -> (i32, i32, i32) {
    %c0_i32 = arith.constant 0 : i32
    %c0_i32_0 = arith.constant 0 : i32
    %c0_i32_1 = arith.constant 0 : i32
    %c0_i32_2 = arith.constant 0 : i32
    return %c0_i32, %c0_i32_0, %c0_i32_1 : i32, i32, i32
  }
  func.func @transform_25(%arg0: i32) -> (i32, i32) {
    %c0_i32 = arith.constant 0 : i32
    %c0_i32_0 = arith.constant 0 : i32
    %c0_i32_1 = arith.constant 0 : i32
    return %c0_i32, %c0_i32_0 : i32, i32
  }
  func.func @transform_26(%arg0: i32) -> (i32, i32, i32) {
    %c0_i32 = arith.constant 0 : i32
    %c0_i32_0 = arith.constant 0 : i32
    %c0_i32_1 = arith.constant 0 : i32
    return %arg0, %c0_i32, %c0_i32_0 : i32, i32, i32
  }
}

</mosaic_0001>

<llo_original>
// kernel: tpu_custom_call.1
$region0: #{tpu_custom_call.1}
  #allocation0 [shape = 'u32[]', space=smem, size = 0x4, offset = 0x4, fixed_abs, tag = 'smem constant byte address 0x4 - core index']
  #allocation1 [shape = 'u32[72,128]{1,0:T(1,128)}', space=vmem, size = 0x9000, scoped, tag = 'internal scratch']
  %s0 = inlined_call_operand.hbm [shape: f32[2,2,32], index: 0, kind: input, shape index: {}]
  %s1 = inlined_call_operand.hbm [shape: f32[2,2,32], index: 1, kind: input, shape index: {}]
  %s2 = inlined_call_operand.vmem [shape: f32[2,4,64], index: 2, kind: input, shape index: {}]
  %s3 = inlined_call_operand.hbm [shape: f32[2,8,128], index: 3, kind: input, shape index: {}]
  %s4 = inlined_call_operand.hbm [shape: f32[2,16,256], index: 4, kind: input, shape index: {}]
  %s5 = inlined_call_operand.vmem [shape: f32[4,2], index: 5, kind: input, shape index: {}]
  %s6 = inlined_call_operand.vmem [shape: f32[8,4], index: 6, kind: input, shape index: {}]
  %s7 = inlined_call_operand.vmem [shape: f32[16,8], index: 7, kind: input, shape index: {}]
  %s8 = inlined_call_operand.vmem [shape: f32[32,16], index: 8, kind: input, shape index: {}]
  %s9 = inlined_call_operand.hbm [shape: f32[32,64], index: 9, kind: input, shape index: {}]
  %s10 = inlined_call_operand.hbm [shape: f32[64,128], index: 10, kind: input, shape index: {}]
  %s11 = inlined_call_operand.hbm [shape: f32[128,256], index: 11, kind: input, shape index: {}]
  %s12 = inlined_call_operand.hbm [shape: f32[256,512], index: 12, kind: input, shape index: {}]
  %s13 = inlined_call_operand.hbm [shape: f32[4,64], index: 13, kind: input, shape index: {}]
  %s14 = inlined_call_operand.hbm [shape: f32[8,128], index: 14, kind: input, shape index: {}]
  %s15 = inlined_call_operand.hbm [shape: f32[16,256], index: 15, kind: input, shape index: {}]
  %s16 = inlined_call_operand.hbm [shape: f32[32,512], index: 16, kind: input, shape index: {}]
  %s17 = inlined_call_operand.hbm [shape: f32[3,64,64], index: 17, kind: input, shape index: {}]
  %s18 = inlined_call_operand.vmem [shape: f32[3,128,128], index: 18, kind: input, shape index: {}]
  %s19 = inlined_call_operand.hbm [shape: f32[3,256,256], index: 19, kind: input, shape index: {}]
  %s20 = inlined_call_operand.hbm [shape: f32[2,4,4], index: 20, kind: input, shape index: {}]
  %s21 = inlined_call_operand.hbm [shape: f32[2,8,8], index: 21, kind: input, shape index: {}]
  %s22 = inlined_call_operand.hbm [shape: f32[2,16,16], index: 22, kind: input, shape index: {}]
  %s23 = inlined_call_operand.hbm [shape: f32[3,512,128], index: 23, kind: input, shape index: {}]
  %s24 = inlined_call_operand.vmem [shape: f32[3,64,32], index: 24, kind: input, shape index: {}]
  %s25 = inlined_call_operand.vmem [shape: f32[1,128], index: 25, kind: input, shape index: {}]
  %s26 = inlined_call_operand.hbm [shape: f32[2,64,128], index: 26, kind: output, shape index: {}]
  %s27 = sld [smem:[#allocation0]]
  $region209: #{tpu_custom_call.1} parent=0
    _
  %s29 = ssub.s32 1, %s27
  %s30 = scalar_select 0, %s29, %s27
  $region1: #{tpu_custom_call.1} parent=0
    #allocation2 [shape = 'u8[2048]{0}', space=vmem, size = 0x800, scoped, tag = 'input window, operand 0']
    #allocation3 [shape = 's32[2]{0}', space=sflag, size = 0x8, scoped, tag = 'scoped memory for tpu_custom_call.1']
    #allocation4 [shape = 's32[2]{0}', space=sflag, size = 0x8, scoped, tag = 'scoped memory for tpu_custom_call.1']
    #allocation5 [shape = 'u8[2048]{0}', space=vmem, size = 0x800, scoped, tag = 'input window, operand 1']
    #allocation6 [shape = 's32[2]{0}', space=sflag, size = 0x8, scoped, tag = 'scoped memory for tpu_custom_call.1']
    #allocation7 [shape = 'u8[8192]{0}', space=vmem, size = 0x2000, scoped, tag = 'input window, operand 3']
    #allocation8 [shape = 'u8[32768]{0}', space=vmem, size = 0x8000, scoped, tag = 'input window, operand 4']
    #allocation9 [shape = 's32[2]{0}', space=sflag, size = 0x8, scoped, tag = 'scoped memory for tpu_custom_call.1']
    #allocation10 [shape = 'u8[16384]{0}', space=vmem, size = 0x4000, scoped, tag = 'input window, operand 9, single buffered']
    #allocation11 [shape = 'u8[32768]{0}', space=vmem, size = 0x8000, scoped, tag = 'input window, operand 10, single buffered']
    #allocation12 [shape = 's32[1]{0}', space=sflag, size = 0x4, scoped, tag = 'scoped memory for tpu_custom_call.1']
    #allocation13 [shape = 'u8[131072]{0}', space=vmem, size = 0x20000, scoped, tag = 'input window, operand 11, single buffered']
    #allocation14 [shape = 'u8[524288]{0}', space=vmem, size = 0x80000, scoped, tag = 'input window, operand 12, single buffered']
    #allocation15 [shape = 's32[1]{0}', space=sflag, size = 0x4, scoped, tag = 'scoped memory for tpu_custom_call.1']
    #allocation16 [shape = 'u8[2048]{0}', space=vmem, size = 0x800, scoped, tag = 'input window, operand 13, single buffered']
    #allocation17 [shape = 'u8[4096]{0}', space=vmem, size = 0x1000, scoped, tag = 'input window, operand 14, single buffered']
    #allocation18 [shape = 's32[1]{0}', space=sflag, size = 0x4, scoped, tag = 'scoped memory for tpu_custom_call.1']
    #allocation19 [shape = 'u8[16384]{0}', space=vmem, size = 0x4000, scoped, tag = 'input window, operand 15, single buffered']
    #allocation20 [shape = 'u8[65536]{0}', space=vmem, size = 0x10000, scoped, tag = 'input window, operand 16, single buffered']
    #allocation21 [shape = 's32[1]{0}', space=sflag, size = 0x4, scoped, tag = 'scoped memory for tpu_custom_call.1']
    #allocation22 [shape = 'u8[98304]{0}', space=vmem, size = 0x18000, scoped, tag = 'input window, operand 17, single buffered']
    #allocation23 [shape = 'u8[786432]{0}', space=vmem, size = 0xc0000, scoped, tag = 'input window, operand 19, single buffered']
    #allocation24 [shape = 's32[1]{0}', space=sflag, size = 0x4, scoped, tag = 'scoped memory for tpu_custom_call.1']
    #allocation25 [shape = 'u8[4096]{0}', space=vmem, size = 0x1000, scoped, tag = 'input window, operand 20, single buffered']
    #allocation26 [shape = 'u8[8192]{0}', space=vmem, size = 0x2000, scoped, tag = 'input window, operand 21, single buffered']
    #allocation27 [shape = 's32[1]{0}', space=sflag, size = 0x4, scoped, tag = 'scoped memory for tpu_custom_call.1']
    #allocation28 [shape = 'u8[16384]{0}', space=vmem, size = 0x4000, scoped, tag = 'input window, operand 22, single buffered']
    #allocation29 [shape = 'u8[786432]{0}', space=vmem, size = 0xc0000, scoped, tag = 'input window, operand 23, single buffered']
    #allocation30 [shape = 's32[1]{0}', space=sflag, size = 0x4, scoped, tag = 'scoped memory for tpu_custom_call.1']
    #allocation31 [shape = 'u8[65536]{0}', space=vmem, size = 0x10000, scoped, tag = 'output window, operand 0']
    %31 = vsyncpa [#allocation3], 0
    %s32 = scalar_lea.sflag [#allocation3], 1
    %33 = vsyncpa %s32, 0
    %34 = vsyncpa [#allocation6], 0
    %s35 = scalar_lea.sflag [#allocation6], 1
    %36 = vsyncpa %s35, 0
    %37 = vsyncpa [#allocation9], 0
    %s38 = scalar_lea.sflag [#allocation9], 1
    %39 = vsyncpa %s38, 0
    %40 = vsyncpa [#allocation12], 0
    %41 = vsyncpa [#allocation15], 0
    %42 = vsyncpa [#allocation18], 0
    %43 = vsyncpa [#allocation21], 0
    %44 = vsyncpa [#allocation24], 0
    %45 = vsyncpa [#allocation27], 0
    %46 = vsyncpa [#allocation30], 0
    %47 = vsyncpa [#allocation4], 0
    %s48 = scalar_lea.sflag [#allocation4], 1
    %49 = vsyncpa %s48, 0
    loop: start=0, step=1, limit=4
    $region2: #{tpu_custom_call.1} parent=1 // loop_pre_header
      _
    $region3: #{tpu_custom_call.1} parent=1 // loop_header
      %s51 = sphi 0, %s55
      %p52 = scmp.ge.s32.totalorder %s51, 4
      %s61 = sphi 0, %s63
      %s64 = sphi 0, %s61
      %s65 = sphi 0, %s64
      %s81 = sphi 0, %s65
      %s87 = sphi 0, %s89
      %s90 = sphi 0, %s87
      %s91 = sphi 0, %s90
      %s107 = sphi 0, %s91
      %s113 = sphi 0, %s115
      %s116 = sphi 0, %s113
      %s117 = sphi 0, %s116
      %s133 = sphi 0, %s117
      %s139 = sphi 0, %s141
      %s142 = sphi 0, %s139
      %s143 = sphi 0, %s142
      %s159 = sphi 0, %s143
      %s165 = sphi 0, %s167
      %s168 = sphi 0, %s165
      %s169 = sphi 0, %s168
      %s185 = sphi 0, %s169
      %s189 = sphi 0, %s189
      %s191 = sphi 0, %s189
      %s192 = sphi 0, %s191
      %s206 = sphi 0, %s192
      %s210 = sphi 0, %s210
      %s212 = sphi 0, %s210
      %s213 = sphi 0, %s212
      %s227 = sphi 0, %s213
      %s231 = sphi 0, %s231
      %s233 = sphi 0, %s231
      %s234 = sphi 0, %s233
      %s248 = sphi 0, %s234
      %s252 = sphi 0, %s252
      %s254 = sphi 0, %s252
      %s255 = sphi 0, %s254
      %s269 = sphi 0, %s255
      %s273 = sphi 0, %s273
      %s275 = sphi 0, %s273
      %s276 = sphi 0, %s275
      %s290 = sphi 0, %s276
      %s294 = sphi 0, %s294
      %s296 = sphi 0, %s294
      %s297 = sphi 0, %s296
      %s311 = sphi 0, %s297
      %s315 = sphi 0, %s315
      %s317 = sphi 0, %s315
      %s318 = sphi 0, %s317
      %s332 = sphi 0, %s318
      %s336 = sphi 0, %s336
      %s338 = sphi 0, %s336
      %s339 = sphi 0, %s338
      %s353 = sphi 0, %s339
      %s357 = sphi 0, %s357
      %s359 = sphi 0, %s357
      %s360 = sphi 0, %s359
      %s374 = sphi 0, %s360
      %s378 = sphi 0, %s378
      %s380 = sphi 0, %s378
      %s381 = sphi 0, %s380
      %s395 = sphi 0, %s381
      %s399 = sphi 0, %s399
      %s401 = sphi 0, %s399
      %s402 = sphi 0, %s401
      %s416 = sphi 0, %s402
      %s420 = sphi 0, %s420
      %s422 = sphi 0, %s420
      %s423 = sphi 0, %s422
      %s437 = sphi 0, %s423
      %s441 = sphi 0, %s441
      %s443 = sphi 0, %s441
      %s444 = sphi 0, %s443
      %s458 = sphi 0, %s444
      %s462 = sphi 0, %s462
      %s464 = sphi 0, %s462
      %s465 = sphi 0, %s464
      %s479 = sphi 0, %s465
      %s483 = sphi 0, %s483
      %s485 = sphi 0, %s483
      %s486 = sphi 0, %s485
      %s500 = sphi 0, %s486
      %s504 = sphi 0, %s504
      %s506 = sphi 0, %s504
      %s507 = sphi 0, %s506
      %s521 = sphi 0, %s507
      %s525 = sphi 0, %s525
      %s527 = sphi 0, %s525
      %s528 = sphi 0, %s527
      %s542 = sphi 0, %s528
      %s546 = sphi 0, %s546
      %s548 = sphi 0, %s546
      %s549 = sphi 0, %s548
      %s563 = sphi 0, %s549
      %s567 = sphi 0, %s567
      %s569 = sphi 0, %s567
      %s570 = sphi 0, %s569
      %s584 = sphi 0, %s570
      %s588 = sphi 0, %s588
      %s590 = sphi 0, %s588
      %s591 = sphi 0, %s590
      %s605 = sphi 0, %s591
      %s609 = sphi 0, %s609
      %s611 = sphi 0, %s609
      %s612 = sphi 0, %s611
      %s626 = sphi 0, %s612
      %s632 = sphi 0, %s634
      %s635 = sphi 0, %s632
      %s636 = sphi 0, %s635
      %s652 = sphi 0, %s636
    $region4: #{tpu_custom_call.1} parent=1 // loop_header_branch
      %54 = sbr.rel (%p52) target = $region8
    $region5: #{tpu_custom_call.1} parent=1 // loop_body
      %s56 = ssub.s32 %s51, 1
      %s57 = ssub.s32 %s51, 2
      %s58 = sadd.s32 %s51, 1
      %s59 = ssub.s32 %s51, %s58
      %p60 = scmp.eq.s32.totalorder %s59, 0
      %s62 = sadd.s32 %s61, 1
      %s63 = scalar_select %p60, %s61, %s62
      %p66 = pneg %p60
      %p67 = scmp.eq.s32.totalorder %s51, 1
      %p68 = por %p66, %p67
      %p69 = scmp.ne.s32.totalorder %s61, %s64
      %p70 = scmp.eq.s32.totalorder %s51, 0
      %p71 = por %p69, %p70
      %p72 = scmp.ne.s32.totalorder %s61, %s64
      %p73 = scmp.eq.s32.totalorder %s56, 1
      %p74 = por %p72, %p73
      %p75 = scmp.ne.s32.totalorder %s64, %s65
      %p76 = scmp.eq.s32.totalorder %s56, 0
      %p77 = por %p75, %p76
      %p78 = scmp.ne.s32.totalorder %s64, %s65
      %p79 = scmp.eq.s32.totalorder %s57, 1
      %p80 = por %p78, %p79
      %p82 = scmp.ne.s32.totalorder %s65, %s81
      %p83 = scmp.eq.s32.totalorder %s57, 0
      %p84 = por %p82, %p83
      %s85 = ssub.s32 %s51, %s58
      %p86 = scmp.eq.s32.totalorder %s85, 0
      %s88 = sadd.s32 %s87, 1
      %s89 = scalar_select %p86, %s87, %s88
      %p92 = pneg %p86
      %p93 = scmp.eq.s32.totalorder %s51, 1
      %p94 = por %p92, %p93
      %p95 = scmp.ne.s32.totalorder %s87, %s90
      %p96 = scmp.eq.s32.totalorder %s51, 0
      %p97 = por %p95, %p96
      %p98 = scmp.ne.s32.totalorder %s87, %s90
      %p99 = scmp.eq.s32.totalorder %s56, 1
      %p100 = por %p98, %p99
      %p101 = scmp.ne.s32.totalorder %s90, %s91
      %p102 = scmp.eq.s32.totalorder %s56, 0
      %p103 = por %p101, %p102
      %p104 = scmp.ne.s32.totalorder %s90, %s91
      %p105 = scmp.eq.s32.totalorder %s57, 1
      %p106 = por %p104, %p105
      %p108 = scmp.ne.s32.totalorder %s91, %s107
      %p109 = scmp.eq.s32.totalorder %s57, 0
      %p110 = por %p108, %p109
      %s111 = ssub.s32 %s51, %s58
      %p112 = scmp.eq.s32.totalorder %s111, 0
      %s114 = sadd.s32 %s113, 1
      %s115 = scalar_select %p112, %s113, %s114
      %p118 = pneg %p112
      %p119 = scmp.eq.s32.totalorder %s51, 1
      %p120 = por %p118, %p119
      %p121 = scmp.ne.s32.totalorder %s113, %s116
      %p122 = scmp.eq.s32.totalorder %s51, 0
      %p123 = por %p121, %p122
      %p124 = scmp.ne.s32.totalorder %s113, %s116
      %p125 = scmp.eq.s32.totalorder %s56, 1
      %p126 = por %p124, %p125
      %p127 = scmp.ne.s32.totalorder %s116, %s117
      %p128 = scmp.eq.s32.totalorder %s56, 0
      %p129 = por %p127, %p128
      %p130 = scmp.ne.s32.totalorder %s116, %s117
      %p131 = scmp.eq.s32.totalorder %s57, 1
      %p132 = por %p130, %p131
      %p134 = scmp.ne.s32.totalorder %s117, %s133
      %p135 = scmp.eq.s32.totalorder %s57, 0
      %p136 = por %p134, %p135
      %s137 = ssub.s32 %s51, %s58
      %p138 = scmp.eq.s32.totalorder %s137, 0
      %s140 = sadd.s32 %s139, 1
      %s141 = scalar_select %p138, %s139, %s140
      %p144 = pneg %p138
      %p145 = scmp.eq.s32.totalorder %s51, 1
      %p146 = por %p144, %p145
      %p147 = scmp.ne.s32.totalorder %s139, %s142
      %p148 = scmp.eq.s32.totalorder %s51, 0
      %p149 = por %p147, %p148
      %p150 = scmp.ne.s32.totalorder %s139, %s142
      %p151 = scmp.eq.s32.totalorder %s56, 1
      %p152 = por %p150, %p151
      %p153 = scmp.ne.s32.totalorder %s142, %s143
      %p154 = scmp.eq.s32.totalorder %s56, 0
      %p155 = por %p153, %p154
      %p156 = scmp.ne.s32.totalorder %s142, %s143
      %p157 = scmp.eq.s32.totalorder %s57, 1
      %p158 = por %p156, %p157
      %p160 = scmp.ne.s32.totalorder %s143, %s159
      %p161 = scmp.eq.s32.totalorder %s57, 0
      %p162 = por %p160, %p161
      %s163 = ssub.s32 %s51, %s58
      %p164 = scmp.eq.s32.totalorder %s163, 0
      %s166 = sadd.s32 %s165, 1
      %s167 = scalar_select %p164, %s165, %s166
      %p170 = pneg %p164
      %p171 = scmp.eq.s32.totalorder %s51, 1
      %p172 = por %p170, %p171
      %p173 = scmp.ne.s32.totalorder %s165, %s168
      %p174 = scmp.eq.s32.totalorder %s51, 0
      %p175 = por %p173, %p174
      %p176 = scmp.ne.s32.totalorder %s165, %s168
      %p177 = scmp.eq.s32.totalorder %s56, 1
      %p178 = por %p176, %p177
      %p179 = scmp.ne.s32.totalorder %s168, %s169
      %p180 = scmp.eq.s32.totalorder %s56, 0
      %p181 = por %p179, %p180
      %p182 = scmp.ne.s32.totalorder %s168, %s169
      %p183 = scmp.eq.s32.totalorder %s57, 1
      %p184 = por %p182, %p183
      %p186 = scmp.ne.s32.totalorder %s169, %s185
      %p187 = scmp.eq.s32.totalorder %s57, 0
      %p188 = por %p186, %p187
      %s190 = sadd.s32 %s189, 1
      %p193 = scmp.eq.s32.totalorder %s51, 1
      %p194 = scmp.ne.s32.totalorder %s189, %s191
      %p195 = scmp.eq.s32.totalorder %s51, 0
      %p196 = por %p194, %p195
      %p197 = scmp.ne.s32.totalorder %s189, %s191
      %p198 = scmp.eq.s32.totalorder %s56, 1
      %p199 = por %p197, %p198
      %p200 = scmp.ne.s32.totalorder %s191, %s192
      %p201 = scmp.eq.s32.totalorder %s56, 0
      %p202 = por %p200, %p201
      %p203 = scmp.ne.s32.totalorder %s191, %s192
      %p204 = scmp.eq.s32.totalorder %s57, 1
      %p205 = por %p203, %p204
      %p207 = scmp.ne.s32.totalorder %s192, %s206
      %p208 = scmp.eq.s32.totalorder %s57, 0
      %p209 = por %p207, %p208
      %s211 = sadd.s32 %s210, 1
      %p214 = scmp.eq.s32.totalorder %s51, 1
      %p215 = scmp.ne.s32.totalorder %s210, %s212
      %p216 = scmp.eq.s32.totalorder %s51, 0
      %p217 = por %p215, %p216
      %p218 = scmp.ne.s32.totalorder %s210, %s212
      %p219 = scmp.eq.s32.totalorder %s56, 1
      %p220 = por %p218, %p219
      %p221 = scmp.ne.s32.totalorder %s212, %s213
      %p222 = scmp.eq.s32.totalorder %s56, 0
      %p223 = por %p221, %p222
      %p224 = scmp.ne.s32.totalorder %s212, %s213
      %p225 = scmp.eq.s32.totalorder %s57, 1
      %p226 = por %p224, %p225
      %p228 = scmp.ne.s32.totalorder %s213, %s227
      %p229 = scmp.eq.s32.totalorder %s57, 0
      %p230 = por %p228, %p229
      %s232 = sadd.s32 %s231, 1
      %p235 = scmp.eq.s32.totalorder %s51, 1
      %p236 = scmp.ne.s32.totalorder %s231, %s233
      %p237 = scmp.eq.s32.totalorder %s51, 0
      %p238 = por %p236, %p237
      %p239 = scmp.ne.s32.totalorder %s231, %s233
      %p240 = scmp.eq.s32.totalorder %s56, 1
      %p241 = por %p239, %p240
      %p242 = scmp.ne.s32.totalorder %s233, %s234
      %p243 = scmp.eq.s32.totalorder %s56, 0
      %p244 = por %p242, %p243
      %p245 = scmp.ne.s32.totalorder %s233, %s234
      %p246 = scmp.eq.s32.totalorder %s57, 1
      %p247 = por %p245, %p246
      %p249 = scmp.ne.s32.totalorder %s234, %s248
      %p250 = scmp.eq.s32.totalorder %s57, 0
      %p251 = por %p249, %p250
      %s253 = sadd.s32 %s252, 1
      %p256 = scmp.eq.s32.totalorder %s51, 1
      %p257 = scmp.ne.s32.totalorder %s252, %s254
      %p258 = scmp.eq.s32.totalorder %s51, 0
      %p259 = por %p257, %p258
      %p260 = scmp.ne.s32.totalorder %s252, %s254
      %p261 = scmp.eq.s32.totalorder %s56, 1
      %p262 = por %p260, %p261
      %p263 = scmp.ne.s32.totalorder %s254, %s255
      %p264 = scmp.eq.s32.totalorder %s56, 0
      %p265 = por %p263, %p264
      %p266 = scmp.ne.s32.totalorder %s254, %s255
      %p267 = scmp.eq.s32.totalorder %s57, 1
      %p268 = por %p266, %p267
      %p270 = scmp.ne.s32.totalorder %s255, %s269
      %p271 = scmp.eq.s32.totalorder %s57, 0
      %p272 = por %p270, %p271
      %s274 = sadd.s32 %s273, 1
      %p277 = scmp.eq.s32.totalorder %s51, 1
      %p278 = scmp.ne.s32.totalorder %s273, %s275
      %p279 = scmp.eq.s32.totalorder %s51, 0
      %p280 = por %p278, %p279
      %p281 = scmp.ne.s32.totalorder %s273, %s275
      %p282 = scmp.eq.s32.totalorder %s56, 1
      %p283 = por %p281, %p282
      %p284 = scmp.ne.s32.totalorder %s275, %s276
      %p285 = scmp.eq.s32.totalorder %s56, 0
      %p286 = por %p284, %p285
      %p287 = scmp.ne.s32.totalorder %s275, %s276
      %p288 = scmp.eq.s32.totalorder %s57, 1
      %p289 = por %p287, %p288
      %p291 = scmp.ne.s32.totalorder %s276, %s290
      %p292 = scmp.eq.s32.totalorder %s57, 0
      %p293 = por %p291, %p292
      %s295 = sadd.s32 %s294, 1
      %p298 = scmp.eq.s32.totalorder %s51, 1
      %p299 = scmp.ne.s32.totalorder %s294, %s296
      %p300 = scmp.eq.s32.totalorder %s51, 0
      %p301 = por %p299, %p300
      %p302 = scmp.ne.s32.totalorder %s294, %s296
      %p303 = scmp.eq.s32.totalorder %s56, 1
      %p304 = por %p302, %p303
      %p305 = scmp.ne.s32.totalorder %s296, %s297
      %p306 = scmp.eq.s32.totalorder %s56, 0
      %p307 = por %p305, %p306
      %p308 = scmp.ne.s32.totalorder %s296, %s297
      %p309 = scmp.eq.s32.totalorder %s57, 1
      %p310 = por %p308, %p309
      %p312 = scmp.ne.s32.totalorder %s297, %s311
      %p313 = scmp.eq.s32.totalorder %s57, 0
      %p314 = por %p312, %p313
      %s316 = sadd.s32 %s315, 1
      %p319 = scmp.eq.s32.totalorder %s51, 1
      %p320 = scmp.ne.s32.totalorder %s315, %s317
      %p321 = scmp.eq.s32.totalorder %s51, 0
      %p322 = por %p320, %p321
      %p323 = scmp.ne.s32.totalorder %s315, %s317
      %p324 = scmp.eq.s32.totalorder %s56, 1
      %p325 = por %p323, %p324
      %p326 = scmp.ne.s32.totalorder %s317, %s318
      %p327 = scmp.eq.s32.totalorder %s56, 0
      %p328 = por %p326, %p327
      %p329 = scmp.ne.s32.totalorder %s317, %s318
      %p330 = scmp.eq.s32.totalorder %s57, 1
      %p331 = por %p329, %p330
      %p333 = scmp.ne.s32.totalorder %s318, %s332
      %p334 = scmp.eq.s32.totalorder %s57, 0
      %p335 = por %p333, %p334
      %s337 = sadd.s32 %s336, 1
      %p340 = scmp.eq.s32.totalorder %s51, 1
      %p341 = scmp.ne.s32.totalorder %s336, %s338
      %p342 = scmp.eq.s32.totalorder %s51, 0
      %p343 = por %p341, %p342
      %p344 = scmp.ne.s32.totalorder %s336, %s338
      %p345 = scmp.eq.s32.totalorder %s56, 1
      %p346 = por %p344, %p345
      %p347 = scmp.ne.s32.totalorder %s338, %s339
      %p348 = scmp.eq.s32.totalorder %s56, 0
      %p349 = por %p347, %p348
      %p350 = scmp.ne.s32.totalorder %s338, %s339
      %p351 = scmp.eq.s32.totalorder %s57, 1
      %p352 = por %p350, %p351
      %p354 = scmp.ne.s32.totalorder %s339, %s353
      %p355 = scmp.eq.s32.totalorder %s57, 0
      %p356 = por %p354, %p355
      %s358 = sadd.s32 %s357, 1
      %p361 = scmp.eq.s32.totalorder %s51, 1
      %p362 = scmp.ne.s32.totalorder %s357, %s359
      %p363 = scmp.eq.s32.totalorder %s51, 0
      %p364 = por %p362, %p363
      %p365 = scmp.ne.s32.totalorder %s357, %s359
      %p366 = scmp.eq.s32.totalorder %s56, 1
      %p367 = por %p365, %p366
      %p368 = scmp.ne.s32.totalorder %s359, %s360
      %p369 = scmp.eq.s32.totalorder %s56, 0
      %p370 = por %p368, %p369
      %p371 = scmp.ne.s32.totalorder %s359, %s360
      %p372 = scmp.eq.s32.totalorder %s57, 1
      %p373 = por %p371, %p372
      %p375 = scmp.ne.s32.totalorder %s360, %s374
      %p376 = scmp.eq.s32.totalorder %s57, 0
      %p377 = por %p375, %p376
      %s379 = sadd.s32 %s378, 1
      %p382 = scmp.eq.s32.totalorder %s51, 1
      %p383 = scmp.ne.s32.totalorder %s378, %s380
      %p384 = scmp.eq.s32.totalorder %s51, 0
      %p385 = por %p383, %p384
      %p386 = scmp.ne.s32.totalorder %s378, %s380
      %p387 = scmp.eq.s32.totalorder %s56, 1
      %p388 = por %p386, %p387
      %p389 = scmp.ne.s32.totalorder %s380, %s381
      %p390 = scmp.eq.s32.totalorder %s56, 0
      %p391 = por %p389, %p390
      %p392 = scmp.ne.s32.totalorder %s380, %s381
      %p393 = scmp.eq.s32.totalorder %s57, 1
      %p394 = por %p392, %p393
      %p396 = scmp.ne.s32.totalorder %s381, %s395
      %p397 = scmp.eq.s32.totalorder %s57, 0
      %p398 = por %p396, %p397
      %s400 = sadd.s32 %s399, 1
      %p403 = scmp.eq.s32.totalorder %s51, 1
      %p404 = scmp.ne.s32.totalorder %s399, %s401
      %p405 = scmp.eq.s32.totalorder %s51, 0
      %p406 = por %p404, %p405
      %p407 = scmp.ne.s32.totalorder %s399, %s401
      %p408 = scmp.eq.s32.totalorder %s56, 1
      %p409 = por %p407, %p408
      %p410 = scmp.ne.s32.totalorder %s401, %s402
      %p411 = scmp.eq.s32.totalorder %s56, 0
      %p412 = por %p410, %p411
      %p413 = scmp.ne.s32.totalorder %s401, %s402
      %p414 = scmp.eq.s32.totalorder %s57, 1
      %p415 = por %p413, %p414
      %p417 = scmp.ne.s32.totalorder %s402, %s416
      %p418 = scmp.eq.s32.totalorder %s57, 0
      %p419 = por %p417, %p418
      %s421 = sadd.s32 %s420, 1
      %p424 = scmp.eq.s32.totalorder %s51, 1
      %p425 = scmp.ne.s32.totalorder %s420, %s422
      %p426 = scmp.eq.s32.totalorder %s51, 0
      %p427 = por %p425, %p426
      %p428 = scmp.ne.s32.totalorder %s420, %s422
      %p429 = scmp.eq.s32.totalorder %s56, 1
      %p430 = por %p428, %p429
      %p431 = scmp.ne.s32.totalorder %s422, %s423
      %p432 = scmp.eq.s32.totalorder %s56, 0
      %p433 = por %p431, %p432
      %p434 = scmp.ne.s32.totalorder %s422, %s423
      %p435 = scmp.eq.s32.totalorder %s57, 1
      %p436 = por %p434, %p435
      %p438 = scmp.ne.s32.totalorder %s423, %s437
      %p439 = scmp.eq.s32.totalorder %s57, 0
      %p440 = por %p438, %p439
      %s442 = sadd.s32 %s441, 1
      %p445 = scmp.eq.s32.totalorder %s51, 1
      %p446 = scmp.ne.s32.totalorder %s441, %s443
      %p447 = scmp.eq.s32.totalorder %s51, 0
      %p448 = por %p446, %p447
      %p449 = scmp.ne.s32.totalorder %s441, %s443
      %p450 = scmp.eq.s32.totalorder %s56, 1
      %p451 = por %p449, %p450
      %p452 = scmp.ne.s32.totalorder %s443, %s444
      %p453 = scmp.eq.s32.totalorder %s56, 0
      %p454 = por %p452, %p453
      %p455 = scmp.ne.s32.totalorder %s443, %s444
      %p456 = scmp.eq.s32.totalorder %s57, 1
      %p457 = por %p455, %p456
      %p459 = scmp.ne.s32.totalorder %s444, %s458
      %p460 = scmp.eq.s32.totalorder %s57, 0
      %p461 = por %p459, %p460
      %s463 = sadd.s32 %s462, 1
      %p466 = scmp.eq.s32.totalorder %s51, 1
      %p467 = scmp.ne.s32.totalorder %s462, %s464
      %p468 = scmp.eq.s32.totalorder %s51, 0
      %p469 = por %p467, %p468
      %p470 = scmp.ne.s32.totalorder %s462, %s464
      %p471 = scmp.eq.s32.totalorder %s56, 1
      %p472 = por %p470, %p471
      %p473 = scmp.ne.s32.totalorder %s464, %s465
      %p474 = scmp.eq.s32.totalorder %s56, 0
      %p475 = por %p473, %p474
      %p476 = scmp.ne.s32.totalorder %s464, %s465
      %p477 = scmp.eq.s32.totalorder %s57, 1
      %p478 = por %p476, %p477
      %p480 = scmp.ne.s32.totalorder %s465, %s479
      %p481 = scmp.eq.s32.totalorder %s57, 0
      %p482 = por %p480, %p481
      %s484 = sadd.s32 %s483, 1
      %p487 = scmp.eq.s32.totalorder %s51, 1
      %p488 = scmp.ne.s32.totalorder %s483, %s485
      %p489 = scmp.eq.s32.totalorder %s51, 0
      %p490 = por %p488, %p489
      %p491 = scmp.ne.s32.totalorder %s483, %s485
      %p492 = scmp.eq.s32.totalorder %s56, 1
      %p493 = por %p491, %p492
      %p494 = scmp.ne.s32.totalorder %s485, %s486
      %p495 = scmp.eq.s32.totalorder %s56, 0
      %p496 = por %p494, %p495
      %p497 = scmp.ne.s32.totalorder %s485, %s486
      %p498 = scmp.eq.s32.totalorder %s57, 1
      %p499 = por %p497, %p498
      %p501 = scmp.ne.s32.totalorder %s486, %s500
      %p502 = scmp.eq.s32.totalorder %s57, 0
      %p503 = por %p501, %p502
      %s505 = sadd.s32 %s504, 1
      %p508 = scmp.eq.s32.totalorder %s51, 1
      %p509 = scmp.ne.s32.totalorder %s504, %s506
      %p510 = scmp.eq.s32.totalorder %s51, 0
      %p511 = por %p509, %p510
      %p512 = scmp.ne.s32.totalorder %s504, %s506
      %p513 = scmp.eq.s32.totalorder %s56, 1
      %p514 = por %p512, %p513
      %p515 = scmp.ne.s32.totalorder %s506, %s507
      %p516 = scmp.eq.s32.totalorder %s56, 0
      %p517 = por %p515, %p516
      %p518 = scmp.ne.s32.totalorder %s506, %s507
      %p519 = scmp.eq.s32.totalorder %s57, 1
      %p520 = por %p518, %p519
      %p522 = scmp.ne.s32.totalorder %s507, %s521
      %p523 = scmp.eq.s32.totalorder %s57, 0
      %p524 = por %p522, %p523
      %s526 = sadd.s32 %s525, 1
      %p529 = scmp.eq.s32.totalorder %s51, 1
      %p530 = scmp.ne.s32.totalorder %s525, %s527
      %p531 = scmp.eq.s32.totalorder %s51, 0
      %p532 = por %p530, %p531
      %p533 = scmp.ne.s32.totalorder %s525, %s527
      %p534 = scmp.eq.s32.totalorder %s56, 1
      %p535 = por %p533, %p534
      %p536 = scmp.ne.s32.totalorder %s527, %s528
      %p537 = scmp.eq.s32.totalorder %s56, 0
      %p538 = por %p536, %p537
      %p539 = scmp.ne.s32.totalorder %s527, %s528
      %p540 = scmp.eq.s32.totalorder %s57, 1
      %p541 = por %p539, %p540
      %p543 = scmp.ne.s32.totalorder %s528, %s542
      %p544 = scmp.eq.s32.totalorder %s57, 0
      %p545 = por %p543, %p544
      %s547 = sadd.s32 %s546, 1
      %p550 = scmp.eq.s32.totalorder %s51, 1
      %p551 = scmp.ne.s32.totalorder %s546, %s548
      %p552 = scmp.eq.s32.totalorder %s51, 0
      %p553 = por %p551, %p552
      %p554 = scmp.ne.s32.totalorder %s546, %s548
      %p555 = scmp.eq.s32.totalorder %s56, 1
      %p556 = por %p554, %p555
      %p557 = scmp.ne.s32.totalorder %s548, %s549
      %p558 = scmp.eq.s32.totalorder %s56, 0
      %p559 = por %p557, %p558
      %p560 = scmp.ne.s32.totalorder %s548, %s549
      %p561 = scmp.eq.s32.totalorder %s57, 1
      %p562 = por %p560, %p561
      %p564 = scmp.ne.s32.totalorder %s549, %s563
      %p565 = scmp.eq.s32.totalorder %s57, 0
      %p566 = por %p564, %p565
      %s568 = sadd.s32 %s567, 1
      %p571 = scmp.eq.s32.totalorder %s51, 1
      %p572 = scmp.ne.s32.totalorder %s567, %s569
      %p573 = scmp.eq.s32.totalorder %s51, 0
      %p574 = por %p572, %p573
      %p575 = scmp.ne.s32.totalorder %s567, %s569
      %p576 = scmp.eq.s32.totalorder %s56, 1
      %p577 = por %p575, %p576
      %p578 = scmp.ne.s32.totalorder %s569, %s570
      %p579 = scmp.eq.s32.totalorder %s56, 0
      %p580 = por %p578, %p579
      %p581 = scmp.ne.s32.totalorder %s569, %s570
      %p582 = scmp.eq.s32.totalorder %s57, 1
      %p583 = por %p581, %p582
      %p585 = scmp.ne.s32.totalorder %s570, %s584
      %p586 = scmp.eq.s32.totalorder %s57, 0
      %p587 = por %p585, %p586
      %s589 = sadd.s32 %s588, 1
      %p592 = scmp.eq.s32.totalorder %s51, 1
      %p593 = scmp.ne.s32.totalorder %s588, %s590
      %p594 = scmp.eq.s32.totalorder %s51, 0
      %p595 = por %p593, %p594
      %p596 = scmp.ne.s32.totalorder %s588, %s590
      %p597 = scmp.eq.s32.totalorder %s56, 1
      %p598 = por %p596, %p597
      %p599 = scmp.ne.s32.totalorder %s590, %s591
      %p600 = scmp.eq.s32.totalorder %s56, 0
      %p601 = por %p599, %p600
      %p602 = scmp.ne.s32.totalorder %s590, %s591
      %p603 = scmp.eq.s32.totalorder %s57, 1
      %p604 = por %p602, %p603
      %p606 = scmp.ne.s32.totalorder %s591, %s605
      %p607 = scmp.eq.s32.totalorder %s57, 0
      %p608 = por %p606, %p607
      %s610 = sadd.s32 %s609, 1
      %p613 = scmp.eq.s32.totalorder %s51, 1
      %p614 = scmp.ne.s32.totalorder %s609, %s611
      %p615 = scmp.eq.s32.totalorder %s51, 0
      %p616 = por %p614, %p615
      %p617 = scmp.ne.s32.totalorder %s609, %s611
      %p618 = scmp.eq.s32.totalorder %s56, 1
      %p619 = por %p617, %p618
      %p620 = scmp.ne.s32.totalorder %s611, %s612
      %p621 = scmp.eq.s32.totalorder %s56, 0
      %p622 = por %p620, %p621
      %p623 = scmp.ne.s32.totalorder %s611, %s612
      %p624 = scmp.eq.s32.totalorder %s57, 1
      %p625 = por %p623, %p624
      %p627 = scmp.ne.s32.totalorder %s612, %s626
      %p628 = scmp.eq.s32.totalorder %s57, 0
      %p629 = por %p627, %p628
      %s630 = ssub.s32 %s51, %s58
      %p631 = scmp.eq.s32.totalorder %s630, 0
      %s633 = sadd.s32 %s632, 1
      %s634 = scalar_select %p631, %s632, %s633
      %p637 = pneg %p631
      %p638 = scmp.eq.s32.totalorder %s51, 1
      %p639 = por %p637, %p638
      %p640 = scmp.ne.s32.totalorder %s632, %s635
      %p641 = scmp.eq.s32.totalorder %s51, 0
      %p642 = por %p640, %p641
      %p643 = scmp.ne.s32.totalorder %s632, %s635
      %p644 = scmp.eq.s32.totalorder %s56, 1
      %p645 = por %p643, %p644
      %p646 = scmp.ne.s32.totalorder %s635, %s636
      %p647 = scmp.eq.s32.totalorder %s56, 0
      %p648 = por %p646, %p647
      %p649 = scmp.ne.s32.totalorder %s635, %s636
      %p650 = scmp.eq.s32.totalorder %s57, 1
      %p651 = por %p649, %p650
      %p653 = scmp.ne.s32.totalorder %s636, %s652
      %p654 = scmp.eq.s32.totalorder %s57, 0
      %p655 = por %p653, %p654
      %p656 = scmp.le.s32.totalorder 1, %s51
      %p657 = scmp.lt.s32.totalorder %s51, 3
      %p658 = pnand %p656, %p657
      %p659 = pneg %p658
      // Predicated region
      $region9: #{tpu_custom_call.1} parent=5 // pred_check
        _
      $region10: #{tpu_custom_call.1} parent=5 // pred_check_branch
        %661 = sbr.rel (%p658) target = $region12
      $region11: #{tpu_custom_call.1} parent=5 // pred_region
        %s662 = ssub.s32 %s51, 1
        // Predicated region
        $region13: #{tpu_custom_call.1} parent=11 // pred_check
          %p663 = pneg %p202
        $region14: #{tpu_custom_call.1} parent=11 // pred_check_branch
          %665 = sbr.rel (%p663) target = $region16
        $region15: #{tpu_custom_call.1} parent=11 // pred_region
          _
        $region16: #{tpu_custom_call.1} parent=11 // pred_fallthru
          _
        // Predicated region
        $region17: #{tpu_custom_call.1} parent=11 // pred_check
          %p666 = pneg %p223
        $region18: #{tpu_custom_call.1} parent=11 // pred_check_branch
          %668 = sbr.rel (%p666) target = $region20
        $region19: #{tpu_custom_call.1} parent=11 // pred_region
          _
        $region20: #{tpu_custom_call.1} parent=11 // pred_fallthru
          _
        // Predicated region
        $region21: #{tpu_custom_call.1} parent=11 // pred_check
          %p669 = pneg %p244
        $region22: #{tpu_custom_call.1} parent=11 // pred_check_branch
          %671 = sbr.rel (%p669) target = $region24
        $region23: #{tpu_custom_call.1} parent=11 // pred_region
          _
        $region24: #{tpu_custom_call.1} parent=11 // pred_fallthru
          _
        // Predicated region
        $region25: #{tpu_custom_call.1} parent=11 // pred_check
          %p672 = pneg %p265
        $region26: #{tpu_custom_call.1} parent=11 // pred_check_branch
          %674 = sbr.rel (%p672) target = $region28
        $region27: #{tpu_custom_call.1} parent=11 // pred_region
          _
        $region28: #{tpu_custom_call.1} parent=11 // pred_fallthru
          _
        // Predicated region
        $region29: #{tpu_custom_call.1} parent=11 // pred_check
          %p675 = pneg %p286
        $region30: #{tpu_custom_call.1} parent=11 // pred_check_branch
          %677 = sbr.rel (%p675) target = $region32
        $region31: #{tpu_custom_call.1} parent=11 // pred_region
          %679 = vsyncadd [#allocation9], 0
          %s680 = sshll.u32 %s9, 4
          %s681 = int_to_ptr.hbm [resolvable:$true] %s680
          %s682 = sshll.u32 [#allocation10], 4
          %s683 = int_to_ptr.vmem [resolvable:$true] %s682
          %688 = dma.hbm_to_vmem [thread:$0]  %s681, 512, %s683, [#allocation9], 128, 128, 8
        $region32: #{tpu_custom_call.1} parent=11 // pred_fallthru
          _
        // Predicated region
        $region33: #{tpu_custom_call.1} parent=11 // pred_check
          %p689 = pneg %p307
        $region34: #{tpu_custom_call.1} parent=11 // pred_check_branch
          %691 = sbr.rel (%p689) target = $region36
        $region35: #{tpu_custom_call.1} parent=11 // pred_region
          %693 = vsyncadd [#allocation12], 0
          %s694 = sshll.u32 %s10, 4
          %s695 = int_to_ptr.hbm [resolvable:$true] %s694
          %s696 = sshll.u32 [#allocation11], 4
          %s697 = int_to_ptr.vmem [resolvable:$true] %s696
          %702 = dma.hbm_to_vmem [thread:$0]  %s695, 1024, %s697, [#allocation12], 128, 128, 8
        $region36: #{tpu_custom_call.1} parent=11 // pred_fallthru
          _
        // Predicated region
        $region37: #{tpu_custom_call.1} parent=11 // pred_check
          %p703 = pneg %p328
        $region38: #{tpu_custom_call.1} parent=11 // pred_check_branch
          %705 = sbr.rel (%p703) target = $region40
        $region39: #{tpu_custom_call.1} parent=11 // pred_region
          %707 = vsyncadd [#allocation12], 0
          %s708 = sshll.u32 %s11, 4
          %s709 = int_to_ptr.hbm [resolvable:$true] %s708
          %s710 = sshll.u32 [#allocation13], 4
          %s711 = int_to_ptr.vmem [resolvable:$true] %s710
          %716 = dma.hbm_to_vmem [thread:$0]  %s709, 4096, %s711, [#allocation12], 256, 256, 16
        $region40: #{tpu_custom_call.1} parent=11 // pred_fallthru
          _
        // Predicated region
        $region41: #{tpu_custom_call.1} parent=11 // pred_check
          %p717 = pneg %p349
        $region42: #{tpu_custom_call.1} parent=11 // pred_check_branch
          %719 = sbr.rel (%p717) target = $region44
        $region43: #{tpu_custom_call.1} parent=11 // pred_region
          %721 = vsyncadd [#allocation15], 0
          %s722 = sshll.u32 %s12, 4
          %s723 = int_to_ptr.hbm [resolvable:$true] %s722
          %s724 = sshll.u32 [#allocation14], 4
          %s725 = int_to_ptr.vmem [resolvable:$true] %s724
          %730 = dma.hbm_to_vmem [thread:$0]  %s723, 16384, %s725, [#allocation15], 512, 512, 32
        $region44: #{tpu_custom_call.1} parent=11 // pred_fallthru
          _
        // Predicated region
        $region45: #{tpu_custom_call.1} parent=11 // pred_check
          %p731 = pneg %p370
        $region46: #{tpu_custom_call.1} parent=11 // pred_check_branch
          %733 = sbr.rel (%p731) target = $region48
        $region47: #{tpu_custom_call.1} parent=11 // pred_region
          %735 = vsyncadd [#allocation15], 0
          %s737 = sshll.u32 %s13, 4
          %s738 = int_to_ptr.hbm [resolvable:$true] %s737
          %s739 = sshll.u32 [#allocation16], 4
          %s740 = int_to_ptr.vmem [resolvable:$true] %s739
          %742 = dma.hbm_to_vmem [thread:$0]  %s738, 64, %s740, [#allocation15]
        $region48: #{tpu_custom_call.1} parent=11 // pred_fallthru
          _
        // Predicated region
        $region49: #{tpu_custom_call.1} parent=11 // pred_check
          %p743 = pneg %p391
        $region50: #{tpu_custom_call.1} parent=11 // pred_check_branch
          %745 = sbr.rel (%p743) target = $region52
        $region51: #{tpu_custom_call.1} parent=11 // pred_region
          %747 = vsyncadd [#allocation18], 0
          %s749 = sshll.u32 %s14, 4
          %s750 = int_to_ptr.hbm [resolvable:$true] %s749
          %s751 = sshll.u32 [#allocation17], 4
          %s752 = int_to_ptr.vmem [resolvable:$true] %s751
          %754 = dma.hbm_to_vmem [thread:$0]  %s750, 128, %s752, [#allocation18]
        $region52: #{tpu_custom_call.1} parent=11 // pred_fallthru
          _
        // Predicated region
        $region53: #{tpu_custom_call.1} parent=11 // pred_check
          %p755 = pneg %p412
        $region54: #{tpu_custom_call.1} parent=11 // pred_check_branch
          %757 = sbr.rel (%p755) target = $region56
        $region55: #{tpu_custom_call.1} parent=11 // pred_region
          %759 = vsyncadd [#allocation18], 0
          %s760 = sshll.u32 %s15, 4
          %s761 = int_to_ptr.hbm [resolvable:$true] %s760
          %s762 = sshll.u32 [#allocation19], 4
          %s763 = int_to_ptr.vmem [resolvable:$true] %s762
          %768 = dma.hbm_to_vmem [thread:$0]  %s761, 512, %s763, [#allocation18], 256, 256, 16
        $region56: #{tpu_custom_call.1} parent=11 // pred_fallthru
          _
        // Predicated region
        $region57: #{tpu_custom_call.1} parent=11 // pred_check
          %p769 = pneg %p433
        $region58: #{tpu_custom_call.1} parent=11 // pred_check_branch
          %771 = sbr.rel (%p769) target = $region60
        $region59: #{tpu_custom_call.1} parent=11 // pred_region
          %773 = vsyncadd [#allocation21], 0
          %s774 = sshll.u32 %s16, 4
          %s775 = int_to_ptr.hbm [resolvable:$true] %s774
          %s776 = sshll.u32 [#allocation20], 4
          %s777 = int_to_ptr.vmem [resolvable:$true] %s776
          %782 = dma.hbm_to_vmem [thread:$0]  %s775, 2048, %s777, [#allocation21], 512, 512, 32
        $region60: #{tpu_custom_call.1} parent=11 // pred_fallthru
          _
        // Predicated region
        $region61: #{tpu_custom_call.1} parent=11 // pred_check
          %p783 = pneg %p454
        $region62: #{tpu_custom_call.1} parent=11 // pred_check_branch
          %785 = sbr.rel (%p783) target = $region64
        $region63: #{tpu_custom_call.1} parent=11 // pred_region
          %787 = vsyncadd [#allocation21], 0
          %s788 = sshll.u32 %s17, 4
          %s789 = int_to_ptr.hbm [resolvable:$true] %s788
          %s790 = sshll.u32 [#allocation22], 4
          %s791 = int_to_ptr.vmem [resolvable:$true] %s790
          %796 = dma.hbm_to_vmem [thread:$0]  %s789, 3072, %s791, [#allocation21], 128, 128, 8
        $region64: #{tpu_custom_call.1} parent=11 // pred_fallthru
          _
        // Predicated region
        $region65: #{tpu_custom_call.1} parent=11 // pred_check
          %p797 = pneg %p475
        $region66: #{tpu_custom_call.1} parent=11 // pred_check_branch
          %799 = sbr.rel (%p797) target = $region68
        $region67: #{tpu_custom_call.1} parent=11 // pred_region
          _
        $region68: #{tpu_custom_call.1} parent=11 // pred_fallthru
          _
        // Predicated region
        $region69: #{tpu_custom_call.1} parent=11 // pred_check
          %p800 = pneg %p496
        $region70: #{tpu_custom_call.1} parent=11 // pred_check_branch
          %802 = sbr.rel (%p800) target = $region72
        $region71: #{tpu_custom_call.1} parent=11 // pred_region
          %804 = vsyncadd [#allocation24], 0
          %s805 = sshll.u32 %s19, 4
          %s806 = int_to_ptr.hbm [resolvable:$true] %s805
          %s807 = sshll.u32 [#allocation23], 4
          %s808 = int_to_ptr.vmem [resolvable:$true] %s807
          %813 = dma.hbm_to_vmem [thread:$0]  %s806, 24576, %s808, [#allocation24], 256, 256, 16
        $region72: #{tpu_custom_call.1} parent=11 // pred_fallthru
          _
        // Predicated region
        $region73: #{tpu_custom_call.1} parent=11 // pred_check
          %p814 = pneg %p517
        $region74: #{tpu_custom_call.1} parent=11 // pred_check_branch
          %816 = sbr.rel (%p814) target = $region76
        $region75: #{tpu_custom_call.1} parent=11 // pred_region
          %818 = vsyncadd [#allocation24], 0
          %s819 = sshll.u32 %s20, 4
          %s820 = int_to_ptr.hbm [resolvable:$true] %s819
          %s821 = sshll.u32 [#allocation25], 4
          %s822 = int_to_ptr.vmem [resolvable:$true] %s821
          %827 = dma.hbm_to_vmem [thread:$0]  %s820, 128, %s822, [#allocation24], 64, 64, 4
        $region76: #{tpu_custom_call.1} parent=11 // pred_fallthru
          _
        // Predicated region
        $region77: #{tpu_custom_call.1} parent=11 // pred_check
          %p828 = pneg %p538
        $region78: #{tpu_custom_call.1} parent=11 // pred_check_branch
          %830 = sbr.rel (%p828) target = $region80
        $region79: #{tpu_custom_call.1} parent=11 // pred_region
          %832 = vsyncadd [#allocation27], 0
          %s833 = sshll.u32 %s21, 4
          %s834 = int_to_ptr.hbm [resolvable:$true] %s833
          %s835 = sshll.u32 [#allocation26], 4
          %s836 = int_to_ptr.vmem [resolvable:$true] %s835
          %841 = dma.hbm_to_vmem [thread:$0]  %s834, 256, %s836, [#allocation27], 128, 128, 8
        $region80: #{tpu_custom_call.1} parent=11 // pred_fallthru
          _
        // Predicated region
        $region81: #{tpu_custom_call.1} parent=11 // pred_check
          %p842 = pneg %p559
        $region82: #{tpu_custom_call.1} parent=11 // pred_check_branch
          %844 = sbr.rel (%p842) target = $region84
        $region83: #{tpu_custom_call.1} parent=11 // pred_region
          %846 = vsyncadd [#allocation27], 0
          %s847 = sshll.u32 %s22, 4
          %s848 = int_to_ptr.hbm [resolvable:$true] %s847
          %s849 = sshll.u32 [#allocation28], 4
          %s850 = int_to_ptr.vmem [resolvable:$true] %s849
          %855 = dma.hbm_to_vmem [thread:$0]  %s848, 512, %s850, [#allocation27], 128, 128, 8
        $region84: #{tpu_custom_call.1} parent=11 // pred_fallthru
          _
        // Predicated region
        $region85: #{tpu_custom_call.1} parent=11 // pred_check
          %p856 = pneg %p580
        $region86: #{tpu_custom_call.1} parent=11 // pred_check_branch
          %858 = sbr.rel (%p856) target = $region88
        $region87: #{tpu_custom_call.1} parent=11 // pred_region
          %860 = vsyncadd [#allocation30], 0
          %s861 = sshll.u32 %s23, 4
          %s862 = int_to_ptr.hbm [resolvable:$true] %s861
          %s863 = sshll.u32 [#allocation29], 4
          %s864 = int_to_ptr.vmem [resolvable:$true] %s863
          %869 = dma.hbm_to_vmem [thread:$0]  %s862, 24576, %s864, [#allocation30], 128, 128, 8
        $region88: #{tpu_custom_call.1} parent=11 // pred_fallthru
          _
        // Predicated region
        $region89: #{tpu_custom_call.1} parent=11 // pred_check
          %p870 = pneg %p601
        $region90: #{tpu_custom_call.1} parent=11 // pred_check_branch
          %872 = sbr.rel (%p870) target = $region92
        $region91: #{tpu_custom_call.1} parent=11 // pred_region
          _
        $region92: #{tpu_custom_call.1} parent=11 // pred_fallthru
          _
        // Predicated region
        $region93: #{tpu_custom_call.1} parent=11 // pred_check
          %p873 = pneg %p622
        $region94: #{tpu_custom_call.1} parent=11 // pred_check_branch
          %875 = sbr.rel (%p873) target = $region96
        $region95: #{tpu_custom_call.1} parent=11 // pred_region
          _
        $region96: #{tpu_custom_call.1} parent=11 // pred_fallthru
          _
      $region12: #{tpu_custom_call.1} parent=5 // pred_fallthru
        _
      %p876 = scmp.lt.s32.totalorder %s51, 2
      // Predicated region
      $region97: #{tpu_custom_call.1} parent=5 // pred_check
        %p877 = pneg %p876
      $region98: #{tpu_custom_call.1} parent=5 // pred_check_branch
        %879 = sbr.rel (%p877) target = $region100
      $region99: #{tpu_custom_call.1} parent=5 // pred_region
        // Predicated region
        $region101: #{tpu_custom_call.1} parent=99 // pred_check
          %p880 = pneg %p71
        $region102: #{tpu_custom_call.1} parent=99 // pred_check_branch
          %882 = sbr.rel (%p880) target = $region104
        $region103: #{tpu_custom_call.1} parent=99 // pred_region
          %s883 = sand.u32 %s61, 1
          %s884 = scalar_lea.sflag [#allocation3], %s883
          %s885 = sand.u32 %s61, 1
          %s886 = smul.addr %s885, 2
          %s887 = scalar_lea.vmem [#allocation2], %s886
          %889 = vsyncadd %s884, 0
          %s890 = smul.addr %s51, 2
          %s891 = scalar_lea.hbm %s0, %s890
          %s893 = sshll.u32 %s891, 4
          %s894 = int_to_ptr.hbm [resolvable:$true] %s893
          %s895 = sshll.u32 %s887, 4
          %s896 = int_to_ptr.vmem [resolvable:$true] %s895
          %898 = dma.hbm_to_vmem [thread:$0]  %s894, 32, %s896, %s884
        $region104: #{tpu_custom_call.1} parent=99 // pred_fallthru
          _
        // Predicated region
        $region105: #{tpu_custom_call.1} parent=99 // pred_check
          %p899 = pneg %p97
        $region106: #{tpu_custom_call.1} parent=99 // pred_check_branch
          %901 = sbr.rel (%p899) target = $region108
        $region107: #{tpu_custom_call.1} parent=99 // pred_region
          %s902 = sand.u32 %s51, 1
          %s903 = scalar_lea.sflag [#allocation6], %s902
          %s904 = sand.u32 %s87, 1
          %s905 = smul.addr %s904, 2
          %s906 = scalar_lea.vmem [#allocation5], %s905
          %908 = vsyncadd %s903, 0
          %s909 = smul.addr %s51, 2
          %s910 = scalar_lea.hbm %s1, %s909
          %s912 = sshll.u32 %s910, 4
          %s913 = int_to_ptr.hbm [resolvable:$true] %s912
          %s914 = sshll.u32 %s906, 4
          %s915 = int_to_ptr.vmem [resolvable:$true] %s914
          %917 = dma.hbm_to_vmem [thread:$0]  %s913, 32, %s915, %s903
        $region108: #{tpu_custom_call.1} parent=99 // pred_fallthru
          _
        // Predicated region
        $region109: #{tpu_custom_call.1} parent=99 // pred_check
          %p918 = pneg %p123
        $region110: #{tpu_custom_call.1} parent=99 // pred_check_branch
          %920 = sbr.rel (%p918) target = $region112
        $region111: #{tpu_custom_call.1} parent=99 // pred_region
          %p921 = scmp.lt.s32.totalorder %s51, 1
          %s922 = scalar_select %p921, %s51, 1
          %s923 = smul.addr %s922, 4
          %s924 = scalar_lea.vmem %s2, %s923
        $region112: #{tpu_custom_call.1} parent=99 // pred_fallthru
          _
        // Predicated region
        $region113: #{tpu_custom_call.1} parent=99 // pred_check
          %p925 = pneg %p149
        $region114: #{tpu_custom_call.1} parent=99 // pred_check_branch
          %927 = sbr.rel (%p925) target = $region116
        $region115: #{tpu_custom_call.1} parent=99 // pred_region
          %s928 = sand.u32 %s51, 1
          %s929 = scalar_lea.sflag [#allocation6], %s928
          %s930 = sand.u32 %s139, 1
          %s931 = smul.addr %s930, 8
          %s932 = scalar_lea.vmem [#allocation7], %s931
          %934 = vsyncadd %s929, 0
          %s935 = smul.addr %s51, 8
          %s936 = scalar_lea.hbm %s3, %s935
          %s938 = sshll.u32 %s936, 4
          %s939 = int_to_ptr.hbm [resolvable:$true] %s938
          %s940 = sshll.u32 %s932, 4
          %s941 = int_to_ptr.vmem [resolvable:$true] %s940
          %943 = dma.hbm_to_vmem [thread:$0]  %s939, 128, %s941, %s929
        $region116: #{tpu_custom_call.1} parent=99 // pred_fallthru
          _
        // Predicated region
        $region117: #{tpu_custom_call.1} parent=99 // pred_check
          %p944 = pneg %p175
        $region118: #{tpu_custom_call.1} parent=99 // pred_check_branch
          %946 = sbr.rel (%p944) target = $region120
        $region119: #{tpu_custom_call.1} parent=99 // pred_region
          %s947 = sand.u32 %s51, 1
          %s948 = scalar_lea.sflag [#allocation9], %s947
          %s949 = sand.u32 %s165, 1
          %s950 = smul.addr %s949, 32
          %s951 = scalar_lea.vmem [#allocation8], %s950
          %953 = vsyncadd %s948, 0
          %s954 = smul.addr %s51, 4
          %s955 = smul.addr %s954, 8
          %s956 = scalar_lea.hbm %s4, %s955
          %s957 = sshll.u32 %s956, 4
          %s958 = int_to_ptr.hbm [resolvable:$true] %s957
          %s959 = sshll.u32 %s951, 4
          %s960 = int_to_ptr.vmem [resolvable:$true] %s959
          %965 = dma.hbm_to_vmem [thread:$0]  %s958, 512, %s960, %s948, 256, 256, 16
        $region120: #{tpu_custom_call.1} parent=99 // pred_fallthru
          _
      $region100: #{tpu_custom_call.1} parent=5 // pred_fallthru
        _
      %p966 = scmp.le.s32.totalorder 1, %s51
      %p967 = scmp.lt.s32.totalorder %s51, 3
      %p968 = pnand %p966, %p967
      %p969 = pneg %p968
      // Predicated region
      $region121: #{tpu_custom_call.1} parent=5 // pred_check
        _
      $region122: #{tpu_custom_call.1} parent=5 // pred_check_branch
        %971 = sbr.rel (%p968) target = $region124
      $region123: #{tpu_custom_call.1} parent=5 // pred_region
        %s972 = ssub.s32 %s51, 1
        %s973 = sand.u32 %s64, 1
        %s974 = scalar_lea.sflag [#allocation3], %s973
        %s975 = sand.u32 %s64, 1
        %s976 = smul.addr %s975, 2
        %s977 = scalar_lea.vmem [#allocation2], %s976
        // Predicated region
        $region125: #{tpu_custom_call.1} parent=123 // pred_check
          %p978 = pneg %p77
        $region126: #{tpu_custom_call.1} parent=123 // pred_check_branch
          %980 = sbr.rel (%p978) target = $region128
        $region127: #{tpu_custom_call.1} parent=123 // pred_region
          %982 = dma.done %s974, 32
        $region128: #{tpu_custom_call.1} parent=123 // pred_fallthru
          _
        %s983 = sand.u32 %s56, 1
        %s984 = scalar_lea.sflag [#allocation6], %s983
        %s985 = sand.u32 %s90, 1
        %s986 = smul.addr %s985, 2
        %s987 = scalar_lea.vmem [#allocation5], %s986
        // Predicated region
        $region129: #{tpu_custom_call.1} parent=123 // pred_check
          %p988 = pneg %p103
        $region130: #{tpu_custom_call.1} parent=123 // pred_check_branch
          %990 = sbr.rel (%p988) target = $region132
        $region131: #{tpu_custom_call.1} parent=123 // pred_region
          %992 = dma.done %s984, 32
        $region132: #{tpu_custom_call.1} parent=123 // pred_fallthru
          _
        %s993 = sand.u32 %s56, 1
        %s994 = scalar_lea.sflag [#allocation6], %s993
        %s995 = sand.u32 %s142, 1
        %s996 = smul.addr %s995, 8
        %s997 = scalar_lea.vmem [#allocation7], %s996
        // Predicated region
        $region133: #{tpu_custom_call.1} parent=123 // pred_check
          %p998 = pneg %p155
        $region134: #{tpu_custom_call.1} parent=123 // pred_check_branch
          %1000 = sbr.rel (%p998) target = $region136
        $region135: #{tpu_custom_call.1} parent=123 // pred_region
          %1002 = dma.done %s994, 128
        $region136: #{tpu_custom_call.1} parent=123 // pred_fallthru
          _
        %s1003 = sand.u32 %s56, 1
        %s1004 = scalar_lea.sflag [#allocation9], %s1003
        %s1005 = sand.u32 %s168, 1
        %s1006 = smul.addr %s1005, 32
        %s1007 = scalar_lea.vmem [#allocation8], %s1006
        // Predicated region
        $region137: #{tpu_custom_call.1} parent=123 // pred_check
          %p1008 = pneg %p181
        $region138: #{tpu_custom_call.1} parent=123 // pred_check_branch
          %1010 = sbr.rel (%p1008) target = $region140
        $region139: #{tpu_custom_call.1} parent=123 // pred_region
          %1012 = dma.done %s1004, 512
        $region140: #{tpu_custom_call.1} parent=123 // pred_fallthru
          _
        // Predicated region
        $region141: #{tpu_custom_call.1} parent=123 // pred_check
          %p1013 = pneg %p286
        $region142: #{tpu_custom_call.1} parent=123 // pred_check_branch
          %1015 = sbr.rel (%p1013) target = $region144
        $region143: #{tpu_custom_call.1} parent=123 // pred_region
          %1017 = dma.done [#allocation9], 512
        $region144: #{tpu_custom_call.1} parent=123 // pred_fallthru
          _
        // Predicated region
        $region145: #{tpu_custom_call.1} parent=123 // pred_check
          %p1018 = pneg %p307
        $region146: #{tpu_custom_call.1} parent=123 // pred_check_branch
          %1020 = sbr.rel (%p1018) target = $region148
        $region147: #{tpu_custom_call.1} parent=123 // pred_region
          %1022 = dma.done [#allocation12], 1024
        $region148: #{tpu_custom_call.1} parent=123 // pred_fallthru
          _
        // Predicated region
        $region149: #{tpu_custom_call.1} parent=123 // pred_check
          %p1023 = pneg %p328
        $region150: #{tpu_custom_call.1} parent=123 // pred_check_branch
          %1025 = sbr.rel (%p1023) target = $region152
        $region151: #{tpu_custom_call.1} parent=123 // pred_region
          %1027 = dma.done [#allocation12], 4096
        $region152: #{tpu_custom_call.1} parent=123 // pred_fallthru
          _
        // Predicated region
        $region153: #{tpu_custom_call.1} parent=123 // pred_check
          %p1028 = pneg %p349
        $region154: #{tpu_custom_call.1} parent=123 // pred_check_branch
          %1030 = sbr.rel (%p1028) target = $region156
        $region155: #{tpu_custom_call.1} parent=123 // pred_region
          %1032 = dma.done [#allocation15], 16384
        $region156: #{tpu_custom_call.1} parent=123 // pred_fallthru
          _
        // Predicated region
        $region157: #{tpu_custom_call.1} parent=123 // pred_check
          %p1033 = pneg %p370
        $region158: #{tpu_custom_call.1} parent=123 // pred_check_branch
          %1035 = sbr.rel (%p1033) target = $region160
        $region159: #{tpu_custom_call.1} parent=123 // pred_region
          %1037 = dma.done [#allocation15], 64
        $region160: #{tpu_custom_call.1} parent=123 // pred_fallthru
          _
        // Predicated region
        $region161: #{tpu_custom_call.1} parent=123 // pred_check
          %p1038 = pneg %p391
        $region162: #{tpu_custom_call.1} parent=123 // pred_check_branch
          %1040 = sbr.rel (%p1038) target = $region164
        $region163: #{tpu_custom_call.1} parent=123 // pred_region
          %1042 = dma.done [#allocation18], 128
        $region164: #{tpu_custom_call.1} parent=123 // pred_fallthru
          _
        // Predicated region
        $region165: #{tpu_custom_call.1} parent=123 // pred_check
          %p1043 = pneg %p412
        $region166: #{tpu_custom_call.1} parent=123 // pred_check_branch
          %1045 = sbr.rel (%p1043) target = $region168
        $region167: #{tpu_custom_call.1} parent=123 // pred_region
          %1047 = dma.done [#allocation18], 512
        $region168: #{tpu_custom_call.1} parent=123 // pred_fallthru
          _
        // Predicated region
        $region169: #{tpu_custom_call.1} parent=123 // pred_check
          %p1048 = pneg %p433
        $region170: #{tpu_custom_call.1} parent=123 // pred_check_branch
          %1050 = sbr.rel (%p1048) target = $region172
        $region171: #{tpu_custom_call.1} parent=123 // pred_region
          %1052 = dma.done [#allocation21], 2048
        $region172: #{tpu_custom_call.1} parent=123 // pred_fallthru
          _
        // Predicated region
        $region173: #{tpu_custom_call.1} parent=123 // pred_check
          %p1053 = pneg %p454
        $region174: #{tpu_custom_call.1} parent=123 // pred_check_branch
          %1055 = sbr.rel (%p1053) target = $region176
        $region175: #{tpu_custom_call.1} parent=123 // pred_region
          %1057 = dma.done [#allocation21], 3072
        $region176: #{tpu_custom_call.1} parent=123 // pred_fallthru
          _
        // Predicated region
        $region177: #{tpu_custom_call.1} parent=123 // pred_check
          %p1058 = pneg %p496
        $region178: #{tpu_custom_call.1} parent=123 // pred_check_branch
          %1060 = sbr.rel (%p1058) target = $region180
        $region179: #{tpu_custom_call.1} parent=123 // pred_region
          %1062 = dma.done [#allocation24], 24576
        $region180: #{tpu_custom_call.1} parent=123 // pred_fallthru
          _
        // Predicated region
        $region181: #{tpu_custom_call.1} parent=123 // pred_check
          %p1063 = pneg %p517
        $region182: #{tpu_custom_call.1} parent=123 // pred_check_branch
          %1065 = sbr.rel (%p1063) target = $region184
        $region183: #{tpu_custom_call.1} parent=123 // pred_region
          %1067 = dma.done [#allocation24], 128
        $region184: #{tpu_custom_call.1} parent=123 // pred_fallthru
          _
        // Predicated region
        $region185: #{tpu_custom_call.1} parent=123 // pred_check
          %p1068 = pneg %p538
        $region186: #{tpu_custom_call.1} parent=123 // pred_check_branch
          %1070 = sbr.rel (%p1068) target = $region188
        $region187: #{tpu_custom_call.1} parent=123 // pred_region
          %1072 = dma.done [#allocation27], 256
        $region188: #{tpu_custom_call.1} parent=123 // pred_fallthru
          _
        // Predicated region
        $region189: #{tpu_custom_call.1} parent=123 // pred_check
          %p1073 = pneg %p559
        $region190: #{tpu_custom_call.1} parent=123 // pred_check_branch
          %1075 = sbr.rel (%p1073) target = $region192
        $region191: #{tpu_custom_call.1} parent=123 // pred_region
          %1077 = dma.done [#allocation27], 512
        $region192: #{tpu_custom_call.1} parent=123 // pred_fallthru
          _
        // Predicated region
        $region193: #{tpu_custom_call.1} parent=123 // pred_check
          %p1078 = pneg %p580
        $region194: #{tpu_custom_call.1} parent=123 // pred_check_branch
          %1080 = sbr.rel (%p1078) target = $region196
        $region195: #{tpu_custom_call.1} parent=123 // pred_region
          %1082 = dma.done [#allocation30], 24576
        $region196: #{tpu_custom_call.1} parent=123 // pred_fallthru
          _
        %s1083 = sand.u32 %s64, 1
        %s1084 = scalar_lea.sflag [#allocation3], %s1083
        %s1085 = sand.u32 %s64, 1
        %s1086 = smul.addr %s1085, 2
        %s1087 = scalar_lea.vmem [#allocation2], %s1086
        %p1088 = pneg %p77
        %p1089 = pneg %p74
        %s1090 = sand.u32 %s56, 1
        %s1091 = scalar_lea.sflag [#allocation6], %s1090
        %s1092 = sand.u32 %s90, 1
        %s1093 = smul.addr %s1092, 2
        %s1094 = scalar_lea.vmem [#allocation5], %s1093
        %p1095 = pneg %p103
        %p1096 = pneg %p100
        %p1097 = scmp.lt.s32.totalorder %s56, 1
        %s1098 = scalar_select %p1097, %s56, 1
        %s1099 = smul.addr %s1098, 4
        %s1100 = scalar_lea.vmem %s2, %s1099
        %p1101 = pneg %p129
        %p1102 = pneg %p126
        %s1103 = sand.u32 %s56, 1
        %s1104 = scalar_lea.sflag [#allocation6], %s1103
        %s1105 = sand.u32 %s142, 1
        %s1106 = smul.addr %s1105, 8
        %s1107 = scalar_lea.vmem [#allocation7], %s1106
        %p1108 = pneg %p155
        %p1109 = pneg %p152
        %s1110 = sand.u32 %s56, 1
        %s1111 = scalar_lea.sflag [#allocation9], %s1110
        %s1112 = sand.u32 %s168, 1
        %s1113 = smul.addr %s1112, 32
        %s1114 = scalar_lea.vmem [#allocation8], %s1113
        %p1115 = pneg %p181
        %p1116 = pneg %p178
        %p1117 = pneg %p202
        %p1118 = pneg %p199
        %p1119 = pneg %p223
        %p1120 = pneg %p220
        %p1121 = pneg %p244
        %p1122 = pneg %p241
        %p1123 = pneg %p265
        %p1124 = pneg %p262
        %p1125 = pneg %p286
        %p1126 = pneg %p283
        %p1127 = pneg %p307
        %p1128 = pneg %p304
        %p1129 = pneg %p328
        %p1130 = pneg %p325
        %p1131 = pneg %p349
        %p1132 = pneg %p346
        %p1133 = pneg %p370
        %p1134 = pneg %p367
        %p1135 = pneg %p391
        %p1136 = pneg %p388
        %p1137 = pneg %p412
        %p1138 = pneg %p409
        %p1139 = pneg %p433
        %p1140 = pneg %p430
        %p1141 = pneg %p454
        %p1142 = pneg %p451
        %p1143 = pneg %p475
        %p1144 = pneg %p472
        %p1145 = pneg %p496
        %p1146 = pneg %p493
        %p1147 = pneg %p517
        %p1148 = pneg %p514
        %p1149 = pneg %p538
        %p1150 = pneg %p535
        %p1151 = pneg %p559
        %p1152 = pneg %p556
        %p1153 = pneg %p580
        %p1154 = pneg %p577
        %p1155 = pneg %p601
        %p1156 = pneg %p598
        %p1157 = pneg %p622
        %p1158 = pneg %p619
        %p1159 = pneg %p648
        %p1160 = pneg %p645
        %s1161 = sand.u32 %s635, 1
        %s1162 = scalar_lea.sflag [#allocation4], %s1161
        %s1163 = sand.u32 %s635, 1
        %s1164 = smul.addr %s1163, 64
        %s1165 = scalar_lea.vmem [#allocation31], %s1164
        %p1166 = scmp.lt.s32.totalorder %s56, 1
        %s1167 = scalar_select %p1166, %s56, 1
        %s1168 = smul.addr %s1167, 4
        %s1169 = scalar_lea.vmem %s2, %s1168
        %v1170 = vld [vmem:[%s977] sm:$0x3]
        %v1171 = vld [vmem:[%s5] sm:$0xf]
        %v1172 = vld [vmem:[#allocation10] sm:$0xff]
        %v1173 = vld [vmem:[#allocation10 + $0x8] sm:$0xff]
        %v1174 = vld [vmem:[#allocation10 + $0x10] sm:$0xff]
        %v1175 = vld [vmem:[#allocation10 + $0x18] sm:$0xff]
        %vm1176 = vcmask 15360
        %v1178 = vsel %vm1176, %v1171, 0
        %vm1180 = vcmask 1041408
        %v1182 = vsel %vm1180, %v1170, 0
        %1184 = vmatpush.msra.mxu0 0.0
        %1185 = vmatpush.msra.mxu0 0.0
        %1186 = vmatpush.msra.mxu0 0.0
        %1187 = vmatpush.msra.mxu0 0.0
        %1188 = vmatpush.msra.mxu0 0.0
        %1189 = vmatpush.msra.mxu0 0.0
        %1190 = vmatpush.msra.mxu0 0.0
        %1191 = vmatpush.msra.mxu0 0.0
        %1192 = vmatpush.msra.mxu0 0.0
        %1193 = vmatpush.msra.mxu0 0.0
        %1194 = vmatpush.msra.mxu0 0.0
        %1195 = vmatpush.msra.mxu0 0.0
        %1196 = vmatpush.msra.mxu0 0.0
        %1197 = vmatpush.msra.mxu0 0.0
        %1198 = vmatpush.msra.mxu0 0.0
        %1199 = vmatpush.msra.mxu0 %v1182
        %1200 = vmatmul.f32.gmra.mxu0 %v1178
        %v1201 = vpop.f32.mrf.mxu0
        %v1202 = vadd.f32 0.0, %v1201
        %1203 = vdwg.mxu0
        %vm1204 = vcmask 261120
        %v1206 = vsel %vm1204, %v1202, 0
        %1208 = vmatpush.msra.mxu0 0.0
        %1209 = vmatpush.msra.mxu0 0.0
        %1210 = vmatpush.msra.mxu0 0.0
        %1211 = vmatpush.msra.mxu0 0.0
        %1212 = vmatpush.msra.mxu0 0.0
        %1213 = vmatpush.msra.mxu0 0.0
        %1214 = vmatpush.msra.mxu0 0.0
        %1215 = vmatpush.msra.mxu0 0.0
        %1216 = vmatpush.msra.mxu0 0.0
        %1217 = vmatpush.msra.mxu0 0.0
        %1218 = vmatpush.msra.mxu0 0.0
        %1219 = vmatpush.msra.mxu0 0.0
        %1220 = vmatpush.msra.mxu0 %v1175
        %1221 = vmatpush.msra.mxu0 %v1174
        %1222 = vmatpush.msra.mxu0 %v1173
        %1223 = vmatpush.msra.mxu0 %v1172
        %1224 = vmatmul.f32.gmra.mxu0 %v1206
        %v1225 = vpop.f32.mrf.mxu0
        %v1226 = vadd.f32 0.0, %v1225
        %1227 = vdwg.mxu0
        %v1228 = vld [vmem:[%s987] sm:$0x3]
        %v1230 = vsel %vm1180, %v1228, 0
        %1232 = vmatpush.msra.mxu0 0.0
        %1233 = vmatpush.msra.mxu0 0.0
        %1234 = vmatpush.msra.mxu0 0.0
        %1235 = vmatpush.msra.mxu0 0.0
        %1236 = vmatpush.msra.mxu0 0.0
        %1237 = vmatpush.msra.mxu0 0.0
        %1238 = vmatpush.msra.mxu0 0.0
        %1239 = vmatpush.msra.mxu0 0.0
        %1240 = vmatpush.msra.mxu0 0.0
        %1241 = vmatpush.msra.mxu0 0.0
        %1242 = vmatpush.msra.mxu0 0.0
        %1243 = vmatpush.msra.mxu0 0.0
        %1244 = vmatpush.msra.mxu0 0.0
        %1245 = vmatpush.msra.mxu0 0.0
        %1246 = vmatpush.msra.mxu0 0.0
        %1247 = vmatpush.msra.mxu0 %v1230
        %1248 = vmatmul.f32.gmra.mxu0 %v1178
        %v1249 = vpop.f32.mrf.mxu0
        %v1250 = vadd.f32 0.0, %v1249
        %1251 = vdwg.mxu0
        %v1253 = vsel %vm1204, %v1250, 0
        %1255 = vmatpush.msra.mxu0 0.0
        %1256 = vmatpush.msra.mxu0 0.0
        %1257 = vmatpush.msra.mxu0 0.0
        %1258 = vmatpush.msra.mxu0 0.0
        %1259 = vmatpush.msra.mxu0 0.0
        %1260 = vmatpush.msra.mxu0 0.0
        %1261 = vmatpush.msra.mxu0 0.0
        %1262 = vmatpush.msra.mxu0 0.0
        %1263 = vmatpush.msra.mxu0 0.0
        %1264 = vmatpush.msra.mxu0 0.0
        %1265 = vmatpush.msra.mxu0 0.0
        %1266 = vmatpush.msra.mxu0 0.0
        %1267 = vmatpush.msra.mxu0 %v1175
        %1268 = vmatpush.msra.mxu0 %v1174
        %1269 = vmatpush.msra.mxu0 %v1173
        %1270 = vmatpush.msra.mxu0 %v1172
        %1271 = vmatmul.f32.gmra.mxu0 %v1253
        %v1272 = vpop.f32.mrf.mxu0
        %v1273 = vadd.f32 0.0, %v1272
        %1274 = vdwg.mxu0
        %v1275 = vld [vmem:[#allocation16] sm:$0xf]
        %vm1276 = vcmp.eq.f32.partialorder %v1273, %v1275
        %v1277 = vsel %vm1276, %v1226, 0.0
        %s1278 = scalar_lea.vmem [#allocation22], 64
        %v1279 = vld [vmem:[%s1278] sm:$0xff]
        %v1280 = vld [vmem:[%s1278 + $0x8] sm:$0xff]
        %v1281 = vld [vmem:[%s1278 + $0x10] sm:$0xff]
        %v1282 = vld [vmem:[%s1278 + $0x18] sm:$0xff]
        %v1283 = vld [vmem:[%s1278 + $0x20] sm:$0xff]
        %v1284 = vld [vmem:[%s1278 + $0x28] sm:$0xff]
        %v1285 = vld [vmem:[%s1278 + $0x30] sm:$0xff]
        %v1286 = vld [vmem:[%s1278 + $0x38] sm:$0xff]
        %v1287 = vld [vmem:[#allocation25] sm:$0xf]
        %v1288 = vld [vmem:[#allocation22] sm:$0xff]
        %v1289 = vld [vmem:[#allocation22 + $0x8] sm:$0xff]
        %v1290 = vld [vmem:[#allocation22 + $0x10] sm:$0xff]
        %v1291 = vld [vmem:[#allocation22 + $0x18] sm:$0xff]
        %v1292 = vld [vmem:[#allocation22 + $0x20] sm:$0xff]
        %v1293 = vld [vmem:[#allocation22 + $0x28] sm:$0xff]
        %v1294 = vld [vmem:[#allocation22 + $0x30] sm:$0xff]
        %v1295 = vld [vmem:[#allocation22 + $0x38] sm:$0xff]
        %vm1296 = vcmask 523264
        %v1298 = vsel %vm1296, %v1277, 0
        %1300 = vmatpush.msra.mxu0 0.0
        %1301 = vmatpush.msra.mxu0 0.0
        %1302 = vmatpush.msra.mxu0 0.0
        %1303 = vmatpush.msra.mxu0 0.0
        %1304 = vmatpush.msra.mxu0 0.0
        %1305 = vmatpush.msra.mxu0 0.0
        %1306 = vmatpush.msra.mxu0 0.0
        %1307 = vmatpush.msra.mxu0 0.0
        %1308 = vmatpush.msra.mxu0 %v1295
        %1309 = vmatpush.msra.mxu0 %v1294
        %1310 = vmatpush.msra.mxu0 %v1293
        %1311 = vmatpush.msra.mxu0 %v1292
        %1312 = vmatpush.msra.mxu0 %v1291
        %1313 = vmatpush.msra.mxu0 %v1290
        %1314 = vmatpush.msra.mxu0 %v1289
        %1315 = vmatpush.msra.mxu0 %v1288
        %1316 = vmatmul.f32.gmra.mxu0 %v1298
        %v1317 = vpop.f32.mrf.mxu0
        %v1318 = vadd.f32 0.0, %v1317
        %1319 = vdwg.mxu0
        %vm1320 = vcmask 31744
        %v1322 = vsel %vm1320, %v1287, 0
        %vm1324 = vcmask 1043456
        %v1326 = vsel %vm1324, %v1318, 0
        %1328 = vmatpush.msra.mxu0 0.0
        %1329 = vmatpush.msra.mxu0 0.0
        %1330 = vmatpush.msra.mxu0 0.0
        %1331 = vmatpush.msra.mxu0 0.0
        %1332 = vmatpush.msra.mxu0 0.0
        %1333 = vmatpush.msra.mxu0 0.0
        %1334 = vmatpush.msra.mxu0 0.0
        %1335 = vmatpush.msra.mxu0 0.0
        %1336 = vmatpush.msra.mxu0 0.0
        %1337 = vmatpush.msra.mxu0 0.0
        %1338 = vmatpush.msra.mxu0 0.0
        %1339 = vmatpush.msra.mxu0 0.0
        %1340 = vmatpush.msra.mxu0 0.0
        %1341 = vmatpush.msra.mxu0 0.0
        %1342 = vmatpush.msra.mxu0 0.0
        %1343 = vmatpush.msra.mxu0 %v1326
        %1344 = vmatmul.f32.gmra.mxu0 %v1322
        %v1345 = vpop.f32.mrf.mxu0
        %v1346 = vadd.f32 0.0, %v1345
        %1347 = vdwg.mxu0
        %1348 = vmatpush.msra.mxu0 0.0
        %1349 = vmatpush.msra.mxu0 0.0
        %1350 = vmatpush.msra.mxu0 0.0
        %1351 = vmatpush.msra.mxu0 0.0
        %1352 = vmatpush.msra.mxu0 0.0
        %1353 = vmatpush.msra.mxu0 0.0
        %1354 = vmatpush.msra.mxu0 0.0
        %1355 = vmatpush.msra.mxu0 0.0
        %1356 = vmatpush.msra.mxu0 %v1286
        %1357 = vmatpush.msra.mxu0 %v1285
        %1358 = vmatpush.msra.mxu0 %v1284
        %1359 = vmatpush.msra.mxu0 %v1283
        %1360 = vmatpush.msra.mxu0 %v1282
        %1361 = vmatpush.msra.mxu0 %v1281
        %1362 = vmatpush.msra.mxu0 %v1280
        %1363 = vmatpush.msra.mxu0 %v1279
        %1364 = vmatmul.f32.gmra.mxu0 %v1298
        %v1365 = vpop.f32.mrf.mxu0
        %v1366 = vadd.f32 %v1346, %v1365
        %1367 = vdwg.mxu0
        %s1368 = scalar_lea.vmem [#allocation25], 4
        %v1369 = vld [vmem:[%s1368] sm:$0xf]
        %s1370 = scalar_lea.vmem [#allocation22], 128
        %v1371 = vld [vmem:[%s1370] sm:$0xff]
        %v1372 = vld [vmem:[%s1370 + $0x8] sm:$0xff]
        %v1373 = vld [vmem:[%s1370 + $0x10] sm:$0xff]
        %v1374 = vld [vmem:[%s1370 + $0x18] sm:$0xff]
        %v1375 = vld [vmem:[%s1370 + $0x20] sm:$0xff]
        %v1376 = vld [vmem:[%s1370 + $0x28] sm:$0xff]
        %v1377 = vld [vmem:[%s1370 + $0x30] sm:$0xff]
        %v1378 = vld [vmem:[%s1370 + $0x38] sm:$0xff]
        %1379 = vmatpush.msra.mxu0 0.0
        %1380 = vmatpush.msra.mxu0 0.0
        %1381 = vmatpush.msra.mxu0 0.0
        %1382 = vmatpush.msra.mxu0 0.0
        %1383 = vmatpush.msra.mxu0 0.0
        %1384 = vmatpush.msra.mxu0 0.0
        %1385 = vmatpush.msra.mxu0 0.0
        %1386 = vmatpush.msra.mxu0 0.0
        %1387 = vmatpush.msra.mxu0 %v1378
        %1388 = vmatpush.msra.mxu0 %v1377
        %1389 = vmatpush.msra.mxu0 %v1376
        %1390 = vmatpush.msra.mxu0 %v1375
        %1391 = vmatpush.msra.mxu0 %v1374
        %1392 = vmatpush.msra.mxu0 %v1373
        %1393 = vmatpush.msra.mxu0 %v1372
        %1394 = vmatpush.msra.mxu0 %v1371
        %1395 = vmatmul.f32.gmra.mxu0 %v1298
        %v1396 = vpop.f32.mrf.mxu0
        %v1397 = vadd.f32 0.0, %v1396
        %1398 = vdwg.mxu0
        %v1400 = vsel %vm1320, %v1369, 0
        %v1403 = vsel %vm1324, %v1397, 0
        %1405 = vmatpush.msra.mxu0 0.0
        %1406 = vmatpush.msra.mxu0 0.0
        %1407 = vmatpush.msra.mxu0 0.0
        %1408 = vmatpush.msra.mxu0 0.0
        %1409 = vmatpush.msra.mxu0 0.0
        %1410 = vmatpush.msra.mxu0 0.0
        %1411 = vmatpush.msra.mxu0 0.0
        %1412 = vmatpush.msra.mxu0 0.0
        %1413 = vmatpush.msra.mxu0 0.0
        %1414 = vmatpush.msra.mxu0 0.0
        %1415 = vmatpush.msra.mxu0 0.0
        %1416 = vmatpush.msra.mxu0 0.0
        %1417 = vmatpush.msra.mxu0 0.0
        %1418 = vmatpush.msra.mxu0 0.0
        %1419 = vmatpush.msra.mxu0 0.0
        %1420 = vmatpush.msra.mxu0 %v1403
        %1421 = vmatmul.f32.gmra.mxu0 %v1400
        %v1422 = vpop.f32.mrf.mxu0
        %v1423 = vadd.f32 0.0, %v1422
        %1424 = vdwg.mxu0
        %v1425 = vadd.f32 %v1366, %v1423
        %v1426 = vld [vmem:[%s6] sm:$0xff]
        %v1427 = vld [vmem:[#allocation11] sm:$0xff]
        %v1428 = vld [vmem:[#allocation11 + $0x8] sm:$0xff]
        %v1429 = vld [vmem:[#allocation11 + $0x10] sm:$0xff]
        %v1430 = vld [vmem:[#allocation11 + $0x18] sm:$0xff]
        %v1431 = vld [vmem:[#allocation11 + $0x20] sm:$0xff]
        %v1432 = vld [vmem:[#allocation11 + $0x28] sm:$0xff]
        %v1433 = vld [vmem:[#allocation11 + $0x30] sm:$0xff]
        %v1434 = vld [vmem:[#allocation11 + $0x38] sm:$0xff]
        %v1436 = vsel %vm1320, %v1426, 0
        %v1439 = vsel %vm1324, %v1425, 0
        %1441 = vmatpush.msra.mxu0 0.0
        %1442 = vmatpush.msra.mxu0 0.0
        %1443 = vmatpush.msra.mxu0 0.0
        %1444 = vmatpush.msra.mxu0 0.0
        %1445 = vmatpush.msra.mxu0 0.0
        %1446 = vmatpush.msra.mxu0 0.0
        %1447 = vmatpush.msra.mxu0 0.0
        %1448 = vmatpush.msra.mxu0 0.0
        %1449 = vmatpush.msra.mxu0 0.0
        %1450 = vmatpush.msra.mxu0 0.0
        %1451 = vmatpush.msra.mxu0 0.0
        %1452 = vmatpush.msra.mxu0 0.0
        %1453 = vmatpush.msra.mxu0 0.0
        %1454 = vmatpush.msra.mxu0 0.0
        %1455 = vmatpush.msra.mxu0 0.0
        %1456 = vmatpush.msra.mxu0 %v1439
        %1457 = vmatmul.f32.gmra.mxu0 %v1436
        %v1458 = vpop.f32.mrf.mxu0
        %v1459 = vadd.f32 0.0, %v1458
        %1460 = vdwg.mxu0
        %v1462 = vsel %vm1296, %v1459, 0
        %1464 = vmatpush.msra.mxu0 0.0
        %1465 = vmatpush.msra.mxu0 0.0
        %1466 = vmatpush.msra.mxu0 0.0
        %1467 = vmatpush.msra.mxu0 0.0
        %1468 = vmatpush.msra.mxu0 0.0
        %1469 = vmatpush.msra.mxu0 0.0
        %1470 = vmatpush.msra.mxu0 0.0
        %1471 = vmatpush.msra.mxu0 0.0
        %1472 = vmatpush.msra.mxu0 %v1434
        %1473 = vmatpush.msra.mxu0 %v1433
        %1474 = vmatpush.msra.mxu0 %v1432
        %1475 = vmatpush.msra.mxu0 %v1431
        %1476 = vmatpush.msra.mxu0 %v1430
        %1477 = vmatpush.msra.mxu0 %v1429
        %1478 = vmatpush.msra.mxu0 %v1428
        %1479 = vmatpush.msra.mxu0 %v1427
        %1480 = vmatmul.f32.gmra.mxu0 %v1462
        %v1481 = vpop.f32.mrf.mxu0
        %v1482 = vadd.f32 0.0, %v1481
        %1483 = vdwg.mxu0
        %v1484 = vld [vmem:[%s1169] sm:$0xf]
        %v1486 = vsel %vm1324, %v1484, 0
        %1488 = vmatpush.msra.mxu0 0.0
        %1489 = vmatpush.msra.mxu0 0.0
        %1490 = vmatpush.msra.mxu0 0.0
        %1491 = vmatpush.msra.mxu0 0.0
        %1492 = vmatpush.msra.mxu0 0.0
        %1493 = vmatpush.msra.mxu0 0.0
        %1494 = vmatpush.msra.mxu0 0.0
        %1495 = vmatpush.msra.mxu0 0.0
        %1496 = vmatpush.msra.mxu0 0.0
        %1497 = vmatpush.msra.mxu0 0.0
        %1498 = vmatpush.msra.mxu0 0.0
        %1499 = vmatpush.msra.mxu0 0.0
        %1500 = vmatpush.msra.mxu0 0.0
        %1501 = vmatpush.msra.mxu0 0.0
        %1502 = vmatpush.msra.mxu0 0.0
        %1503 = vmatpush.msra.mxu0 %v1486
        %1504 = vmatmul.f32.gmra.mxu0 %v1436
        %v1505 = vpop.f32.mrf.mxu0
        %v1506 = vadd.f32 0.0, %v1505
        %1507 = vdwg.mxu0
        %v1509 = vsel %vm1296, %v1506, 0
        %1511 = vmatpush.msra.mxu0 0.0
        %1512 = vmatpush.msra.mxu0 0.0
        %1513 = vmatpush.msra.mxu0 0.0
        %1514 = vmatpush.msra.mxu0 0.0
        %1515 = vmatpush.msra.mxu0 0.0
        %1516 = vmatpush.msra.mxu0 0.0
        %1517 = vmatpush.msra.mxu0 0.0
        %1518 = vmatpush.msra.mxu0 0.0
        %1519 = vmatpush.msra.mxu0 %v1434
        %1520 = vmatpush.msra.mxu0 %v1433
        %1521 = vmatpush.msra.mxu0 %v1432
        %1522 = vmatpush.msra.mxu0 %v1431
        %1523 = vmatpush.msra.mxu0 %v1430
        %1524 = vmatpush.msra.mxu0 %v1429
        %1525 = vmatpush.msra.mxu0 %v1428
        %1526 = vmatpush.msra.mxu0 %v1427
        %1527 = vmatmul.f32.gmra.mxu0 %v1509
        %v1528 = vpop.f32.mrf.mxu0
        %v1529 = vadd.f32 0.0, %v1528
        %1530 = vdwg.mxu0
        %v1531 = vld [vmem:[#allocation17] sm:$0xff]
        %vm1532 = vcmp.eq.f32.partialorder %v1529, %v1531
        %v1533 = vsel %vm1532, %v1482, 0.0
        %s1534 = scalar_lea.vmem %s18, 128
        %v1535 = vld [vmem:[%s1534] sm:$0xff]
        %v1536 = vld [vmem:[%s1534 + $0x8] sm:$0xff]
        %v1537 = vld [vmem:[%s1534 + $0x10] sm:$0xff]
        %v1538 = vld [vmem:[%s1534 + $0x18] sm:$0xff]
        %v1539 = vld [vmem:[%s1534 + $0x20] sm:$0xff]
        %v1540 = vld [vmem:[%s1534 + $0x28] sm:$0xff]
        %v1541 = vld [vmem:[%s1534 + $0x30] sm:$0xff]
        %v1542 = vld [vmem:[%s1534 + $0x38] sm:$0xff]
        %v1543 = vld [vmem:[%s1534 + $0x40] sm:$0xff]
        %v1544 = vld [vmem:[%s1534 + $0x48] sm:$0xff]
        %v1545 = vld [vmem:[%s1534 + $0x50] sm:$0xff]
        %v1546 = vld [vmem:[%s1534 + $0x58] sm:$0xff]
        %v1547 = vld [vmem:[%s1534 + $0x60] sm:$0xff]
        %v1548 = vld [vmem:[%s1534 + $0x68] sm:$0xff]
        %v1549 = vld [vmem:[%s1534 + $0x70] sm:$0xff]
        %v1550 = vld [vmem:[%s1534 + $0x78] sm:$0xff]
        %v1551 = vld [vmem:[#allocation26] sm:$0xff]
        %v1552 = vld [vmem:[%s18] sm:$0xff]
        %v1553 = vld [vmem:[%s18 + $0x8] sm:$0xff]
        %v1554 = vld [vmem:[%s18 + $0x10] sm:$0xff]
        %v1555 = vld [vmem:[%s18 + $0x18] sm:$0xff]
        %v1556 = vld [vmem:[%s18 + $0x20] sm:$0xff]
        %v1557 = vld [vmem:[%s18 + $0x28] sm:$0xff]
        %v1558 = vld [vmem:[%s18 + $0x30] sm:$0xff]
        %v1559 = vld [vmem:[%s18 + $0x38] sm:$0xff]
        %v1560 = vld [vmem:[%s18 + $0x40] sm:$0xff]
        %v1561 = vld [vmem:[%s18 + $0x48] sm:$0xff]
        %v1562 = vld [vmem:[%s18 + $0x50] sm:$0xff]
        %v1563 = vld [vmem:[%s18 + $0x58] sm:$0xff]
        %v1564 = vld [vmem:[%s18 + $0x60] sm:$0xff]
        %v1565 = vld [vmem:[%s18 + $0x68] sm:$0xff]
        %v1566 = vld [vmem:[%s18 + $0x70] sm:$0xff]
        %v1567 = vld [vmem:[%s18 + $0x78] sm:$0xff]
        %1568 = vmatpush.msra.mxu0 %v1567
        %1569 = vmatpush.msra.mxu0 %v1566
        %1570 = vmatpush.msra.mxu0 %v1565
        %1571 = vmatpush.msra.mxu0 %v1564
        %1572 = vmatpush.msra.mxu0 %v1563
        %1573 = vmatpush.msra.mxu0 %v1562
        %1574 = vmatpush.msra.mxu0 %v1561
        %1575 = vmatpush.msra.mxu0 %v1560
        %1576 = vmatpush.msra.mxu0 %v1559
        %1577 = vmatpush.msra.mxu0 %v1558
        %1578 = vmatpush.msra.mxu0 %v1557
        %1579 = vmatpush.msra.mxu0 %v1556
        %1580 = vmatpush.msra.mxu0 %v1555
        %1581 = vmatpush.msra.mxu0 %v1554
        %1582 = vmatpush.msra.mxu0 %v1553
        %1583 = vmatpush.msra.mxu0 %v1552
        %1584 = vmatmul.f32.gmra.mxu0 %v1533
        %v1585 = vpop.f32.mrf.mxu0
        %v1586 = vadd.f32 0.0, %v1585
        %1587 = vdwg.mxu0
        %vm1588 = vcmask 64512
        %v1590 = vsel %vm1588, %v1551, 0
        %1592 = vmatpush.msra.mxu0 0.0
        %1593 = vmatpush.msra.mxu0 0.0
        %1594 = vmatpush.msra.mxu0 0.0
        %1595 = vmatpush.msra.mxu0 0.0
        %1596 = vmatpush.msra.mxu0 0.0
        %1597 = vmatpush.msra.mxu0 0.0
        %1598 = vmatpush.msra.mxu0 0.0
        %1599 = vmatpush.msra.mxu0 0.0
        %1600 = vmatpush.msra.mxu0 0.0
        %1601 = vmatpush.msra.mxu0 0.0
        %1602 = vmatpush.msra.mxu0 0.0
        %1603 = vmatpush.msra.mxu0 0.0
        %1604 = vmatpush.msra.mxu0 0.0
        %1605 = vmatpush.msra.mxu0 0.0
        %1606 = vmatpush.msra.mxu0 0.0
        %1607 = vmatpush.msra.mxu0 %v1586
        %1608 = vmatmul.f32.gmra.mxu0 %v1590
        %v1609 = vpop.f32.mrf.mxu0
        %v1610 = vadd.f32 0.0, %v1609
        %1611 = vdwg.mxu0
        %1612 = vmatpush.msra.mxu0 %v1550
        %1613 = vmatpush.msra.mxu0 %v1549
        %1614 = vmatpush.msra.mxu0 %v1548
        %1615 = vmatpush.msra.mxu0 %v1547
        %1616 = vmatpush.msra.mxu0 %v1546
        %1617 = vmatpush.msra.mxu0 %v1545
        %1618 = vmatpush.msra.mxu0 %v1544
        %1619 = vmatpush.msra.mxu0 %v1543
        %1620 = vmatpush.msra.mxu0 %v1542
        %1621 = vmatpush.msra.mxu0 %v1541
        %1622 = vmatpush.msra.mxu0 %v1540
        %1623 = vmatpush.msra.mxu0 %v1539
        %1624 = vmatpush.msra.mxu0 %v1538
        %1625 = vmatpush.msra.mxu0 %v1537
        %1626 = vmatpush.msra.mxu0 %v1536
        %1627 = vmatpush.msra.mxu0 %v1535
        %1628 = vmatmul.f32.gmra.mxu0 %v1533
        %v1629 = vpop.f32.mrf.mxu0
        %v1630 = vadd.f32 %v1610, %v1629
        %1631 = vdwg.mxu0
        %s1632 = scalar_lea.vmem [#allocation26], 8
        %v1633 = vld [vmem:[%s1632] sm:$0xff]
        %s1634 = scalar_lea.vmem %s18, 256
        %v1635 = vld [vmem:[%s1634] sm:$0xff]
        %v1636 = vld [vmem:[%s1634 + $0x8] sm:$0xff]
        %v1637 = vld [vmem:[%s1634 + $0x10] sm:$0xff]
        %v1638 = vld [vmem:[%s1634 + $0x18] sm:$0xff]
        %v1639 = vld [vmem:[%s1634 + $0x20] sm:$0xff]
        %v1640 = vld [vmem:[%s1634 + $0x28] sm:$0xff]
        %v1641 = vld [vmem:[%s1634 + $0x30] sm:$0xff]
        %v1642 = vld [vmem:[%s1634 + $0x38] sm:$0xff]
        %v1643 = vld [vmem:[%s1634 + $0x40] sm:$0xff]
        %v1644 = vld [vmem:[%s1634 + $0x48] sm:$0xff]
        %v1645 = vld [vmem:[%s1634 + $0x50] sm:$0xff]
        %v1646 = vld [vmem:[%s1634 + $0x58] sm:$0xff]
        %v1647 = vld [vmem:[%s1634 + $0x60] sm:$0xff]
        %v1648 = vld [vmem:[%s1634 + $0x68] sm:$0xff]
        %v1649 = vld [vmem:[%s1634 + $0x70] sm:$0xff]
        %v1650 = vld [vmem:[%s1634 + $0x78] sm:$0xff]
        %1651 = vmatpush.msra.mxu0 %v1650
        %1652 = vmatpush.msra.mxu0 %v1649
        %1653 = vmatpush.msra.mxu0 %v1648
        %1654 = vmatpush.msra.mxu0 %v1647
        %1655 = vmatpush.msra.mxu0 %v1646
        %1656 = vmatpush.msra.mxu0 %v1645
        %1657 = vmatpush.msra.mxu0 %v1644
        %1658 = vmatpush.msra.mxu0 %v1643
        %1659 = vmatpush.msra.mxu0 %v1642
        %1660 = vmatpush.msra.mxu0 %v1641
        %1661 = vmatpush.msra.mxu0 %v1640
        %1662 = vmatpush.msra.mxu0 %v1639
        %1663 = vmatpush.msra.mxu0 %v1638
        %1664 = vmatpush.msra.mxu0 %v1637
        %1665 = vmatpush.msra.mxu0 %v1636
        %1666 = vmatpush.msra.mxu0 %v1635
        %1667 = vmatmul.f32.gmra.mxu0 %v1533
        %v1668 = vpop.f32.mrf.mxu0
        %v1669 = vadd.f32 0.0, %v1668
        %1670 = vdwg.mxu0
        %v1672 = vsel %vm1588, %v1633, 0
        %1674 = vmatpush.msra.mxu0 0.0
        %1675 = vmatpush.msra.mxu0 0.0
        %1676 = vmatpush.msra.mxu0 0.0
        %1677 = vmatpush.msra.mxu0 0.0
        %1678 = vmatpush.msra.mxu0 0.0
        %1679 = vmatpush.msra.mxu0 0.0
        %1680 = vmatpush.msra.mxu0 0.0
        %1681 = vmatpush.msra.mxu0 0.0
        %1682 = vmatpush.msra.mxu0 0.0
        %1683 = vmatpush.msra.mxu0 0.0
        %1684 = vmatpush.msra.mxu0 0.0
        %1685 = vmatpush.msra.mxu0 0.0
        %1686 = vmatpush.msra.mxu0 0.0
        %1687 = vmatpush.msra.mxu0 0.0
        %1688 = vmatpush.msra.mxu0 0.0
        %1689 = vmatpush.msra.mxu0 %v1669
        %1690 = vmatmul.f32.gmra.mxu0 %v1672
        %v1691 = vpop.f32.mrf.mxu0
        %v1692 = vadd.f32 0.0, %v1691
        %1693 = vdwg.mxu0
        %v1694 = vadd.f32 %v1630, %v1692
        %v1695 = vld [vmem:[%s7] sm:$0xff]
        %v1696 = vld [vmem:[%s7 + $0x8] sm:$0xff]
        %v1697 = vld [vmem:[#allocation13] sm:$0xff]
        %v1698 = vld [vmem:[#allocation13 + $0x8] sm:$0xff]
        %v1699 = vld [vmem:[#allocation13 + $0x10] sm:$0xff]
        %v1700 = vld [vmem:[#allocation13 + $0x18] sm:$0xff]
        %v1701 = vld [vmem:[#allocation13 + $0x20] sm:$0xff]
        %v1702 = vld [vmem:[#allocation13 + $0x28] sm:$0xff]
        %v1703 = vld [vmem:[#allocation13 + $0x30] sm:$0xff]
        %v1704 = vld [vmem:[#allocation13 + $0x38] sm:$0xff]
        %v1705 = vld [vmem:[#allocation13 + $0x40] sm:$0xff]
        %v1706 = vld [vmem:[#allocation13 + $0x48] sm:$0xff]
        %v1707 = vld [vmem:[#allocation13 + $0x50] sm:$0xff]
        %v1708 = vld [vmem:[#allocation13 + $0x58] sm:$0xff]
        %v1709 = vld [vmem:[#allocation13 + $0x60] sm:$0xff]
        %v1710 = vld [vmem:[#allocation13 + $0x68] sm:$0xff]
        %v1711 = vld [vmem:[#allocation13 + $0x70] sm:$0xff]
        %v1712 = vld [vmem:[#allocation13 + $0x78] sm:$0xff]
        %v1713 = vld [vmem:[#allocation13 + $0x80] sm:$0xff]
        %v1714 = vld [vmem:[#allocation13 + $0x88] sm:$0xff]
        %v1715 = vld [vmem:[#allocation13 + $0x90] sm:$0xff]
        %v1716 = vld [vmem:[#allocation13 + $0x98] sm:$0xff]
        %v1717 = vld [vmem:[#allocation13 + $0xa0] sm:$0xff]
        %v1718 = vld [vmem:[#allocation13 + $0xa8] sm:$0xff]
        %v1719 = vld [vmem:[#allocation13 + $0xb0] sm:$0xff]
        %v1720 = vld [vmem:[#allocation13 + $0xb8] sm:$0xff]
        %v1721 = vld [vmem:[#allocation13 + $0xc0] sm:$0xff]
        %v1722 = vld [vmem:[#allocation13 + $0xc8] sm:$0xff]
        %v1723 = vld [vmem:[#allocation13 + $0xd0] sm:$0xff]
        %v1724 = vld [vmem:[#allocation13 + $0xd8] sm:$0xff]
        %v1725 = vld [vmem:[#allocation13 + $0xe0] sm:$0xff]
        %v1726 = vld [vmem:[#allocation13 + $0xe8] sm:$0xff]
        %v1727 = vld [vmem:[#allocation13 + $0xf0] sm:$0xff]
        %v1728 = vld [vmem:[#allocation13 + $0xf8] sm:$0xff]
        %v1730 = vsel %vm1588, %v1695, 0
        %v1733 = vsel %vm1588, %v1696, 0
        %1735 = vmatpush.msra.mxu0 0.0
        %1736 = vmatpush.msra.mxu0 0.0
        %1737 = vmatpush.msra.mxu0 0.0
        %1738 = vmatpush.msra.mxu0 0.0
        %1739 = vmatpush.msra.mxu0 0.0
        %1740 = vmatpush.msra.mxu0 0.0
        %1741 = vmatpush.msra.mxu0 0.0
        %1742 = vmatpush.msra.mxu0 0.0
        %1743 = vmatpush.msra.mxu0 0.0
        %1744 = vmatpush.msra.mxu0 0.0
        %1745 = vmatpush.msra.mxu0 0.0
        %1746 = vmatpush.msra.mxu0 0.0
        %1747 = vmatpush.msra.mxu0 0.0
        %1748 = vmatpush.msra.mxu0 0.0
        %1749 = vmatpush.msra.mxu0 0.0
        %1750 = vmatpush.msra.mxu0 %v1694
        %1751 = vmatmul.f32.gmra.mxu0 %v1730
        %v1752 = vpop.f32.mrf.mxu0
        %v1753 = vadd.f32 0.0, %v1752
        %1754 = vmatmul.f32.gmra.mxu0 %v1733
        %v1755 = vpop.f32.mrf.mxu0
        %v1756 = vadd.f32 0.0, %v1755
        %1757 = vdwg.mxu0
        %1758 = vmatpush.msra.mxu0 %v1727
        %1759 = vmatpush.msra.mxu0 %v1725
        %1760 = vmatpush.msra.mxu0 %v1723
        %1761 = vmatpush.msra.mxu0 %v1721
        %1762 = vmatpush.msra.mxu0 %v1719
        %1763 = vmatpush.msra.mxu0 %v1717
        %1764 = vmatpush.msra.mxu0 %v1715
        %1765 = vmatpush.msra.mxu0 %v1713
        %1766 = vmatpush.msra.mxu0 %v1711
        %1767 = vmatpush.msra.mxu0 %v1709
        %1768 = vmatpush.msra.mxu0 %v1707
        %1769 = vmatpush.msra.mxu0 %v1705
        %1770 = vmatpush.msra.mxu0 %v1703
        %1771 = vmatpush.msra.mxu0 %v1701
        %1772 = vmatpush.msra.mxu0 %v1699
        %1773 = vmatpush.msra.mxu0 %v1697
        %1774 = vmatmul.f32.gmra.mxu0 %v1753
        %v1775 = vpop.f32.mrf.mxu0
        %v1776 = vadd.f32 0.0, %v1775
        %1777 = vmatmul.f32.gmra.mxu0 %v1756
        %v1778 = vpop.f32.mrf.mxu0
        %v1779 = vadd.f32 0.0, %v1778
        %1780 = vdwg.mxu0
        %1781 = vmatpush.msra.mxu0 %v1728
        %1782 = vmatpush.msra.mxu0 %v1726
        %1783 = vmatpush.msra.mxu0 %v1724
        %1784 = vmatpush.msra.mxu0 %v1722
        %1785 = vmatpush.msra.mxu0 %v1720
        %1786 = vmatpush.msra.mxu0 %v1718
        %1787 = vmatpush.msra.mxu0 %v1716
        %1788 = vmatpush.msra.mxu0 %v1714
        %1789 = vmatpush.msra.mxu0 %v1712
        %1790 = vmatpush.msra.mxu0 %v1710
        %1791 = vmatpush.msra.mxu0 %v1708
        %1792 = vmatpush.msra.mxu0 %v1706
        %1793 = vmatpush.msra.mxu0 %v1704
        %1794 = vmatpush.msra.mxu0 %v1702
        %1795 = vmatpush.msra.mxu0 %v1700
        %1796 = vmatpush.msra.mxu0 %v1698
        %1797 = vmatmul.f32.gmra.mxu0 %v1753
        %v1798 = vpop.f32.mrf.mxu0
        %v1799 = vadd.f32 0.0, %v1798
        %1800 = vmatmul.f32.gmra.mxu0 %v1756
        %v1801 = vpop.f32.mrf.mxu0
        %v1802 = vadd.f32 0.0, %v1801
        %1803 = vdwg.mxu0
        %v1804 = vld [vmem:[%s997] sm:$0xff]
        %1805 = vmatpush.msra.mxu0 0.0
        %1806 = vmatpush.msra.mxu0 0.0
        %1807 = vmatpush.msra.mxu0 0.0
        %1808 = vmatpush.msra.mxu0 0.0
        %1809 = vmatpush.msra.mxu0 0.0
        %1810 = vmatpush.msra.mxu0 0.0
        %1811 = vmatpush.msra.mxu0 0.0
        %1812 = vmatpush.msra.mxu0 0.0
        %1813 = vmatpush.msra.mxu0 0.0
        %1814 = vmatpush.msra.mxu0 0.0
        %1815 = vmatpush.msra.mxu0 0.0
        %1816 = vmatpush.msra.mxu0 0.0
        %1817 = vmatpush.msra.mxu0 0.0
        %1818 = vmatpush.msra.mxu0 0.0
        %1819 = vmatpush.msra.mxu0 0.0
        %1820 = vmatpush.msra.mxu0 %v1804
        %1821 = vmatmul.f32.gmra.mxu0 %v1730
        %v1822 = vpop.f32.mrf.mxu0
        %v1823 = vadd.f32 0.0, %v1822
        %1824 = vmatmul.f32.gmra.mxu0 %v1733
        %v1825 = vpop.f32.mrf.mxu0
        %v1826 = vadd.f32 0.0, %v1825
        %1827 = vdwg.mxu0
        %1828 = vmatpush.msra.mxu0 %v1727
        %1829 = vmatpush.msra.mxu0 %v1725
        %1830 = vmatpush.msra.mxu0 %v1723
        %1831 = vmatpush.msra.mxu0 %v1721
        %1832 = vmatpush.msra.mxu0 %v1719
        %1833 = vmatpush.msra.mxu0 %v1717
        %1834 = vmatpush.msra.mxu0 %v1715
        %1835 = vmatpush.msra.mxu0 %v1713
        %1836 = vmatpush.msra.mxu0 %v1711
        %1837 = vmatpush.msra.mxu0 %v1709
        %1838 = vmatpush.msra.mxu0 %v1707
        %1839 = vmatpush.msra.mxu0 %v1705
        %1840 = vmatpush.msra.mxu0 %v1703
        %1841 = vmatpush.msra.mxu0 %v1701
        %1842 = vmatpush.msra.mxu0 %v1699
        %1843 = vmatpush.msra.mxu0 %v1697
        %1844 = vmatmul.f32.gmra.mxu0 %v1823
        %v1845 = vpop.f32.mrf.mxu0
        %v1846 = vadd.f32 0.0, %v1845
        %1847 = vmatmul.f32.gmra.mxu0 %v1826
        %v1848 = vpop.f32.mrf.mxu0
        %v1849 = vadd.f32 0.0, %v1848
        %1850 = vdwg.mxu0
        %1851 = vmatpush.msra.mxu0 %v1728
        %1852 = vmatpush.msra.mxu0 %v1726
        %1853 = vmatpush.msra.mxu0 %v1724
        %1854 = vmatpush.msra.mxu0 %v1722
        %1855 = vmatpush.msra.mxu0 %v1720
        %1856 = vmatpush.msra.mxu0 %v1718
        %1857 = vmatpush.msra.mxu0 %v1716
        %1858 = vmatpush.msra.mxu0 %v1714
        %1859 = vmatpush.msra.mxu0 %v1712
        %1860 = vmatpush.msra.mxu0 %v1710
        %1861 = vmatpush.msra.mxu0 %v1708
        %1862 = vmatpush.msra.mxu0 %v1706
        %1863 = vmatpush.msra.mxu0 %v1704
        %1864 = vmatpush.msra.mxu0 %v1702
        %1865 = vmatpush.msra.mxu0 %v1700
        %1866 = vmatpush.msra.mxu0 %v1698
        %1867 = vmatmul.f32.gmra.mxu0 %v1823
        %v1868 = vpop.f32.mrf.mxu0
        %v1869 = vadd.f32 0.0, %v1868
        %1870 = vmatmul.f32.gmra.mxu0 %v1826
        %v1871 = vpop.f32.mrf.mxu0
        %v1872 = vadd.f32 0.0, %v1871
        %1873 = vdwg.mxu0
        %v1874 = vld [vmem:[#allocation19] sm:$0xff]
        %v1875 = vld [vmem:[#allocation19 + $0x8] sm:$0xff]
        %v1876 = vld [vmem:[#allocation19 + $0x10] sm:$0xff]
        %v1877 = vld [vmem:[#allocation19 + $0x18] sm:$0xff]
        %vm1878 = vcmp.eq.f32.partialorder %v1846, %v1874
        %vm1879 = vcmp.eq.f32.partialorder %v1869, %v1875
        %vm1880 = vcmp.eq.f32.partialorder %v1849, %v1876
        %vm1881 = vcmp.eq.f32.partialorder %v1872, %v1877
        %v1882 = vsel %vm1878, %v1776, 0.0
        %v1883 = vsel %vm1879, %v1799, 0.0
        %v1884 = vsel %vm1880, %v1779, 0.0
        %v1885 = vsel %vm1881, %v1802, 0.0
        %s1886 = scalar_lea.vmem [#allocation23], 512
        %v1887 = vld [vmem:[%s1886] sm:$0xff]
        %v1888 = vld [vmem:[%s1886 + $0x8] sm:$0xff]
        %v1889 = vld [vmem:[%s1886 + $0x10] sm:$0xff]
        %v1890 = vld [vmem:[%s1886 + $0x18] sm:$0xff]
        %v1891 = vld [vmem:[%s1886 + $0x20] sm:$0xff]
        %v1892 = vld [vmem:[%s1886 + $0x28] sm:$0xff]
        %v1893 = vld [vmem:[%s1886 + $0x30] sm:$0xff]
        %v1894 = vld [vmem:[%s1886 + $0x38] sm:$0xff]
        %v1895 = vld [vmem:[%s1886 + $0x40] sm:$0xff]
        %v1896 = vld [vmem:[%s1886 + $0x48] sm:$0xff]
        %v1897 = vld [vmem:[%s1886 + $0x50] sm:$0xff]
        %v1898 = vld [vmem:[%s1886 + $0x58] sm:$0xff]
        %v1899 = vld [vmem:[%s1886 + $0x60] sm:$0xff]
        %v1900 = vld [vmem:[%s1886 + $0x68] sm:$0xff]
        %v1901 = vld [vmem:[%s1886 + $0x70] sm:$0xff]
        %v1902 = vld [vmem:[%s1886 + $0x78] sm:$0xff]
        %v1903 = vld [vmem:[%s1886 + $0x80] sm:$0xff]
        %v1904 = vld [vmem:[%s1886 + $0x88] sm:$0xff]
        %v1905 = vld [vmem:[%s1886 + $0x90] sm:$0xff]
        %v1906 = vld [vmem:[%s1886 + $0x98] sm:$0xff]
        %v1907 = vld [vmem:[%s1886 + $0xa0] sm:$0xff]
        %v1908 = vld [vmem:[%s1886 + $0xa8] sm:$0xff]
        %v1909 = vld [vmem:[%s1886 + $0xb0] sm:$0xff]
        %v1910 = vld [vmem:[%s1886 + $0xb8] sm:$0xff]
        %v1911 = vld [vmem:[%s1886 + $0xc0] sm:$0xff]
        %v1912 = vld [vmem:[%s1886 + $0xc8] sm:$0xff]
        %v1913 = vld [vmem:[%s1886 + $0xd0] sm:$0xff]
        %v1914 = vld [vmem:[%s1886 + $0xd8] sm:$0xff]
        %v1915 = vld [vmem:[%s1886 + $0xe0] sm:$0xff]
        %v1916 = vld [vmem:[%s1886 + $0xe8] sm:$0xff]
        %v1917 = vld [vmem:[%s1886 + $0xf0] sm:$0xff]
        %v1918 = vld [vmem:[%s1886 + $0xf8] sm:$0xff]
        %v1919 = vld [vmem:[%s1886 + $0x100] sm:$0xff]
        %v1920 = vld [vmem:[%s1886 + $0x108] sm:$0xff]
        %v1921 = vld [vmem:[%s1886 + $0x110] sm:$0xff]
        %v1922 = vld [vmem:[%s1886 + $0x118] sm:$0xff]
        %v1923 = vld [vmem:[%s1886 + $0x120] sm:$0xff]
        %v1924 = vld [vmem:[%s1886 + $0x128] sm:$0xff]
        %v1925 = vld [vmem:[%s1886 + $0x130] sm:$0xff]
        %v1926 = vld [vmem:[%s1886 + $0x138] sm:$0xff]
        %v1927 = vld [vmem:[%s1886 + $0x140] sm:$0xff]
        %v1928 = vld [vmem:[%s1886 + $0x148] sm:$0xff]
        %v1929 = vld [vmem:[%s1886 + $0x150] sm:$0xff]
        %v1930 = vld [vmem:[%s1886 + $0x158] sm:$0xff]
        %v1931 = vld [vmem:[%s1886 + $0x160] sm:$0xff]
        %v1932 = vld [vmem:[%s1886 + $0x168] sm:$0xff]
        %v1933 = vld [vmem:[%s1886 + $0x170] sm:$0xff]
        %v1934 = vld [vmem:[%s1886 + $0x178] sm:$0xff]
        %v1935 = vld [vmem:[%s1886 + $0x180] sm:$0xff]
        %v1936 = vld [vmem:[%s1886 + $0x188] sm:$0xff]
        %v1937 = vld [vmem:[%s1886 + $0x190] sm:$0xff]
        %v1938 = vld [vmem:[%s1886 + $0x198] sm:$0xff]
        %v1939 = vld [vmem:[%s1886 + $0x1a0] sm:$0xff]
        %v1940 = vld [vmem:[%s1886 + $0x1a8] sm:$0xff]
        %v1941 = vld [vmem:[%s1886 + $0x1b0] sm:$0xff]
        %v1942 = vld [vmem:[%s1886 + $0x1b8] sm:$0xff]
        %v1943 = vld [vmem:[%s1886 + $0x1c0] sm:$0xff]
        %v1944 = vld [vmem:[%s1886 + $0x1c8] sm:$0xff]
        %v1945 = vld [vmem:[%s1886 + $0x1d0] sm:$0xff]
        %v1946 = vld [vmem:[%s1886 + $0x1d8] sm:$0xff]
        %v1947 = vld [vmem:[%s1886 + $0x1e0] sm:$0xff]
        %v1948 = vld [vmem:[%s1886 + $0x1e8] sm:$0xff]
        %v1949 = vld [vmem:[%s1886 + $0x1f0] sm:$0xff]
        %v1950 = vld [vmem:[%s1886 + $0x1f8] sm:$0xff]
        %v1951 = vld [vmem:[#allocation28] sm:$0xff]
        %v1952 = vld [vmem:[#allocation28 + $0x8] sm:$0xff]
        %v1953 = vld [vmem:[#allocation23] sm:$0xff]
        %v1954 = vld [vmem:[#allocation23 + $0x8] sm:$0xff]
        %v1955 = vld [vmem:[#allocation23 + $0x10] sm:$0xff]
        %v1956 = vld [vmem:[#allocation23 + $0x18] sm:$0xff]
        %v1957 = vld [vmem:[#allocation23 + $0x20] sm:$0xff]
        %v1958 = vld [vmem:[#allocation23 + $0x28] sm:$0xff]
        %v1959 = vld [vmem:[#allocation23 + $0x30] sm:$0xff]
        %v1960 = vld [vmem:[#allocation23 + $0x38] sm:$0xff]
        %v1961 = vld [vmem:[#allocation23 + $0x40] sm:$0xff]
        %v1962 = vld [vmem:[#allocation23 + $0x48] sm:$0xff]
        %v1963 = vld [vmem:[#allocation23 + $0x50] sm:$0xff]
        %v1964 = vld [vmem:[#allocation23 + $0x58] sm:$0xff]
        %v1965 = vld [vmem:[#allocation23 + $0x60] sm:$0xff]
        %v1966 = vld [vmem:[#allocation23 + $0x68] sm:$0xff]
        %v1967 = vld [vmem:[#allocation23 + $0x70] sm:$0xff]
        %v1968 = vld [vmem:[#allocation23 + $0x78] sm:$0xff]
        %v1969 = vld [vmem:[#allocation23 + $0x80] sm:$0xff]
        %v1970 = vld [vmem:[#allocation23 + $0x88] sm:$0xff]
        %v1971 = vld [vmem:[#allocation23 + $0x90] sm:$0xff]
        %v1972 = vld [vmem:[#allocation23 + $0x98] sm:$0xff]
        %v1973 = vld [vmem:[#allocation23 + $0xa0] sm:$0xff]
        %v1974 = vld [vmem:[#allocation23 + $0xa8] sm:$0xff]
        %v1975 = vld [vmem:[#allocation23 + $0xb0] sm:$0xff]
        %v1976 = vld [vmem:[#allocation23 + $0xb8] sm:$0xff]
        %v1977 = vld [vmem:[#allocation23 + $0xc0] sm:$0xff]
        %v1978 = vld [vmem:[#allocation23 + $0xc8] sm:$0xff]
        %v1979 = vld [vmem:[#allocation23 + $0xd0] sm:$0xff]
        %v1980 = vld [vmem:[#allocation23 + $0xd8] sm:$0xff]
        %v1981 = vld [vmem:[#allocation23 + $0xe0] sm:$0xff]
        %v1982 = vld [vmem:[#allocation23 + $0xe8] sm:$0xff]
        %v1983 = vld [vmem:[#allocation23 + $0xf0] sm:$0xff]
        %v1984 = vld [vmem:[#allocation23 + $0xf8] sm:$0xff]
        %v1985 = vld [vmem:[#allocation23 + $0x100] sm:$0xff]
        %v1986 = vld [vmem:[#allocation23 + $0x108] sm:$0xff]
        %v1987 = vld [vmem:[#allocation23 + $0x110] sm:$0xff]
        %v1988 = vld [vmem:[#allocation23 + $0x118] sm:$0xff]
        %v1989 = vld [vmem:[#allocation23 + $0x120] sm:$0xff]
        %v1990 = vld [vmem:[#allocation23 + $0x128] sm:$0xff]
        %v1991 = vld [vmem:[#allocation23 + $0x130] sm:$0xff]
        %v1992 = vld [vmem:[#allocation23 + $0x138] sm:$0xff]
        %v1993 = vld [vmem:[#allocation23 + $0x140] sm:$0xff]
        %v1994 = vld [vmem:[#allocation23 + $0x148] sm:$0xff]
        %v1995 = vld [vmem:[#allocation23 + $0x150] sm:$0xff]
        %v1996 = vld [vmem:[#allocation23 + $0x158] sm:$0xff]
        %v1997 = vld [vmem:[#allocation23 + $0x160] sm:$0xff]
        %v1998 = vld [vmem:[#allocation23 + $0x168] sm:$0xff]
        %v1999 = vld [vmem:[#allocation23 + $0x170] sm:$0xff]
        %v2000 = vld [vmem:[#allocation23 + $0x178] sm:$0xff]
        %v2001 = vld [vmem:[#allocation23 + $0x180] sm:$0xff]
        %v2002 = vld [vmem:[#allocation23 + $0x188] sm:$0xff]
        %v2003 = vld [vmem:[#allocation23 + $0x190] sm:$0xff]
        %v2004 = vld [vmem:[#allocation23 + $0x198] sm:$0xff]
        %v2005 = vld [vmem:[#allocation23 + $0x1a0] sm:$0xff]
        %v2006 = vld [vmem:[#allocation23 + $0x1a8] sm:$0xff]
        %v2007 = vld [vmem:[#allocation23 + $0x1b0] sm:$0xff]
        %v2008 = vld [vmem:[#allocation23 + $0x1b8] sm:$0xff]
        %v2009 = vld [vmem:[#allocation23 + $0x1c0] sm:$0xff]
        %v2010 = vld [vmem:[#allocation23 + $0x1c8] sm:$0xff]
        %v2011 = vld [vmem:[#allocation23 + $0x1d0] sm:$0xff]
        %v2012 = vld [vmem:[#allocation23 + $0x1d8] sm:$0xff]
        %v2013 = vld [vmem:[#allocation23 + $0x1e0] sm:$0xff]
        %v2014 = vld [vmem:[#allocation23 + $0x1e8] sm:$0xff]
        %v2015 = vld [vmem:[#allocation23 + $0x1f0] sm:$0xff]
        %v2016 = vld [vmem:[#allocation23 + $0x1f8] sm:$0xff]
        %2017 = vmatpush.msra.mxu0 %v1983
        %2018 = vmatpush.msra.mxu0 %v1981
        %2019 = vmatpush.msra.mxu0 %v1979
        %2020 = vmatpush.msra.mxu0 %v1977
        %2021 = vmatpush.msra.mxu0 %v1975
        %2022 = vmatpush.msra.mxu0 %v1973
        %2023 = vmatpush.msra.mxu0 %v1971
        %2024 = vmatpush.msra.mxu0 %v1969
        %2025 = vmatpush.msra.mxu0 %v1967
        %2026 = vmatpush.msra.mxu0 %v1965
        %2027 = vmatpush.msra.mxu0 %v1963
        %2028 = vmatpush.msra.mxu0 %v1961
        %2029 = vmatpush.msra.mxu0 %v1959
        %2030 = vmatpush.msra.mxu0 %v1957
        %2031 = vmatpush.msra.mxu0 %v1955
        %2032 = vmatpush.msra.mxu0 %v1953
        %2033 = vmatmul.f32.gmra.mxu0 %v1882
        %v2034 = vpop.f32.mrf.mxu0
        %v2035 = vadd.f32 0.0, %v2034
        %2036 = vmatmul.f32.gmra.mxu0 %v1884
        %v2037 = vpop.f32.mrf.mxu0
        %v2038 = vadd.f32 0.0, %v2037
        %2039 = vdwg.mxu0
        %2040 = vmatpush.msra.mxu0 %v2015
        %2041 = vmatpush.msra.mxu0 %v2013
        %2042 = vmatpush.msra.mxu0 %v2011
        %2043 = vmatpush.msra.mxu0 %v2009
        %2044 = vmatpush.msra.mxu0 %v2007
        %2045 = vmatpush.msra.mxu0 %v2005
        %2046 = vmatpush.msra.mxu0 %v2003
        %2047 = vmatpush.msra.mxu0 %v2001
        %2048 = vmatpush.msra.mxu0 %v1999
        %2049 = vmatpush.msra.mxu0 %v1997
        %2050 = vmatpush.msra.mxu0 %v1995
        %2051 = vmatpush.msra.mxu0 %v1993
        %2052 = vmatpush.msra.mxu0 %v1991
        %2053 = vmatpush.msra.mxu0 %v1989
        %2054 = vmatpush.msra.mxu0 %v1987
        %2055 = vmatpush.msra.mxu0 %v1985
        %2056 = vmatmul.f32.gmra.mxu0 %v1883
        %v2057 = vpop.f32.mrf.mxu0
        %v2058 = vadd.f32 %v2035, %v2057
        %2059 = vmatmul.f32.gmra.mxu0 %v1885
        %v2060 = vpop.f32.mrf.mxu0
        %v2061 = vadd.f32 %v2038, %v2060
        %2062 = vdwg.mxu0
        %2063 = vmatpush.msra.mxu0 %v1984
        %2064 = vmatpush.msra.mxu0 %v1982
        %2065 = vmatpush.msra.mxu0 %v1980
        %2066 = vmatpush.msra.mxu0 %v1978
        %2067 = vmatpush.msra.mxu0 %v1976
        %2068 = vmatpush.msra.mxu0 %v1974
        %2069 = vmatpush.msra.mxu0 %v1972
        %2070 = vmatpush.msra.mxu0 %v1970
        %2071 = vmatpush.msra.mxu0 %v1968
        %2072 = vmatpush.msra.mxu0 %v1966
        %2073 = vmatpush.msra.mxu0 %v1964
        %2074 = vmatpush.msra.mxu0 %v1962
        %2075 = vmatpush.msra.mxu0 %v1960
        %2076 = vmatpush.msra.mxu0 %v1958
        %2077 = vmatpush.msra.mxu0 %v1956
        %2078 = vmatpush.msra.mxu0 %v1954
        %2079 = vmatmul.f32.gmra.mxu0 %v1882
        %v2080 = vpop.f32.mrf.mxu0
        %v2081 = vadd.f32 0.0, %v2080
        %2082 = vmatmul.f32.gmra.mxu0 %v1884
        %v2083 = vpop.f32.mrf.mxu0
        %v2084 = vadd.f32 0.0, %v2083
        %2085 = vdwg.mxu0
        %2086 = vmatpush.msra.mxu0 %v2016
        %2087 = vmatpush.msra.mxu0 %v2014
        %2088 = vmatpush.msra.mxu0 %v2012
        %2089 = vmatpush.msra.mxu0 %v2010
        %2090 = vmatpush.msra.mxu0 %v2008
        %2091 = vmatpush.msra.mxu0 %v2006
        %2092 = vmatpush.msra.mxu0 %v2004
        %2093 = vmatpush.msra.mxu0 %v2002
        %2094 = vmatpush.msra.mxu0 %v2000
        %2095 = vmatpush.msra.mxu0 %v1998
        %2096 = vmatpush.msra.mxu0 %v1996
        %2097 = vmatpush.msra.mxu0 %v1994
        %2098 = vmatpush.msra.mxu0 %v1992
        %2099 = vmatpush.msra.mxu0 %v1990
        %2100 = vmatpush.msra.mxu0 %v1988
        %2101 = vmatpush.msra.mxu0 %v1986
        %2102 = vmatmul.f32.gmra.mxu0 %v1883
        %v2103 = vpop.f32.mrf.mxu0
        %v2104 = vadd.f32 %v2081, %v2103
        %2105 = vmatmul.f32.gmra.mxu0 %v1885
        %v2106 = vpop.f32.mrf.mxu0
        %v2107 = vadd.f32 %v2084, %v2106
        %2108 = vdwg.mxu0
        %vm2109 = vcmask 130048
        %v2111 = vsel %vm2109, %v1951, 0
        %v2114 = vsel %vm2109, %v1952, 0
        %2116 = vmatpush.msra.mxu0 0.0
        %2117 = vmatpush.msra.mxu0 0.0
        %2118 = vmatpush.msra.mxu0 0.0
        %2119 = vmatpush.msra.mxu0 0.0
        %2120 = vmatpush.msra.mxu0 0.0
        %2121 = vmatpush.msra.mxu0 0.0
        %2122 = vmatpush.msra.mxu0 0.0
        %2123 = vmatpush.msra.mxu0 0.0
        %2124 = vmatpush.msra.mxu0 0.0
        %2125 = vmatpush.msra.mxu0 0.0
        %2126 = vmatpush.msra.mxu0 0.0
        %2127 = vmatpush.msra.mxu0 0.0
        %2128 = vmatpush.msra.mxu0 0.0
        %2129 = vmatpush.msra.mxu0 0.0
        %2130 = vmatpush.msra.mxu0 %v2061
        %2131 = vmatpush.msra.mxu0 %v2058
        %2132 = vmatmul.f32.gmra.mxu0 %v2111
        %v2133 = vpop.f32.mrf.mxu0
        %v2134 = vadd.f32 0.0, %v2133
        %2135 = vmatmul.f32.gmra.mxu0 %v2114
        %v2136 = vpop.f32.mrf.mxu0
        %v2137 = vadd.f32 0.0, %v2136
        %2138 = vdwg.mxu0
        %2139 = vmatpush.msra.mxu0 0.0
        %2140 = vmatpush.msra.mxu0 0.0
        %2141 = vmatpush.msra.mxu0 0.0
        %2142 = vmatpush.msra.mxu0 0.0
        %2143 = vmatpush.msra.mxu0 0.0
        %2144 = vmatpush.msra.mxu0 0.0
        %2145 = vmatpush.msra.mxu0 0.0
        %2146 = vmatpush.msra.mxu0 0.0
        %2147 = vmatpush.msra.mxu0 0.0
        %2148 = vmatpush.msra.mxu0 0.0
        %2149 = vmatpush.msra.mxu0 0.0
        %2150 = vmatpush.msra.mxu0 0.0
        %2151 = vmatpush.msra.mxu0 0.0
        %2152 = vmatpush.msra.mxu0 0.0
        %2153 = vmatpush.msra.mxu0 %v2107
        %2154 = vmatpush.msra.mxu0 %v2104
        %2155 = vmatmul.f32.gmra.mxu0 %v2111
        %v2156 = vpop.f32.mrf.mxu0
        %v2157 = vadd.f32 0.0, %v2156
        %2158 = vmatmul.f32.gmra.mxu0 %v2114
        %v2159 = vpop.f32.mrf.mxu0
        %v2160 = vadd.f32 0.0, %v2159
        %2161 = vdwg.mxu0
        %2162 = vmatpush.msra.mxu0 %v1917
        %2163 = vmatpush.msra.mxu0 %v1915
        %2164 = vmatpush.msra.mxu0 %v1913
        %2165 = vmatpush.msra.mxu0 %v1911
        %2166 = vmatpush.msra.mxu0 %v1909
        %2167 = vmatpush.msra.mxu0 %v1907
        %2168 = vmatpush.msra.mxu0 %v1905
        %2169 = vmatpush.msra.mxu0 %v1903
        %2170 = vmatpush.msra.mxu0 %v1901
        %2171 = vmatpush.msra.mxu0 %v1899
        %2172 = vmatpush.msra.mxu0 %v1897
        %2173 = vmatpush.msra.mxu0 %v1895
        %2174 = vmatpush.msra.mxu0 %v1893
        %2175 = vmatpush.msra.mxu0 %v1891
        %2176 = vmatpush.msra.mxu0 %v1889
        %2177 = vmatpush.msra.mxu0 %v1887
        %2178 = vmatmul.f32.gmra.mxu0 %v1882
        %v2179 = vpop.f32.mrf.mxu0
        %v2180 = vadd.f32 %v2134, %v2179
        %2181 = vmatmul.f32.gmra.mxu0 %v1884
        %v2182 = vpop.f32.mrf.mxu0
        %v2183 = vadd.f32 %v2137, %v2182
        %2184 = vdwg.mxu0
        %2185 = vmatpush.msra.mxu0 %v1949
        %2186 = vmatpush.msra.mxu0 %v1947
        %2187 = vmatpush.msra.mxu0 %v1945
        %2188 = vmatpush.msra.mxu0 %v1943
        %2189 = vmatpush.msra.mxu0 %v1941
        %2190 = vmatpush.msra.mxu0 %v1939
        %2191 = vmatpush.msra.mxu0 %v1937
        %2192 = vmatpush.msra.mxu0 %v1935
        %2193 = vmatpush.msra.mxu0 %v1933
        %2194 = vmatpush.msra.mxu0 %v1931
        %2195 = vmatpush.msra.mxu0 %v1929
        %2196 = vmatpush.msra.mxu0 %v1927
        %2197 = vmatpush.msra.mxu0 %v1925
        %2198 = vmatpush.msra.mxu0 %v1923
        %2199 = vmatpush.msra.mxu0 %v1921
        %2200 = vmatpush.msra.mxu0 %v1919
        %2201 = vmatmul.f32.gmra.mxu0 %v1883
        %v2202 = vpop.f32.mrf.mxu0
        %v2203 = vadd.f32 %v2180, %v2202
        %2204 = vmatmul.f32.gmra.mxu0 %v1885
        %v2205 = vpop.f32.mrf.mxu0
        %v2206 = vadd.f32 %v2183, %v2205
        %2207 = vdwg.mxu0
        %2208 = vmatpush.msra.mxu0 %v1918
        %2209 = vmatpush.msra.mxu0 %v1916
        %2210 = vmatpush.msra.mxu0 %v1914
        %2211 = vmatpush.msra.mxu0 %v1912
        %2212 = vmatpush.msra.mxu0 %v1910
        %2213 = vmatpush.msra.mxu0 %v1908
        %2214 = vmatpush.msra.mxu0 %v1906
        %2215 = vmatpush.msra.mxu0 %v1904
        %2216 = vmatpush.msra.mxu0 %v1902
        %2217 = vmatpush.msra.mxu0 %v1900
        %2218 = vmatpush.msra.mxu0 %v1898
        %2219 = vmatpush.msra.mxu0 %v1896
        %2220 = vmatpush.msra.mxu0 %v1894
        %2221 = vmatpush.msra.mxu0 %v1892
        %2222 = vmatpush.msra.mxu0 %v1890
        %2223 = vmatpush.msra.mxu0 %v1888
        %2224 = vmatmul.f32.gmra.mxu0 %v1882
        %v2225 = vpop.f32.mrf.mxu0
        %v2226 = vadd.f32 %v2157, %v2225
        %2227 = vmatmul.f32.gmra.mxu0 %v1884
        %v2228 = vpop.f32.mrf.mxu0
        %v2229 = vadd.f32 %v2160, %v2228
        %2230 = vdwg.mxu0
        %2231 = vmatpush.msra.mxu0 %v1950
        %2232 = vmatpush.msra.mxu0 %v1948
        %2233 = vmatpush.msra.mxu0 %v1946
        %2234 = vmatpush.msra.mxu0 %v1944
        %2235 = vmatpush.msra.mxu0 %v1942
        %2236 = vmatpush.msra.mxu0 %v1940
        %2237 = vmatpush.msra.mxu0 %v1938
        %2238 = vmatpush.msra.mxu0 %v1936
        %2239 = vmatpush.msra.mxu0 %v1934
        %2240 = vmatpush.msra.mxu0 %v1932
        %2241 = vmatpush.msra.mxu0 %v1930
        %2242 = vmatpush.msra.mxu0 %v1928
        %2243 = vmatpush.msra.mxu0 %v1926
        %2244 = vmatpush.msra.mxu0 %v1924
        %2245 = vmatpush.msra.mxu0 %v1922
        %2246 = vmatpush.msra.mxu0 %v1920
        %2247 = vmatmul.f32.gmra.mxu0 %v1883
        %v2248 = vpop.f32.mrf.mxu0
        %v2249 = vadd.f32 %v2226, %v2248
        %2250 = vmatmul.f32.gmra.mxu0 %v1885
        %v2251 = vpop.f32.mrf.mxu0
        %v2252 = vadd.f32 %v2229, %v2251
        %2253 = vdwg.mxu0
        %s2254 = scalar_lea.vmem [#allocation28], 16
        %v2255 = vld [vmem:[%s2254] sm:$0xff]
        %v2256 = vld [vmem:[%s2254 + $0x8] sm:$0xff]
        %s2257 = scalar_lea.vmem [#allocation23], 1024
        %v2258 = vld [vmem:[%s2257] sm:$0xff]
        %v2259 = vld [vmem:[%s2257 + $0x8] sm:$0xff]
        %v2260 = vld [vmem:[%s2257 + $0x10] sm:$0xff]
        %v2261 = vld [vmem:[%s2257 + $0x18] sm:$0xff]
        %v2262 = vld [vmem:[%s2257 + $0x20] sm:$0xff]
        %v2263 = vld [vmem:[%s2257 + $0x28] sm:$0xff]
        %v2264 = vld [vmem:[%s2257 + $0x30] sm:$0xff]
        %v2265 = vld [vmem:[%s2257 + $0x38] sm:$0xff]
        %v2266 = vld [vmem:[%s2257 + $0x40] sm:$0xff]
        %v2267 = vld [vmem:[%s2257 + $0x48] sm:$0xff]
        %v2268 = vld [vmem:[%s2257 + $0x50] sm:$0xff]
        %v2269 = vld [vmem:[%s2257 + $0x58] sm:$0xff]
        %v2270 = vld [vmem:[%s2257 + $0x60] sm:$0xff]
        %v2271 = vld [vmem:[%s2257 + $0x68] sm:$0xff]
        %v2272 = vld [vmem:[%s2257 + $0x70] sm:$0xff]
        %v2273 = vld [vmem:[%s2257 + $0x78] sm:$0xff]
        %v2274 = vld [vmem:[%s2257 + $0x80] sm:$0xff]
        %v2275 = vld [vmem:[%s2257 + $0x88] sm:$0xff]
        %v2276 = vld [vmem:[%s2257 + $0x90] sm:$0xff]
        %v2277 = vld [vmem:[%s2257 + $0x98] sm:$0xff]
        %v2278 = vld [vmem:[%s2257 + $0xa0] sm:$0xff]
        %v2279 = vld [vmem:[%s2257 + $0xa8] sm:$0xff]
        %v2280 = vld [vmem:[%s2257 + $0xb0] sm:$0xff]
        %v2281 = vld [vmem:[%s2257 + $0xb8] sm:$0xff]
        %v2282 = vld [vmem:[%s2257 + $0xc0] sm:$0xff]
        %v2283 = vld [vmem:[%s2257 + $0xc8] sm:$0xff]
        %v2284 = vld [vmem:[%s2257 + $0xd0] sm:$0xff]
        %v2285 = vld [vmem:[%s2257 + $0xd8] sm:$0xff]
        %v2286 = vld [vmem:[%s2257 + $0xe0] sm:$0xff]
        %v2287 = vld [vmem:[%s2257 + $0xe8] sm:$0xff]
        %v2288 = vld [vmem:[%s2257 + $0xf0] sm:$0xff]
        %v2289 = vld [vmem:[%s2257 + $0xf8] sm:$0xff]
        %v2290 = vld [vmem:[%s2257 + $0x100] sm:$0xff]
        %v2291 = vld [vmem:[%s2257 + $0x108] sm:$0xff]
        %v2292 = vld [vmem:[%s2257 + $0x110] sm:$0xff]
        %v2293 = vld [vmem:[%s2257 + $0x118] sm:$0xff]
        %v2294 = vld [vmem:[%s2257 + $0x120] sm:$0xff]
        %v2295 = vld [vmem:[%s2257 + $0x128] sm:$0xff]
        %v2296 = vld [vmem:[%s2257 + $0x130] sm:$0xff]
        %v2297 = vld [vmem:[%s2257 + $0x138] sm:$0xff]
        %v2298 = vld [vmem:[%s2257 + $0x140] sm:$0xff]
        %v2299 = vld [vmem:[%s2257 + $0x148] sm:$0xff]
        %v2300 = vld [vmem:[%s2257 + $0x150] sm:$0xff]
        %v2301 = vld [vmem:[%s2257 + $0x158] sm:$0xff]
        %v2302 = vld [vmem:[%s2257 + $0x160] sm:$0xff]
        %v2303 = vld [vmem:[%s2257 + $0x168] sm:$0xff]
        %v2304 = vld [vmem:[%s2257 + $0x170] sm:$0xff]
        %v2305 = vld [vmem:[%s2257 + $0x178] sm:$0xff]
        %v2306 = vld [vmem:[%s2257 + $0x180] sm:$0xff]
        %v2307 = vld [vmem:[%s2257 + $0x188] sm:$0xff]
        %v2308 = vld [vmem:[%s2257 + $0x190] sm:$0xff]
        %v2309 = vld [vmem:[%s2257 + $0x198] sm:$0xff]
        %v2310 = vld [vmem:[%s2257 + $0x1a0] sm:$0xff]
        %v2311 = vld [vmem:[%s2257 + $0x1a8] sm:$0xff]
        %v2312 = vld [vmem:[%s2257 + $0x1b0] sm:$0xff]
        %v2313 = vld [vmem:[%s2257 + $0x1b8] sm:$0xff]
        %v2314 = vld [vmem:[%s2257 + $0x1c0] sm:$0xff]
        %v2315 = vld [vmem:[%s2257 + $0x1c8] sm:$0xff]
        %v2316 = vld [vmem:[%s2257 + $0x1d0] sm:$0xff]
        %v2317 = vld [vmem:[%s2257 + $0x1d8] sm:$0xff]
        %v2318 = vld [vmem:[%s2257 + $0x1e0] sm:$0xff]
        %v2319 = vld [vmem:[%s2257 + $0x1e8] sm:$0xff]
        %v2320 = vld [vmem:[%s2257 + $0x1f0] sm:$0xff]
        %v2321 = vld [vmem:[%s2257 + $0x1f8] sm:$0xff]
        %2322 = vmatpush.msra.mxu0 %v2288
        %2323 = vmatpush.msra.mxu0 %v2286
        %2324 = vmatpush.msra.mxu0 %v2284
        %2325 = vmatpush.msra.mxu0 %v2282
        %2326 = vmatpush.msra.mxu0 %v2280
        %2327 = vmatpush.msra.mxu0 %v2278
        %2328 = vmatpush.msra.mxu0 %v2276
        %2329 = vmatpush.msra.mxu0 %v2274
        %2330 = vmatpush.msra.mxu0 %v2272
        %2331 = vmatpush.msra.mxu0 %v2270
        %2332 = vmatpush.msra.mxu0 %v2268
        %2333 = vmatpush.msra.mxu0 %v2266
        %2334 = vmatpush.msra.mxu0 %v2264
        %2335 = vmatpush.msra.mxu0 %v2262
        %2336 = vmatpush.msra.mxu0 %v2260
        %2337 = vmatpush.msra.mxu0 %v2258
        %2338 = vmatmul.f32.gmra.mxu0 %v1882
        %v2339 = vpop.f32.mrf.mxu0
        %v2340 = vadd.f32 0.0, %v2339
        %2341 = vmatmul.f32.gmra.mxu0 %v1884
        %v2342 = vpop.f32.mrf.mxu0
        %v2343 = vadd.f32 0.0, %v2342
        %2344 = vdwg.mxu0
        %2345 = vmatpush.msra.mxu0 %v2320
        %2346 = vmatpush.msra.mxu0 %v2318
        %2347 = vmatpush.msra.mxu0 %v2316
        %2348 = vmatpush.msra.mxu0 %v2314
        %2349 = vmatpush.msra.mxu0 %v2312
        %2350 = vmatpush.msra.mxu0 %v2310
        %2351 = vmatpush.msra.mxu0 %v2308
        %2352 = vmatpush.msra.mxu0 %v2306
        %2353 = vmatpush.msra.mxu0 %v2304
        %2354 = vmatpush.msra.mxu0 %v2302
        %2355 = vmatpush.msra.mxu0 %v2300
        %2356 = vmatpush.msra.mxu0 %v2298
        %2357 = vmatpush.msra.mxu0 %v2296
        %2358 = vmatpush.msra.mxu0 %v2294
        %2359 = vmatpush.msra.mxu0 %v2292
        %2360 = vmatpush.msra.mxu0 %v2290
        %2361 = vmatmul.f32.gmra.mxu0 %v1883
        %v2362 = vpop.f32.mrf.mxu0
        %v2363 = vadd.f32 %v2340, %v2362
        %2364 = vmatmul.f32.gmra.mxu0 %v1885
        %v2365 = vpop.f32.mrf.mxu0
        %v2366 = vadd.f32 %v2343, %v2365
        %2367 = vdwg.mxu0
        %2368 = vmatpush.msra.mxu0 %v2289
        %2369 = vmatpush.msra.mxu0 %v2287
        %2370 = vmatpush.msra.mxu0 %v2285
        %2371 = vmatpush.msra.mxu0 %v2283
        %2372 = vmatpush.msra.mxu0 %v2281
        %2373 = vmatpush.msra.mxu0 %v2279
        %2374 = vmatpush.msra.mxu0 %v2277
        %2375 = vmatpush.msra.mxu0 %v2275
        %2376 = vmatpush.msra.mxu0 %v2273
        %2377 = vmatpush.msra.mxu0 %v2271
        %2378 = vmatpush.msra.mxu0 %v2269
        %2379 = vmatpush.msra.mxu0 %v2267
        %2380 = vmatpush.msra.mxu0 %v2265
        %2381 = vmatpush.msra.mxu0 %v2263
        %2382 = vmatpush.msra.mxu0 %v2261
        %2383 = vmatpush.msra.mxu0 %v2259
        %2384 = vmatmul.f32.gmra.mxu0 %v1882
        %v2385 = vpop.f32.mrf.mxu0
        %v2386 = vadd.f32 0.0, %v2385
        %2387 = vmatmul.f32.gmra.mxu0 %v1884
        %v2388 = vpop.f32.mrf.mxu0
        %v2389 = vadd.f32 0.0, %v2388
        %2390 = vdwg.mxu0
        %2391 = vmatpush.msra.mxu0 %v2321
        %2392 = vmatpush.msra.mxu0 %v2319
        %2393 = vmatpush.msra.mxu0 %v2317
        %2394 = vmatpush.msra.mxu0 %v2315
        %2395 = vmatpush.msra.mxu0 %v2313
        %2396 = vmatpush.msra.mxu0 %v2311
        %2397 = vmatpush.msra.mxu0 %v2309
        %2398 = vmatpush.msra.mxu0 %v2307
        %2399 = vmatpush.msra.mxu0 %v2305
        %2400 = vmatpush.msra.mxu0 %v2303
        %2401 = vmatpush.msra.mxu0 %v2301
        %2402 = vmatpush.msra.mxu0 %v2299
        %2403 = vmatpush.msra.mxu0 %v2297
        %2404 = vmatpush.msra.mxu0 %v2295
        %2405 = vmatpush.msra.mxu0 %v2293
        %2406 = vmatpush.msra.mxu0 %v2291
        %2407 = vmatmul.f32.gmra.mxu0 %v1883
        %v2408 = vpop.f32.mrf.mxu0
        %v2409 = vadd.f32 %v2386, %v2408
        %2410 = vmatmul.f32.gmra.mxu0 %v1885
        %v2411 = vpop.f32.mrf.mxu0
        %v2412 = vadd.f32 %v2389, %v2411
        %2413 = vdwg.mxu0
        %v2415 = vsel %vm2109, %v2255, 0
        %v2418 = vsel %vm2109, %v2256, 0
        %2420 = vmatpush.msra.mxu0 0.0
        %2421 = vmatpush.msra.mxu0 0.0
        %2422 = vmatpush.msra.mxu0 0.0
        %2423 = vmatpush.msra.mxu0 0.0
        %2424 = vmatpush.msra.mxu0 0.0
        %2425 = vmatpush.msra.mxu0 0.0
        %2426 = vmatpush.msra.mxu0 0.0
        %2427 = vmatpush.msra.mxu0 0.0
        %2428 = vmatpush.msra.mxu0 0.0
        %2429 = vmatpush.msra.mxu0 0.0
        %2430 = vmatpush.msra.mxu0 0.0
        %2431 = vmatpush.msra.mxu0 0.0
        %2432 = vmatpush.msra.mxu0 0.0
        %2433 = vmatpush.msra.mxu0 0.0
        %2434 = vmatpush.msra.mxu0 %v2366
        %2435 = vmatpush.msra.mxu0 %v2363
        %2436 = vmatmul.f32.gmra.mxu0 %v2415
        %v2437 = vpop.f32.mrf.mxu0
        %v2438 = vadd.f32 0.0, %v2437
        %2439 = vmatmul.f32.gmra.mxu0 %v2418
        %v2440 = vpop.f32.mrf.mxu0
        %v2441 = vadd.f32 0.0, %v2440
        %2442 = vdwg.mxu0
        %2443 = vmatpush.msra.mxu0 0.0
        %2444 = vmatpush.msra.mxu0 0.0
        %2445 = vmatpush.msra.mxu0 0.0
        %2446 = vmatpush.msra.mxu0 0.0
        %2447 = vmatpush.msra.mxu0 0.0
        %2448 = vmatpush.msra.mxu0 0.0
        %2449 = vmatpush.msra.mxu0 0.0
        %2450 = vmatpush.msra.mxu0 0.0
        %2451 = vmatpush.msra.mxu0 0.0
        %2452 = vmatpush.msra.mxu0 0.0
        %2453 = vmatpush.msra.mxu0 0.0
        %2454 = vmatpush.msra.mxu0 0.0
        %2455 = vmatpush.msra.mxu0 0.0
        %2456 = vmatpush.msra.mxu0 0.0
        %2457 = vmatpush.msra.mxu0 %v2412
        %2458 = vmatpush.msra.mxu0 %v2409
        %2459 = vmatmul.f32.gmra.mxu0 %v2415
        %v2460 = vpop.f32.mrf.mxu0
        %v2461 = vadd.f32 0.0, %v2460
        %2462 = vmatmul.f32.gmra.mxu0 %v2418
        %v2463 = vpop.f32.mrf.mxu0
        %v2464 = vadd.f32 0.0, %v2463
        %2465 = vdwg.mxu0
        %v2466 = vadd.f32 %v2203, %v2438
        %v2467 = vadd.f32 %v2249, %v2461
        %v2468 = vadd.f32 %v2206, %v2441
        %v2469 = vadd.f32 %v2252, %v2464
        %v2470 = vld [vmem:[%s8] sm:$0xff]
        %v2471 = vld [vmem:[%s8 + $0x8] sm:$0xff]
        %v2472 = vld [vmem:[%s8 + $0x10] sm:$0xff]
        %v2473 = vld [vmem:[%s8 + $0x18] sm:$0xff]
        %v2474 = vld [vmem:[#allocation14] sm:$0xff]
        %v2475 = vld [vmem:[#allocation14 + $0x8] sm:$0xff]
        %v2476 = vld [vmem:[#allocation14 + $0x10] sm:$0xff]
        %v2477 = vld [vmem:[#allocation14 + $0x18] sm:$0xff]
        %v2478 = vld [vmem:[#allocation14 + $0x20] sm:$0xff]
        %v2479 = vld [vmem:[#allocation14 + $0x28] sm:$0xff]
        %v2480 = vld [vmem:[#allocation14 + $0x30] sm:$0xff]
        %v2481 = vld [vmem:[#allocation14 + $0x38] sm:$0xff]
        %v2482 = vld [vmem:[#allocation14 + $0x40] sm:$0xff]
        %v2483 = vld [vmem:[#allocation14 + $0x48] sm:$0xff]
        %v2484 = vld [vmem:[#allocation14 + $0x50] sm:$0xff]
        %v2485 = vld [vmem:[#allocation14 + $0x58] sm:$0xff]
        %v2486 = vld [vmem:[#allocation14 + $0x60] sm:$0xff]
        %v2487 = vld [vmem:[#allocation14 + $0x68] sm:$0xff]
        %v2488 = vld [vmem:[#allocation14 + $0x70] sm:$0xff]
        %v2489 = vld [vmem:[#allocation14 + $0x78] sm:$0xff]
        %v2490 = vld [vmem:[#allocation14 + $0x80] sm:$0xff]
        %v2491 = vld [vmem:[#allocation14 + $0x88] sm:$0xff]
        %v2492 = vld [vmem:[#allocation14 + $0x90] sm:$0xff]
        %v2493 = vld [vmem:[#allocation14 + $0x98] sm:$0xff]
        %v2494 = vld [vmem:[#allocation14 + $0xa0] sm:$0xff]
        %v2495 = vld [vmem:[#allocation14 + $0xa8] sm:$0xff]
        %v2496 = vld [vmem:[#allocation14 + $0xb0] sm:$0xff]
        %v2497 = vld [vmem:[#allocation14 + $0xb8] sm:$0xff]
        %v2498 = vld [vmem:[#allocation14 + $0xc0] sm:$0xff]
        %v2499 = vld [vmem:[#allocation14 + $0xc8] sm:$0xff]
        %v2500 = vld [vmem:[#allocation14 + $0xd0] sm:$0xff]
        %v2501 = vld [vmem:[#allocation14 + $0xd8] sm:$0xff]
        %v2502 = vld [vmem:[#allocation14 + $0xe0] sm:$0xff]
        %v2503 = vld [vmem:[#allocation14 + $0xe8] sm:$0xff]
        %v2504 = vld [vmem:[#allocation14 + $0xf0] sm:$0xff]
        %v2505 = vld [vmem:[#allocation14 + $0xf8] sm:$0xff]
        %v2506 = vld [vmem:[#allocation14 + $0x100] sm:$0xff]
        %v2507 = vld [vmem:[#allocation14 + $0x108] sm:$0xff]
        %v2508 = vld [vmem:[#allocation14 + $0x110] sm:$0xff]
        %v2509 = vld [vmem:[#allocation14 + $0x118] sm:$0xff]
        %v2510 = vld [vmem:[#allocation14 + $0x120] sm:$0xff]
        %v2511 = vld [vmem:[#allocation14 + $0x128] sm:$0xff]
        %v2512 = vld [vmem:[#allocation14 + $0x130] sm:$0xff]
        %v2513 = vld [vmem:[#allocation14 + $0x138] sm:$0xff]
        %v2514 = vld [vmem:[#allocation14 + $0x140] sm:$0xff]
        %v2515 = vld [vmem:[#allocation14 + $0x148] sm:$0xff]
        %v2516 = vld [vmem:[#allocation14 + $0x150] sm:$0xff]
        %v2517 = vld [vmem:[#allocation14 + $0x158] sm:$0xff]
        %v2518 = vld [vmem:[#allocation14 + $0x160] sm:$0xff]
        %v2519 = vld [vmem:[#allocation14 + $0x168] sm:$0xff]
        %v2520 = vld [vmem:[#allocation14 + $0x170] sm:$0xff]
        %v2521 = vld [vmem:[#allocation14 + $0x178] sm:$0xff]
        %v2522 = vld [vmem:[#allocation14 + $0x180] sm:$0xff]
        %v2523 = vld [vmem:[#allocation14 + $0x188] sm:$0xff]
        %v2524 = vld [vmem:[#allocation14 + $0x190] sm:$0xff]
        %v2525 = vld [vmem:[#allocation14 + $0x198] sm:$0xff]
        %v2526 = vld [vmem:[#allocation14 + $0x1a0] sm:$0xff]
        %v2527 = vld [vmem:[#allocation14 + $0x1a8] sm:$0xff]
        %v2528 = vld [vmem:[#allocation14 + $0x1b0] sm:$0xff]
        %v2529 = vld [vmem:[#allocation14 + $0x1b8] sm:$0xff]
        %v2530 = vld [vmem:[#allocation14 + $0x1c0] sm:$0xff]
        %v2531 = vld [vmem:[#allocation14 + $0x1c8] sm:$0xff]
        %v2532 = vld [vmem:[#allocation14 + $0x1d0] sm:$0xff]
        %v2533 = vld [vmem:[#allocation14 + $0x1d8] sm:$0xff]
        %v2534 = vld [vmem:[#allocation14 + $0x1e0] sm:$0xff]
        %v2535 = vld [vmem:[#allocation14 + $0x1e8] sm:$0xff]
        %v2536 = vld [vmem:[#allocation14 + $0x1f0] sm:$0xff]
        %v2537 = vld [vmem:[#allocation14 + $0x1f8] sm:$0xff]
        %v2538 = vld [vmem:[#allocation14 + $0x200] sm:$0xff]
        %v2539 = vld [vmem:[#allocation14 + $0x208] sm:$0xff]
        %v2540 = vld [vmem:[#allocation14 + $0x210] sm:$0xff]
        %v2541 = vld [vmem:[#allocation14 + $0x218] sm:$0xff]
        %v2542 = vld [vmem:[#allocation14 + $0x220] sm:$0xff]
        %v2543 = vld [vmem:[#allocation14 + $0x228] sm:$0xff]
        %v2544 = vld [vmem:[#allocation14 + $0x230] sm:$0xff]
        %v2545 = vld [vmem:[#allocation14 + $0x238] sm:$0xff]
        %v2546 = vld [vmem:[#allocation14 + $0x240] sm:$0xff]
        %v2547 = vld [vmem:[#allocation14 + $0x248] sm:$0xff]
        %v2548 = vld [vmem:[#allocation14 + $0x250] sm:$0xff]
        %v2549 = vld [vmem:[#allocation14 + $0x258] sm:$0xff]
        %v2550 = vld [vmem:[#allocation14 + $0x260] sm:$0xff]
        %v2551 = vld [vmem:[#allocation14 + $0x268] sm:$0xff]
        %v2552 = vld [vmem:[#allocation14 + $0x270] sm:$0xff]
        %v2553 = vld [vmem:[#allocation14 + $0x278] sm:$0xff]
        %v2554 = vld [vmem:[#allocation14 + $0x280] sm:$0xff]
        %v2555 = vld [vmem:[#allocation14 + $0x288] sm:$0xff]
        %v2556 = vld [vmem:[#allocation14 + $0x290] sm:$0xff]
        %v2557 = vld [vmem:[#allocation14 + $0x298] sm:$0xff]
        %v2558 = vld [vmem:[#allocation14 + $0x2a0] sm:$0xff]
        %v2559 = vld [vmem:[#allocation14 + $0x2a8] sm:$0xff]
        %v2560 = vld [vmem:[#allocation14 + $0x2b0] sm:$0xff]
        %v2561 = vld [vmem:[#allocation14 + $0x2b8] sm:$0xff]
        %v2562 = vld [vmem:[#allocation14 + $0x2c0] sm:$0xff]
        %v2563 = vld [vmem:[#allocation14 + $0x2c8] sm:$0xff]
        %v2564 = vld [vmem:[#allocation14 + $0x2d0] sm:$0xff]
        %v2565 = vld [vmem:[#allocation14 + $0x2d8] sm:$0xff]
        %v2566 = vld [vmem:[#allocation14 + $0x2e0] sm:$0xff]
        %v2567 = vld [vmem:[#allocation14 + $0x2e8] sm:$0xff]
        %v2568 = vld [vmem:[#allocation14 + $0x2f0] sm:$0xff]
        %v2569 = vld [vmem:[#allocation14 + $0x2f8] sm:$0xff]
        %v2570 = vld [vmem:[#allocation14 + $0x300] sm:$0xff]
        %v2571 = vld [vmem:[#allocation14 + $0x308] sm:$0xff]
        %v2572 = vld [vmem:[#allocation14 + $0x310] sm:$0xff]
        %v2573 = vld [vmem:[#allocation14 + $0x318] sm:$0xff]
        %v2574 = vld [vmem:[#allocation14 + $0x320] sm:$0xff]
        %v2575 = vld [vmem:[#allocation14 + $0x328] sm:$0xff]
        %v2576 = vld [vmem:[#allocation14 + $0x330] sm:$0xff]
        %v2577 = vld [vmem:[#allocation14 + $0x338] sm:$0xff]
        %v2578 = vld [vmem:[#allocation14 + $0x340] sm:$0xff]
        %v2579 = vld [vmem:[#allocation14 + $0x348] sm:$0xff]
        %v2580 = vld [vmem:[#allocation14 + $0x350] sm:$0xff]
        %v2581 = vld [vmem:[#allocation14 + $0x358] sm:$0xff]
        %v2582 = vld [vmem:[#allocation14 + $0x360] sm:$0xff]
        %v2583 = vld [vmem:[#allocation14 + $0x368] sm:$0xff]
        %v2584 = vld [vmem:[#allocation14 + $0x370] sm:$0xff]
        %v2585 = vld [vmem:[#allocation14 + $0x378] sm:$0xff]
        %v2586 = vld [vmem:[#allocation14 + $0x380] sm:$0xff]
        %v2587 = vld [vmem:[#allocation14 + $0x388] sm:$0xff]
        %v2588 = vld [vmem:[#allocation14 + $0x390] sm:$0xff]
        %v2589 = vld [vmem:[#allocation14 + $0x398] sm:$0xff]
        %v2590 = vld [vmem:[#allocation14 + $0x3a0] sm:$0xff]
        %v2591 = vld [vmem:[#allocation14 + $0x3a8] sm:$0xff]
        %v2592 = vld [vmem:[#allocation14 + $0x3b0] sm:$0xff]
        %v2593 = vld [vmem:[#allocation14 + $0x3b8] sm:$0xff]
        %v2594 = vld [vmem:[#allocation14 + $0x3c0] sm:$0xff]
        %v2595 = vld [vmem:[#allocation14 + $0x3c8] sm:$0xff]
        %v2596 = vld [vmem:[#allocation14 + $0x3d0] sm:$0xff]
        %v2597 = vld [vmem:[#allocation14 + $0x3d8] sm:$0xff]
        %v2598 = vld [vmem:[#allocation14 + $0x3e0] sm:$0xff]
        %v2599 = vld [vmem:[#allocation14 + $0x3e8] sm:$0xff]
        %v2600 = vld [vmem:[#allocation14 + $0x3f0] sm:$0xff]
        %v2601 = vld [vmem:[#allocation14 + $0x3f8] sm:$0xff]
        %v2603 = vsel %vm2109, %v2470, 0
        %v2606 = vsel %vm2109, %v2471, 0
        %v2609 = vsel %vm2109, %v2472, 0
        %v2612 = vsel %vm2109, %v2473, 0
        %2614 = vmatpush.msra.mxu0 0.0
        %2615 = vmatpush.msra.mxu0 0.0
        %2616 = vmatpush.msra.mxu0 0.0
        %2617 = vmatpush.msra.mxu0 0.0
        %2618 = vmatpush.msra.mxu0 0.0
        %2619 = vmatpush.msra.mxu0 0.0
        %2620 = vmatpush.msra.mxu0 0.0
        %2621 = vmatpush.msra.mxu0 0.0
        %2622 = vmatpush.msra.mxu0 0.0
        %2623 = vmatpush.msra.mxu0 0.0
        %2624 = vmatpush.msra.mxu0 0.0
        %2625 = vmatpush.msra.mxu0 0.0
        %2626 = vmatpush.msra.mxu0 0.0
        %2627 = vmatpush.msra.mxu0 0.0
        %2628 = vmatpush.msra.mxu0 %v2468
        %2629 = vmatpush.msra.mxu0 %v2466
        %2630 = vmatmul.f32.gmra.mxu0 %v2603
        %v2631 = vpop.f32.mrf.mxu0
        %v2632 = vadd.f32 0.0, %v2631
        %2633 = vmatmul.f32.gmra.mxu0 %v2606
        %v2634 = vpop.f32.mrf.mxu0
        %v2635 = vadd.f32 0.0, %v2634
        %2636 = vmatmul.f32.gmra.mxu0 %v2609
        %v2637 = vpop.f32.mrf.mxu0
        %v2638 = vadd.f32 0.0, %v2637
        %2639 = vmatmul.f32.gmra.mxu0 %v2612
        %v2640 = vpop.f32.mrf.mxu0
        %v2641 = vadd.f32 0.0, %v2640
        %2642 = vdwg.mxu0
        %2643 = vmatpush.msra.mxu0 0.0
        %2644 = vmatpush.msra.mxu0 0.0
        %2645 = vmatpush.msra.mxu0 0.0
        %2646 = vmatpush.msra.mxu0 0.0
        %2647 = vmatpush.msra.mxu0 0.0
        %2648 = vmatpush.msra.mxu0 0.0
        %2649 = vmatpush.msra.mxu0 0.0
        %2650 = vmatpush.msra.mxu0 0.0
        %2651 = vmatpush.msra.mxu0 0.0
        %2652 = vmatpush.msra.mxu0 0.0
        %2653 = vmatpush.msra.mxu0 0.0
        %2654 = vmatpush.msra.mxu0 0.0
        %2655 = vmatpush.msra.mxu0 0.0
        %2656 = vmatpush.msra.mxu0 0.0
        %2657 = vmatpush.msra.mxu0 %v2469
        %2658 = vmatpush.msra.mxu0 %v2467
        %2659 = vmatmul.f32.gmra.mxu0 %v2603
        %v2660 = vpop.f32.mrf.mxu0
        %v2661 = vadd.f32 0.0, %v2660
        %2662 = vmatmul.f32.gmra.mxu0 %v2606
        %v2663 = vpop.f32.mrf.mxu0
        %v2664 = vadd.f32 0.0, %v2663
        %2665 = vmatmul.f32.gmra.mxu0 %v2609
        %v2666 = vpop.f32.mrf.mxu0
        %v2667 = vadd.f32 0.0, %v2666
        %2668 = vmatmul.f32.gmra.mxu0 %v2612
        %v2669 = vpop.f32.mrf.mxu0
        %v2670 = vadd.f32 0.0, %v2669
        %2671 = vdwg.mxu0
        %2672 = vmatpush.msra.mxu0 %v2534
        %2673 = vmatpush.msra.mxu0 %v2530
        %2674 = vmatpush.msra.mxu0 %v2526
        %2675 = vmatpush.msra.mxu0 %v2522
        %2676 = vmatpush.msra.mxu0 %v2518
        %2677 = vmatpush.msra.mxu0 %v2514
        %2678 = vmatpush.msra.mxu0 %v2510
        %2679 = vmatpush.msra.mxu0 %v2506
        %2680 = vmatpush.msra.mxu0 %v2502
        %2681 = vmatpush.msra.mxu0 %v2498
        %2682 = vmatpush.msra.mxu0 %v2494
        %2683 = vmatpush.msra.mxu0 %v2490
        %2684 = vmatpush.msra.mxu0 %v2486
        %2685 = vmatpush.msra.mxu0 %v2482
        %2686 = vmatpush.msra.mxu0 %v2478
        %2687 = vmatpush.msra.mxu0 %v2474
        %2688 = vmatmul.f32.gmra.mxu0 %v2632
        %v2689 = vpop.f32.mrf.mxu0
        %v2690 = vadd.f32 0.0, %v2689
        %2691 = vmatmul.f32.gmra.mxu0 %v2635
        %v2692 = vpop.f32.mrf.mxu0
        %v2693 = vadd.f32 0.0, %v2692
        %2694 = vmatmul.f32.gmra.mxu0 %v2638
        %v2695 = vpop.f32.mrf.mxu0
        %v2696 = vadd.f32 0.0, %v2695
        %2697 = vmatmul.f32.gmra.mxu0 %v2641
        %v2698 = vpop.f32.mrf.mxu0
        %v2699 = vadd.f32 0.0, %v2698
        %2700 = vdwg.mxu0
        %2701 = vmatpush.msra.mxu0 %v2598
        %2702 = vmatpush.msra.mxu0 %v2594
        %2703 = vmatpush.msra.mxu0 %v2590
        %2704 = vmatpush.msra.mxu0 %v2586
        %2705 = vmatpush.msra.mxu0 %v2582
        %2706 = vmatpush.msra.mxu0 %v2578
        %2707 = vmatpush.msra.mxu0 %v2574
        %2708 = vmatpush.msra.mxu0 %v2570
        %2709 = vmatpush.msra.mxu0 %v2566
        %2710 = vmatpush.msra.mxu0 %v2562
        %2711 = vmatpush.msra.mxu0 %v2558
        %2712 = vmatpush.msra.mxu0 %v2554
        %2713 = vmatpush.msra.mxu0 %v2550
        %2714 = vmatpush.msra.mxu0 %v2546
        %2715 = vmatpush.msra.mxu0 %v2542
        %2716 = vmatpush.msra.mxu0 %v2538
        %2717 = vmatmul.f32.gmra.mxu0 %v2661
        %v2718 = vpop.f32.mrf.mxu0
        %v2719 = vadd.f32 %v2690, %v2718
        %2720 = vmatmul.f32.gmra.mxu0 %v2664
        %v2721 = vpop.f32.mrf.mxu0
        %v2722 = vadd.f32 %v2693, %v2721
        %2723 = vmatmul.f32.gmra.mxu0 %v2667
        %v2724 = vpop.f32.mrf.mxu0
        %v2725 = vadd.f32 %v2696, %v2724
        %2726 = vmatmul.f32.gmra.mxu0 %v2670
        %v2727 = vpop.f32.mrf.mxu0
        %v2728 = vadd.f32 %v2699, %v2727
        %2729 = vdwg.mxu0
        %2730 = vmatpush.msra.mxu0 %v2535
        %2731 = vmatpush.msra.mxu0 %v2531
        %2732 = vmatpush.msra.mxu0 %v2527
        %2733 = vmatpush.msra.mxu0 %v2523
        %2734 = vmatpush.msra.mxu0 %v2519
        %2735 = vmatpush.msra.mxu0 %v2515
        %2736 = vmatpush.msra.mxu0 %v2511
        %2737 = vmatpush.msra.mxu0 %v2507
        %2738 = vmatpush.msra.mxu0 %v2503
        %2739 = vmatpush.msra.mxu0 %v2499
        %2740 = vmatpush.msra.mxu0 %v2495
        %2741 = vmatpush.msra.mxu0 %v2491
        %2742 = vmatpush.msra.mxu0 %v2487
        %2743 = vmatpush.msra.mxu0 %v2483
        %2744 = vmatpush.msra.mxu0 %v2479
        %2745 = vmatpush.msra.mxu0 %v2475
        %2746 = vmatmul.f32.gmra.mxu0 %v2632
        %v2747 = vpop.f32.mrf.mxu0
        %v2748 = vadd.f32 0.0, %v2747
        %2749 = vmatmul.f32.gmra.mxu0 %v2635
        %v2750 = vpop.f32.mrf.mxu0
        %v2751 = vadd.f32 0.0, %v2750
        %2752 = vmatmul.f32.gmra.mxu0 %v2638
        %v2753 = vpop.f32.mrf.mxu0
        %v2754 = vadd.f32 0.0, %v2753
        %2755 = vmatmul.f32.gmra.mxu0 %v2641
        %v2756 = vpop.f32.mrf.mxu0
        %v2757 = vadd.f32 0.0, %v2756
        %2758 = vdwg.mxu0
        %2759 = vmatpush.msra.mxu0 %v2599
        %2760 = vmatpush.msra.mxu0 %v2595
        %2761 = vmatpush.msra.mxu0 %v2591
        %2762 = vmatpush.msra.mxu0 %v2587
        %2763 = vmatpush.msra.mxu0 %v2583
        %2764 = vmatpush.msra.mxu0 %v2579
        %2765 = vmatpush.msra.mxu0 %v2575
        %2766 = vmatpush.msra.mxu0 %v2571
        %2767 = vmatpush.msra.mxu0 %v2567
        %2768 = vmatpush.msra.mxu0 %v2563
        %2769 = vmatpush.msra.mxu0 %v2559
        %2770 = vmatpush.msra.mxu0 %v2555
        %2771 = vmatpush.msra.mxu0 %v2551
        %2772 = vmatpush.msra.mxu0 %v2547
        %2773 = vmatpush.msra.mxu0 %v2543
        %2774 = vmatpush.msra.mxu0 %v2539
        %2775 = vmatmul.f32.gmra.mxu0 %v2661
        %v2776 = vpop.f32.mrf.mxu0
        %v2777 = vadd.f32 %v2748, %v2776
        %2778 = vmatmul.f32.gmra.mxu0 %v2664
        %v2779 = vpop.f32.mrf.mxu0
        %v2780 = vadd.f32 %v2751, %v2779
        %2781 = vmatmul.f32.gmra.mxu0 %v2667
        %v2782 = vpop.f32.mrf.mxu0
        %v2783 = vadd.f32 %v2754, %v2782
        %2784 = vmatmul.f32.gmra.mxu0 %v2670
        %v2785 = vpop.f32.mrf.mxu0
        %v2786 = vadd.f32 %v2757, %v2785
        %2787 = vdwg.mxu0
        %2788 = vmatpush.msra.mxu0 %v2536
        %2789 = vmatpush.msra.mxu0 %v2532
        %2790 = vmatpush.msra.mxu0 %v2528
        %2791 = vmatpush.msra.mxu0 %v2524
        %2792 = vmatpush.msra.mxu0 %v2520
        %2793 = vmatpush.msra.mxu0 %v2516
        %2794 = vmatpush.msra.mxu0 %v2512
        %2795 = vmatpush.msra.mxu0 %v2508
        %2796 = vmatpush.msra.mxu0 %v2504
        %2797 = vmatpush.msra.mxu0 %v2500
        %2798 = vmatpush.msra.mxu0 %v2496
        %2799 = vmatpush.msra.mxu0 %v2492
        %2800 = vmatpush.msra.mxu0 %v2488
        %2801 = vmatpush.msra.mxu0 %v2484
        %2802 = vmatpush.msra.mxu0 %v2480
        %2803 = vmatpush.msra.mxu0 %v2476
        %2804 = vmatmul.f32.gmra.mxu0 %v2632
        %v2805 = vpop.f32.mrf.mxu0
        %v2806 = vadd.f32 0.0, %v2805
        %2807 = vmatmul.f32.gmra.mxu0 %v2635
        %v2808 = vpop.f32.mrf.mxu0
        %v2809 = vadd.f32 0.0, %v2808
        %2810 = vmatmul.f32.gmra.mxu0 %v2638
        %v2811 = vpop.f32.mrf.mxu0
        %v2812 = vadd.f32 0.0, %v2811
        %2813 = vmatmul.f32.gmra.mxu0 %v2641
        %v2814 = vpop.f32.mrf.mxu0
        %v2815 = vadd.f32 0.0, %v2814
        %2816 = vdwg.mxu0
        %2817 = vmatpush.msra.mxu0 %v2600
        %2818 = vmatpush.msra.mxu0 %v2596
        %2819 = vmatpush.msra.mxu0 %v2592
        %2820 = vmatpush.msra.mxu0 %v2588
        %2821 = vmatpush.msra.mxu0 %v2584
        %2822 = vmatpush.msra.mxu0 %v2580
        %2823 = vmatpush.msra.mxu0 %v2576
        %2824 = vmatpush.msra.mxu0 %v2572
        %2825 = vmatpush.msra.mxu0 %v2568
        %2826 = vmatpush.msra.mxu0 %v2564
        %2827 = vmatpush.msra.mxu0 %v2560
        %2828 = vmatpush.msra.mxu0 %v2556
        %2829 = vmatpush.msra.mxu0 %v2552
        %2830 = vmatpush.msra.mxu0 %v2548
        %2831 = vmatpush.msra.mxu0 %v2544
        %2832 = vmatpush.msra.mxu0 %v2540
        %2833 = vmatmul.f32.gmra.mxu0 %v2661
        %v2834 = vpop.f32.mrf.mxu0
        %v2835 = vadd.f32 %v2806, %v2834
        %2836 = vmatmul.f32.gmra.mxu0 %v2664
        %v2837 = vpop.f32.mrf.mxu0
        %v2838 = vadd.f32 %v2809, %v2837
        %2839 = vmatmul.f32.gmra.mxu0 %v2667
        %v2840 = vpop.f32.mrf.mxu0
        %v2841 = vadd.f32 %v2812, %v2840
        %2842 = vmatmul.f32.gmra.mxu0 %v2670
        %v2843 = vpop.f32.mrf.mxu0
        %v2844 = vadd.f32 %v2815, %v2843
        %2845 = vdwg.mxu0
        %2846 = vmatpush.msra.mxu0 %v2537
        %2847 = vmatpush.msra.mxu0 %v2533
        %2848 = vmatpush.msra.mxu0 %v2529
        %2849 = vmatpush.msra.mxu0 %v2525
        %2850 = vmatpush.msra.mxu0 %v2521
        %2851 = vmatpush.msra.mxu0 %v2517
        %2852 = vmatpush.msra.mxu0 %v2513
        %2853 = vmatpush.msra.mxu0 %v2509
        %2854 = vmatpush.msra.mxu0 %v2505
        %2855 = vmatpush.msra.mxu0 %v2501
        %2856 = vmatpush.msra.mxu0 %v2497
        %2857 = vmatpush.msra.mxu0 %v2493
        %2858 = vmatpush.msra.mxu0 %v2489
        %2859 = vmatpush.msra.mxu0 %v2485
        %2860 = vmatpush.msra.mxu0 %v2481
        %2861 = vmatpush.msra.mxu0 %v2477
        %2862 = vmatmul.f32.gmra.mxu0 %v2632
        %v2863 = vpop.f32.mrf.mxu0
        %v2864 = vadd.f32 0.0, %v2863
        %2865 = vmatmul.f32.gmra.mxu0 %v2635
        %v2866 = vpop.f32.mrf.mxu0
        %v2867 = vadd.f32 0.0, %v2866
        %2868 = vmatmul.f32.gmra.mxu0 %v2638
        %v2869 = vpop.f32.mrf.mxu0
        %v2870 = vadd.f32 0.0, %v2869
        %2871 = vmatmul.f32.gmra.mxu0 %v2641
        %v2872 = vpop.f32.mrf.mxu0
        %v2873 = vadd.f32 0.0, %v2872
        %2874 = vdwg.mxu0
        %2875 = vmatpush.msra.mxu0 %v2601
        %2876 = vmatpush.msra.mxu0 %v2597
        %2877 = vmatpush.msra.mxu0 %v2593
        %2878 = vmatpush.msra.mxu0 %v2589
        %2879 = vmatpush.msra.mxu0 %v2585
        %2880 = vmatpush.msra.mxu0 %v2581
        %2881 = vmatpush.msra.mxu0 %v2577
        %2882 = vmatpush.msra.mxu0 %v2573
        %2883 = vmatpush.msra.mxu0 %v2569
        %2884 = vmatpush.msra.mxu0 %v2565
        %2885 = vmatpush.msra.mxu0 %v2561
        %2886 = vmatpush.msra.mxu0 %v2557
        %2887 = vmatpush.msra.mxu0 %v2553
        %2888 = vmatpush.msra.mxu0 %v2549
        %2889 = vmatpush.msra.mxu0 %v2545
        %2890 = vmatpush.msra.mxu0 %v2541
        %2891 = vmatmul.f32.gmra.mxu0 %v2661
        %v2892 = vpop.f32.mrf.mxu0
        %v2893 = vadd.f32 %v2864, %v2892
        %2894 = vmatmul.f32.gmra.mxu0 %v2664
        %v2895 = vpop.f32.mrf.mxu0
        %v2896 = vadd.f32 %v2867, %v2895
        %2897 = vmatmul.f32.gmra.mxu0 %v2667
        %v2898 = vpop.f32.mrf.mxu0
        %v2899 = vadd.f32 %v2870, %v2898
        %2900 = vmatmul.f32.gmra.mxu0 %v2670
        %v2901 = vpop.f32.mrf.mxu0
        %v2902 = vadd.f32 %v2873, %v2901
        %2903 = vdwg.mxu0
        %v2904 = vld [vmem:[%s1007] sm:$0xff]
        %v2905 = vld [vmem:[%s1007 + $0x8] sm:$0xff]
        %v2906 = vld [vmem:[%s1007 + $0x10] sm:$0xff]
        %v2907 = vld [vmem:[%s1007 + $0x18] sm:$0xff]
        %2908 = vmatpush.msra.mxu0 0.0
        %2909 = vmatpush.msra.mxu0 0.0
        %2910 = vmatpush.msra.mxu0 0.0
        %2911 = vmatpush.msra.mxu0 0.0
        %2912 = vmatpush.msra.mxu0 0.0
        %2913 = vmatpush.msra.mxu0 0.0
        %2914 = vmatpush.msra.mxu0 0.0
        %2915 = vmatpush.msra.mxu0 0.0
        %2916 = vmatpush.msra.mxu0 0.0
        %2917 = vmatpush.msra.mxu0 0.0
        %2918 = vmatpush.msra.mxu0 0.0
        %2919 = vmatpush.msra.mxu0 0.0
        %2920 = vmatpush.msra.mxu0 0.0
        %2921 = vmatpush.msra.mxu0 0.0
        %2922 = vmatpush.msra.mxu0 %v2906
        %2923 = vmatpush.msra.mxu0 %v2904
        %2924 = vmatmul.f32.gmra.mxu0 %v2603
        %v2925 = vpop.f32.mrf.mxu0
        %v2926 = vadd.f32 0.0, %v2925
        %2927 = vmatmul.f32.gmra.mxu0 %v2606
        %v2928 = vpop.f32.mrf.mxu0
        %v2929 = vadd.f32 0.0, %v2928
        %2930 = vmatmul.f32.gmra.mxu0 %v2609
        %v2931 = vpop.f32.mrf.mxu0
        %v2932 = vadd.f32 0.0, %v2931
        %2933 = vmatmul.f32.gmra.mxu0 %v2612
        %v2934 = vpop.f32.mrf.mxu0
        %v2935 = vadd.f32 0.0, %v2934
        %2936 = vdwg.mxu0
        %2937 = vmatpush.msra.mxu0 0.0
        %2938 = vmatpush.msra.mxu0 0.0
        %2939 = vmatpush.msra.mxu0 0.0
        %2940 = vmatpush.msra.mxu0 0.0
        %2941 = vmatpush.msra.mxu0 0.0
        %2942 = vmatpush.msra.mxu0 0.0
        %2943 = vmatpush.msra.mxu0 0.0
        %2944 = vmatpush.msra.mxu0 0.0
        %2945 = vmatpush.msra.mxu0 0.0
        %2946 = vmatpush.msra.mxu0 0.0
        %2947 = vmatpush.msra.mxu0 0.0
        %2948 = vmatpush.msra.mxu0 0.0
        %2949 = vmatpush.msra.mxu0 0.0
        %2950 = vmatpush.msra.mxu0 0.0
        %2951 = vmatpush.msra.mxu0 %v2907
        %2952 = vmatpush.msra.mxu0 %v2905
        %2953 = vmatmul.f32.gmra.mxu0 %v2603
        %v2954 = vpop.f32.mrf.mxu0
        %v2955 = vadd.f32 0.0, %v2954
        %2956 = vmatmul.f32.gmra.mxu0 %v2606
        %v2957 = vpop.f32.mrf.mxu0
        %v2958 = vadd.f32 0.0, %v2957
        %2959 = vmatmul.f32.gmra.mxu0 %v2609
        %v2960 = vpop.f32.mrf.mxu0
        %v2961 = vadd.f32 0.0, %v2960
        %2962 = vmatmul.f32.gmra.mxu0 %v2612
        %v2963 = vpop.f32.mrf.mxu0
        %v2964 = vadd.f32 0.0, %v2963
        %2965 = vdwg.mxu0
        %2966 = vmatpush.msra.mxu0 %v2534
        %2967 = vmatpush.msra.mxu0 %v2530
        %2968 = vmatpush.msra.mxu0 %v2526
        %2969 = vmatpush.msra.mxu0 %v2522
        %2970 = vmatpush.msra.mxu0 %v2518
        %2971 = vmatpush.msra.mxu0 %v2514
        %2972 = vmatpush.msra.mxu0 %v2510
        %2973 = vmatpush.msra.mxu0 %v2506
        %2974 = vmatpush.msra.mxu0 %v2502
        %2975 = vmatpush.msra.mxu0 %v2498
        %2976 = vmatpush.msra.mxu0 %v2494
        %2977 = vmatpush.msra.mxu0 %v2490
        %2978 = vmatpush.msra.mxu0 %v2486
        %2979 = vmatpush.msra.mxu0 %v2482
        %2980 = vmatpush.msra.mxu0 %v2478
        %2981 = vmatpush.msra.mxu0 %v2474
        %2982 = vmatmul.f32.gmra.mxu0 %v2926
        %v2983 = vpop.f32.mrf.mxu0
        %v2984 = vadd.f32 0.0, %v2983
        %2985 = vmatmul.f32.gmra.mxu0 %v2929
        %v2986 = vpop.f32.mrf.mxu0
        %v2987 = vadd.f32 0.0, %v2986
        %2988 = vmatmul.f32.gmra.mxu0 %v2932
        %v2989 = vpop.f32.mrf.mxu0
        %v2990 = vadd.f32 0.0, %v2989
        %2991 = vmatmul.f32.gmra.mxu0 %v2935
        %v2992 = vpop.f32.mrf.mxu0
        %v2993 = vadd.f32 0.0, %v2992
        %2994 = vdwg.mxu0
        %2995 = vmatpush.msra.mxu0 %v2598
        %2996 = vmatpush.msra.mxu0 %v2594
        %2997 = vmatpush.msra.mxu0 %v2590
        %2998 = vmatpush.msra.mxu0 %v2586
        %2999 = vmatpush.msra.mxu0 %v2582
        %3000 = vmatpush.msra.mxu0 %v2578
        %3001 = vmatpush.msra.mxu0 %v2574
        %3002 = vmatpush.msra.mxu0 %v2570
        %3003 = vmatpush.msra.mxu0 %v2566
        %3004 = vmatpush.msra.mxu0 %v2562
        %3005 = vmatpush.msra.mxu0 %v2558
        %3006 = vmatpush.msra.mxu0 %v2554
        %3007 = vmatpush.msra.mxu0 %v2550
        %3008 = vmatpush.msra.mxu0 %v2546
        %3009 = vmatpush.msra.mxu0 %v2542
        %3010 = vmatpush.msra.mxu0 %v2538
        %3011 = vmatmul.f32.gmra.mxu0 %v2955
        %v3012 = vpop.f32.mrf.mxu0
        %v3013 = vadd.f32 %v2984, %v3012
        %3014 = vmatmul.f32.gmra.mxu0 %v2958
        %v3015 = vpop.f32.mrf.mxu0
        %v3016 = vadd.f32 %v2987, %v3015
        %3017 = vmatmul.f32.gmra.mxu0 %v2961
        %v3018 = vpop.f32.mrf.mxu0
        %v3019 = vadd.f32 %v2990, %v3018
        %3020 = vmatmul.f32.gmra.mxu0 %v2964
        %v3021 = vpop.f32.mrf.mxu0
        %v3022 = vadd.f32 %v2993, %v3021
        %3023 = vdwg.mxu0
        %3024 = vmatpush.msra.mxu0 %v2535
        %3025 = vmatpush.msra.mxu0 %v2531
        %3026 = vmatpush.msra.mxu0 %v2527
        %3027 = vmatpush.msra.mxu0 %v2523
        %3028 = vmatpush.msra.mxu0 %v2519
        %3029 = vmatpush.msra.mxu0 %v2515
        %3030 = vmatpush.msra.mxu0 %v2511
        %3031 = vmatpush.msra.mxu0 %v2507
        %3032 = vmatpush.msra.mxu0 %v2503
        %3033 = vmatpush.msra.mxu0 %v2499
        %3034 = vmatpush.msra.mxu0 %v2495
        %3035 = vmatpush.msra.mxu0 %v2491
        %3036 = vmatpush.msra.mxu0 %v2487
        %3037 = vmatpush.msra.mxu0 %v2483
        %3038 = vmatpush.msra.mxu0 %v2479
        %3039 = vmatpush.msra.mxu0 %v2475
        %3040 = vmatmul.f32.gmra.mxu0 %v2926
        %v3041 = vpop.f32.mrf.mxu0
        %v3042 = vadd.f32 0.0, %v3041
        %3043 = vmatmul.f32.gmra.mxu0 %v2929
        %v3044 = vpop.f32.mrf.mxu0
        %v3045 = vadd.f32 0.0, %v3044
        %3046 = vmatmul.f32.gmra.mxu0 %v2932
        %v3047 = vpop.f32.mrf.mxu0
        %v3048 = vadd.f32 0.0, %v3047
        %3049 = vmatmul.f32.gmra.mxu0 %v2935
        %v3050 = vpop.f32.mrf.mxu0
        %v3051 = vadd.f32 0.0, %v3050
        %3052 = vdwg.mxu0
        %3053 = vmatpush.msra.mxu0 %v2599
        %3054 = vmatpush.msra.mxu0 %v2595
        %3055 = vmatpush.msra.mxu0 %v2591
        %3056 = vmatpush.msra.mxu0 %v2587
        %3057 = vmatpush.msra.mxu0 %v2583
        %3058 = vmatpush.msra.mxu0 %v2579
        %3059 = vmatpush.msra.mxu0 %v2575
        %3060 = vmatpush.msra.mxu0 %v2571
        %3061 = vmatpush.msra.mxu0 %v2567
        %3062 = vmatpush.msra.mxu0 %v2563
        %3063 = vmatpush.msra.mxu0 %v2559
        %3064 = vmatpush.msra.mxu0 %v2555
        %3065 = vmatpush.msra.mxu0 %v2551
        %3066 = vmatpush.msra.mxu0 %v2547
        %3067 = vmatpush.msra.mxu0 %v2543
        %3068 = vmatpush.msra.mxu0 %v2539
        %3069 = vmatmul.f32.gmra.mxu0 %v2955
        %v3070 = vpop.f32.mrf.mxu0
        %v3071 = vadd.f32 %v3042, %v3070
        %3072 = vmatmul.f32.gmra.mxu0 %v2958
        %v3073 = vpop.f32.mrf.mxu0
        %v3074 = vadd.f32 %v3045, %v3073
        %3075 = vmatmul.f32.gmra.mxu0 %v2961
        %v3076 = vpop.f32.mrf.mxu0
        %v3077 = vadd.f32 %v3048, %v3076
        %3078 = vmatmul.f32.gmra.mxu0 %v2964
        %v3079 = vpop.f32.mrf.mxu0
        %v3080 = vadd.f32 %v3051, %v3079
        %3081 = vdwg.mxu0
        %3082 = vmatpush.msra.mxu0 %v2536
        %3083 = vmatpush.msra.mxu0 %v2532
        %3084 = vmatpush.msra.mxu0 %v2528
        %3085 = vmatpush.msra.mxu0 %v2524
        %3086 = vmatpush.msra.mxu0 %v2520
        %3087 = vmatpush.msra.mxu0 %v2516
        %3088 = vmatpush.msra.mxu0 %v2512
        %3089 = vmatpush.msra.mxu0 %v2508
        %3090 = vmatpush.msra.mxu0 %v2504
        %3091 = vmatpush.msra.mxu0 %v2500
        %3092 = vmatpush.msra.mxu0 %v2496
        %3093 = vmatpush.msra.mxu0 %v2492
        %3094 = vmatpush.msra.mxu0 %v2488
        %3095 = vmatpush.msra.mxu0 %v2484
        %3096 = vmatpush.msra.mxu0 %v2480
        %3097 = vmatpush.msra.mxu0 %v2476
        %3098 = vmatmul.f32.gmra.mxu0 %v2926
        %v3099 = vpop.f32.mrf.mxu0
        %v3100 = vadd.f32 0.0, %v3099
        %3101 = vmatmul.f32.gmra.mxu0 %v2929
        %v3102 = vpop.f32.mrf.mxu0
        %v3103 = vadd.f32 0.0, %v3102
        %3104 = vmatmul.f32.gmra.mxu0 %v2932
        %v3105 = vpop.f32.mrf.mxu0
        %v3106 = vadd.f32 0.0, %v3105
        %3107 = vmatmul.f32.gmra.mxu0 %v2935
        %v3108 = vpop.f32.mrf.mxu0
        %v3109 = vadd.f32 0.0, %v3108
        %3110 = vdwg.mxu0
        %3111 = vmatpush.msra.mxu0 %v2600
        %3112 = vmatpush.msra.mxu0 %v2596
        %3113 = vmatpush.msra.mxu0 %v2592
        %3114 = vmatpush.msra.mxu0 %v2588
        %3115 = vmatpush.msra.mxu0 %v2584
        %3116 = vmatpush.msra.mxu0 %v2580
        %3117 = vmatpush.msra.mxu0 %v2576
        %3118 = vmatpush.msra.mxu0 %v2572
        %3119 = vmatpush.msra.mxu0 %v2568
        %3120 = vmatpush.msra.mxu0 %v2564
        %3121 = vmatpush.msra.mxu0 %v2560
        %3122 = vmatpush.msra.mxu0 %v2556
        %3123 = vmatpush.msra.mxu0 %v2552
        %3124 = vmatpush.msra.mxu0 %v2548
        %3125 = vmatpush.msra.mxu0 %v2544
        %3126 = vmatpush.msra.mxu0 %v2540
        %3127 = vmatmul.f32.gmra.mxu0 %v2955
        %v3128 = vpop.f32.mrf.mxu0
        %v3129 = vadd.f32 %v3100, %v3128
        %3130 = vmatmul.f32.gmra.mxu0 %v2958
        %v3131 = vpop.f32.mrf.mxu0
        %v3132 = vadd.f32 %v3103, %v3131
        %3133 = vmatmul.f32.gmra.mxu0 %v2961
        %v3134 = vpop.f32.mrf.mxu0
        %v3135 = vadd.f32 %v3106, %v3134
        %3136 = vmatmul.f32.gmra.mxu0 %v2964
        %v3137 = vpop.f32.mrf.mxu0
        %v3138 = vadd.f32 %v3109, %v3137
        %3139 = vdwg.mxu0
        %3140 = vmatpush.msra.mxu0 %v2537
        %3141 = vmatpush.msra.mxu0 %v2533
        %3142 = vmatpush.msra.mxu0 %v2529
        %3143 = vmatpush.msra.mxu0 %v2525
        %3144 = vmatpush.msra.mxu0 %v2521
        %3145 = vmatpush.msra.mxu0 %v2517
        %3146 = vmatpush.msra.mxu0 %v2513
        %3147 = vmatpush.msra.mxu0 %v2509
        %3148 = vmatpush.msra.mxu0 %v2505
        %3149 = vmatpush.msra.mxu0 %v2501
        %3150 = vmatpush.msra.mxu0 %v2497
        %3151 = vmatpush.msra.mxu0 %v2493
        %3152 = vmatpush.msra.mxu0 %v2489
        %3153 = vmatpush.msra.mxu0 %v2485
        %3154 = vmatpush.msra.mxu0 %v2481
        %3155 = vmatpush.msra.mxu0 %v2477
        %3156 = vmatmul.f32.gmra.mxu0 %v2926
        %v3157 = vpop.f32.mrf.mxu0
        %v3158 = vadd.f32 0.0, %v3157
        %3159 = vmatmul.f32.gmra.mxu0 %v2929
        %v3160 = vpop.f32.mrf.mxu0
        %v3161 = vadd.f32 0.0, %v3160
        %3162 = vmatmul.f32.gmra.mxu0 %v2932
        %v3163 = vpop.f32.mrf.mxu0
        %v3164 = vadd.f32 0.0, %v3163
        %3165 = vmatmul.f32.gmra.mxu0 %v2935
        %v3166 = vpop.f32.mrf.mxu0
        %v3167 = vadd.f32 0.0, %v3166
        %3168 = vdwg.mxu0
        %3169 = vmatpush.msra.mxu0 %v2601
        %3170 = vmatpush.msra.mxu0 %v2597
        %3171 = vmatpush.msra.mxu0 %v2593
        %3172 = vmatpush.msra.mxu0 %v2589
        %3173 = vmatpush.msra.mxu0 %v2585
        %3174 = vmatpush.msra.mxu0 %v2581
        %3175 = vmatpush.msra.mxu0 %v2577
        %3176 = vmatpush.msra.mxu0 %v2573
        %3177 = vmatpush.msra.mxu0 %v2569
        %3178 = vmatpush.msra.mxu0 %v2565
        %3179 = vmatpush.msra.mxu0 %v2561
        %3180 = vmatpush.msra.mxu0 %v2557
        %3181 = vmatpush.msra.mxu0 %v2553
        %3182 = vmatpush.msra.mxu0 %v2549
        %3183 = vmatpush.msra.mxu0 %v2545
        %3184 = vmatpush.msra.mxu0 %v2541
        %3185 = vmatmul.f32.gmra.mxu0 %v2955
        %v3186 = vpop.f32.mrf.mxu0
        %v3187 = vadd.f32 %v3158, %v3186
        %3188 = vmatmul.f32.gmra.mxu0 %v2958
        %v3189 = vpop.f32.mrf.mxu0
        %v3190 = vadd.f32 %v3161, %v3189
        %3191 = vmatmul.f32.gmra.mxu0 %v2961
        %v3192 = vpop.f32.mrf.mxu0
        %v3193 = vadd.f32 %v3164, %v3192
        %3194 = vmatmul.f32.gmra.mxu0 %v2964
        %v3195 = vpop.f32.mrf.mxu0
        %v3196 = vadd.f32 %v3167, %v3195
        %3197 = vdwg.mxu0
        %v3198 = vld [vmem:[#allocation20] sm:$0xff]
        %v3199 = vld [vmem:[#allocation20 + $0x8] sm:$0xff]
        %v3200 = vld [vmem:[#allocation20 + $0x10] sm:$0xff]
        %v3201 = vld [vmem:[#allocation20 + $0x18] sm:$0xff]
        %v3202 = vld [vmem:[#allocation20 + $0x20] sm:$0xff]
        %v3203 = vld [vmem:[#allocation20 + $0x28] sm:$0xff]
        %v3204 = vld [vmem:[#allocation20 + $0x30] sm:$0xff]
        %v3205 = vld [vmem:[#allocation20 + $0x38] sm:$0xff]
        %v3206 = vld [vmem:[#allocation20 + $0x40] sm:$0xff]
        %v3207 = vld [vmem:[#allocation20 + $0x48] sm:$0xff]
        %v3208 = vld [vmem:[#allocation20 + $0x50] sm:$0xff]
        %v3209 = vld [vmem:[#allocation20 + $0x58] sm:$0xff]
        %v3210 = vld [vmem:[#allocation20 + $0x60] sm:$0xff]
        %v3211 = vld [vmem:[#allocation20 + $0x68] sm:$0xff]
        %v3212 = vld [vmem:[#allocation20 + $0x70] sm:$0xff]
        %v3213 = vld [vmem:[#allocation20 + $0x78] sm:$0xff]
        %vm3214 = vcmp.eq.f32.partialorder %v3013, %v3198
        %vm3215 = vcmp.eq.f32.partialorder %v3071, %v3199
        %vm3216 = vcmp.eq.f32.partialorder %v3129, %v3200
        %vm3217 = vcmp.eq.f32.partialorder %v3187, %v3201
        %vm3218 = vcmp.eq.f32.partialorder %v3016, %v3202
        %vm3219 = vcmp.eq.f32.partialorder %v3074, %v3203
        %vm3220 = vcmp.eq.f32.partialorder %v3132, %v3204
        %vm3221 = vcmp.eq.f32.partialorder %v3190, %v3205
        %vm3222 = vcmp.eq.f32.partialorder %v3019, %v3206
        %vm3223 = vcmp.eq.f32.partialorder %v3077, %v3207
        %vm3224 = vcmp.eq.f32.partialorder %v3135, %v3208
        %vm3225 = vcmp.eq.f32.partialorder %v3193, %v3209
        %vm3226 = vcmp.eq.f32.partialorder %v3022, %v3210
        %vm3227 = vcmp.eq.f32.partialorder %v3080, %v3211
        %vm3228 = vcmp.eq.f32.partialorder %v3138, %v3212
        %vm3229 = vcmp.eq.f32.partialorder %v3196, %v3213
        %v3230 = vsel %vm3214, %v2719, 0.0
        %v3231 = vsel %vm3215, %v2777, 0.0
        %v3232 = vsel %vm3216, %v2835, 0.0
        %v3233 = vsel %vm3217, %v2893, 0.0
        %v3234 = vsel %vm3218, %v2722, 0.0
        %v3235 = vsel %vm3219, %v2780, 0.0
        %v3236 = vsel %vm3220, %v2838, 0.0
        %v3237 = vsel %vm3221, %v2896, 0.0
        %v3238 = vsel %vm3222, %v2725, 0.0
        %v3239 = vsel %vm3223, %v2783, 0.0
        %v3240 = vsel %vm3224, %v2841, 0.0
        %v3241 = vsel %vm3225, %v2899, 0.0
        %v3242 = vsel %vm3226, %v2728, 0.0
        %v3243 = vsel %vm3227, %v2786, 0.0
        %v3244 = vsel %vm3228, %v2844, 0.0
        %v3245 = vsel %vm3229, %v2902, 0.0
        %v3246 = vld [vmem:[%s24] sm:$0xff]
        %v3247 = vld [vmem:[%s24 + $0x8] sm:$0xff]
        %v3248 = vld [vmem:[%s24 + $0x10] sm:$0xff]
        %v3249 = vld [vmem:[%s24 + $0x18] sm:$0xff]
        %v3250 = vld [vmem:[%s24 + $0x20] sm:$0xff]
        %v3251 = vld [vmem:[%s24 + $0x28] sm:$0xff]
        %v3252 = vld [vmem:[%s24 + $0x30] sm:$0xff]
        %v3253 = vld [vmem:[%s24 + $0x38] sm:$0xff]
        %v3254 = vld [vmem:[#allocation29] sm:$0xff]
        %v3255 = vld [vmem:[#allocation29 + $0x8] sm:$0xff]
        %v3256 = vld [vmem:[#allocation29 + $0x10] sm:$0xff]
        %v3257 = vld [vmem:[#allocation29 + $0x18] sm:$0xff]
        %v3258 = vld [vmem:[#allocation29 + $0x20] sm:$0xff]
        %v3259 = vld [vmem:[#allocation29 + $0x28] sm:$0xff]
        %v3260 = vld [vmem:[#allocation29 + $0x30] sm:$0xff]
        %v3261 = vld [vmem:[#allocation29 + $0x38] sm:$0xff]
        %v3262 = vld [vmem:[#allocation29 + $0x40] sm:$0xff]
        %v3263 = vld [vmem:[#allocation29 + $0x48] sm:$0xff]
        %v3264 = vld [vmem:[#allocation29 + $0x50] sm:$0xff]
        %v3265 = vld [vmem:[#allocation29 + $0x58] sm:$0xff]
        %v3266 = vld [vmem:[#allocation29 + $0x60] sm:$0xff]
        %v3267 = vld [vmem:[#allocation29 + $0x68] sm:$0xff]
        %v3268 = vld [vmem:[#allocation29 + $0x70] sm:$0xff]
        %v3269 = vld [vmem:[#allocation29 + $0x78] sm:$0xff]
        %v3270 = vld [vmem:[#allocation29 + $0x80] sm:$0xff]
        %v3271 = vld [vmem:[#allocation29 + $0x88] sm:$0xff]
        %v3272 = vld [vmem:[#allocation29 + $0x90] sm:$0xff]
        %v3273 = vld [vmem:[#allocation29 + $0x98] sm:$0xff]
        %v3274 = vld [vmem:[#allocation29 + $0xa0] sm:$0xff]
        %v3275 = vld [vmem:[#allocation29 + $0xa8] sm:$0xff]
        %v3276 = vld [vmem:[#allocation29 + $0xb0] sm:$0xff]
        %v3277 = vld [vmem:[#allocation29 + $0xb8] sm:$0xff]
        %v3278 = vld [vmem:[#allocation29 + $0xc0] sm:$0xff]
        %v3279 = vld [vmem:[#allocation29 + $0xc8] sm:$0xff]
        %v3280 = vld [vmem:[#allocation29 + $0xd0] sm:$0xff]
        %v3281 = vld [vmem:[#allocation29 + $0xd8] sm:$0xff]
        %v3282 = vld [vmem:[#allocation29 + $0xe0] sm:$0xff]
        %v3283 = vld [vmem:[#allocation29 + $0xe8] sm:$0xff]
        %v3284 = vld [vmem:[#allocation29 + $0xf0] sm:$0xff]
        %v3285 = vld [vmem:[#allocation29 + $0xf8] sm:$0xff]
        %v3286 = vld [vmem:[#allocation29 + $0x100] sm:$0xff]
        %v3287 = vld [vmem:[#allocation29 + $0x108] sm:$0xff]
        %v3288 = vld [vmem:[#allocation29 + $0x110] sm:$0xff]
        %v3289 = vld [vmem:[#allocation29 + $0x118] sm:$0xff]
        %v3290 = vld [vmem:[#allocation29 + $0x120] sm:$0xff]
        %v3291 = vld [vmem:[#allocation29 + $0x128] sm:$0xff]
        %v3292 = vld [vmem:[#allocation29 + $0x130] sm:$0xff]
        %v3293 = vld [vmem:[#allocation29 + $0x138] sm:$0xff]
        %v3294 = vld [vmem:[#allocation29 + $0x140] sm:$0xff]
        %v3295 = vld [vmem:[#allocation29 + $0x148] sm:$0xff]
        %v3296 = vld [vmem:[#allocation29 + $0x150] sm:$0xff]
        %v3297 = vld [vmem:[#allocation29 + $0x158] sm:$0xff]
        %v3298 = vld [vmem:[#allocation29 + $0x160] sm:$0xff]
        %v3299 = vld [vmem:[#allocation29 + $0x168] sm:$0xff]
        %v3300 = vld [vmem:[#allocation29 + $0x170] sm:$0xff]
        %v3301 = vld [vmem:[#allocation29 + $0x178] sm:$0xff]
        %v3302 = vld [vmem:[#allocation29 + $0x180] sm:$0xff]
        %v3303 = vld [vmem:[#allocation29 + $0x188] sm:$0xff]
        %v3304 = vld [vmem:[#allocation29 + $0x190] sm:$0xff]
        %v3305 = vld [vmem:[#allocation29 + $0x198] sm:$0xff]
        %v3306 = vld [vmem:[#allocation29 + $0x1a0] sm:$0xff]
        %v3307 = vld [vmem:[#allocation29 + $0x1a8] sm:$0xff]
        %v3308 = vld [vmem:[#allocation29 + $0x1b0] sm:$0xff]
        %v3309 = vld [vmem:[#allocation29 + $0x1b8] sm:$0xff]
        %v3310 = vld [vmem:[#allocation29 + $0x1c0] sm:$0xff]
        %v3311 = vld [vmem:[#allocation29 + $0x1c8] sm:$0xff]
        %v3312 = vld [vmem:[#allocation29 + $0x1d0] sm:$0xff]
        %v3313 = vld [vmem:[#allocation29 + $0x1d8] sm:$0xff]
        %v3314 = vld [vmem:[#allocation29 + $0x1e0] sm:$0xff]
        %v3315 = vld [vmem:[#allocation29 + $0x1e8] sm:$0xff]
        %v3316 = vld [vmem:[#allocation29 + $0x1f0] sm:$0xff]
        %v3317 = vld [vmem:[#allocation29 + $0x1f8] sm:$0xff]
        %3318 = vmatpush.msra.mxu0 %v3269
        %3319 = vmatpush.msra.mxu0 %v3268
        %3320 = vmatpush.msra.mxu0 %v3267
        %3321 = vmatpush.msra.mxu0 %v3266
        %3322 = vmatpush.msra.mxu0 %v3265
        %3323 = vmatpush.msra.mxu0 %v3264
        %3324 = vmatpush.msra.mxu0 %v3263
        %3325 = vmatpush.msra.mxu0 %v3262
        %3326 = vmatpush.msra.mxu0 %v3261
        %3327 = vmatpush.msra.mxu0 %v3260
        %3328 = vmatpush.msra.mxu0 %v3259
        %3329 = vmatpush.msra.mxu0 %v3258
        %3330 = vmatpush.msra.mxu0 %v3257
        %3331 = vmatpush.msra.mxu0 %v3256
        %3332 = vmatpush.msra.mxu0 %v3255
        %3333 = vmatpush.msra.mxu0 %v3254
        %3334 = vmatmul.f32.gmra.mxu0 %v3230
        %v3335 = vpop.f32.mrf.mxu0
        %v3336 = vadd.f32 0.0, %v3335
        %3337 = vmatmul.f32.gmra.mxu0 %v3234
        %v3338 = vpop.f32.mrf.mxu0
        %v3339 = vadd.f32 0.0, %v3338
        %3340 = vmatmul.f32.gmra.mxu0 %v3238
        %v3341 = vpop.f32.mrf.mxu0
        %v3342 = vadd.f32 0.0, %v3341
        %3343 = vmatmul.f32.gmra.mxu0 %v3242
        %v3344 = vpop.f32.mrf.mxu0
        %v3345 = vadd.f32 0.0, %v3344
        %3346 = vdwg.mxu0
        %3347 = vmatpush.msra.mxu0 %v3285
        %3348 = vmatpush.msra.mxu0 %v3284
        %3349 = vmatpush.msra.mxu0 %v3283
        %3350 = vmatpush.msra.mxu0 %v3282
        %3351 = vmatpush.msra.mxu0 %v3281
        %3352 = vmatpush.msra.mxu0 %v3280
        %3353 = vmatpush.msra.mxu0 %v3279
        %3354 = vmatpush.msra.mxu0 %v3278
        %3355 = vmatpush.msra.mxu0 %v3277
        %3356 = vmatpush.msra.mxu0 %v3276
        %3357 = vmatpush.msra.mxu0 %v3275
        %3358 = vmatpush.msra.mxu0 %v3274
        %3359 = vmatpush.msra.mxu0 %v3273
        %3360 = vmatpush.msra.mxu0 %v3272
        %3361 = vmatpush.msra.mxu0 %v3271
        %3362 = vmatpush.msra.mxu0 %v3270
        %3363 = vmatmul.f32.gmra.mxu0 %v3231
        %v3364 = vpop.f32.mrf.mxu0
        %v3365 = vadd.f32 %v3336, %v3364
        %3366 = vmatmul.f32.gmra.mxu0 %v3235
        %v3367 = vpop.f32.mrf.mxu0
        %v3368 = vadd.f32 %v3339, %v3367
        %3369 = vmatmul.f32.gmra.mxu0 %v3239
        %v3370 = vpop.f32.mrf.mxu0
        %v3371 = vadd.f32 %v3342, %v3370
        %3372 = vmatmul.f32.gmra.mxu0 %v3243
        %v3373 = vpop.f32.mrf.mxu0
        %v3374 = vadd.f32 %v3345, %v3373
        %3375 = vdwg.mxu0
        %3376 = vmatpush.msra.mxu0 %v3301
        %3377 = vmatpush.msra.mxu0 %v3300
        %3378 = vmatpush.msra.mxu0 %v3299
        %3379 = vmatpush.msra.mxu0 %v3298
        %3380 = vmatpush.msra.mxu0 %v3297
        %3381 = vmatpush.msra.mxu0 %v3296
        %3382 = vmatpush.msra.mxu0 %v3295
        %3383 = vmatpush.msra.mxu0 %v3294
        %3384 = vmatpush.msra.mxu0 %v3293
        %3385 = vmatpush.msra.mxu0 %v3292
        %3386 = vmatpush.msra.mxu0 %v3291
        %3387 = vmatpush.msra.mxu0 %v3290
        %3388 = vmatpush.msra.mxu0 %v3289
        %3389 = vmatpush.msra.mxu0 %v3288
        %3390 = vmatpush.msra.mxu0 %v3287
        %3391 = vmatpush.msra.mxu0 %v3286
        %3392 = vmatmul.f32.gmra.mxu0 %v3232
        %v3393 = vpop.f32.mrf.mxu0
        %v3394 = vadd.f32 %v3365, %v3393
        %3395 = vmatmul.f32.gmra.mxu0 %v3236
        %v3396 = vpop.f32.mrf.mxu0
        %v3397 = vadd.f32 %v3368, %v3396
        %3398 = vmatmul.f32.gmra.mxu0 %v3240
        %v3399 = vpop.f32.mrf.mxu0
        %v3400 = vadd.f32 %v3371, %v3399
        %3401 = vmatmul.f32.gmra.mxu0 %v3244
        %v3402 = vpop.f32.mrf.mxu0
        %v3403 = vadd.f32 %v3374, %v3402
        %3404 = vdwg.mxu0
        %3405 = vmatpush.msra.mxu0 %v3317
        %3406 = vmatpush.msra.mxu0 %v3316
        %3407 = vmatpush.msra.mxu0 %v3315
        %3408 = vmatpush.msra.mxu0 %v3314
        %3409 = vmatpush.msra.mxu0 %v3313
        %3410 = vmatpush.msra.mxu0 %v3312
        %3411 = vmatpush.msra.mxu0 %v3311
        %3412 = vmatpush.msra.mxu0 %v3310
        %3413 = vmatpush.msra.mxu0 %v3309
        %3414 = vmatpush.msra.mxu0 %v3308
        %3415 = vmatpush.msra.mxu0 %v3307
        %3416 = vmatpush.msra.mxu0 %v3306
        %3417 = vmatpush.msra.mxu0 %v3305
        %3418 = vmatpush.msra.mxu0 %v3304
        %3419 = vmatpush.msra.mxu0 %v3303
        %3420 = vmatpush.msra.mxu0 %v3302
        %3421 = vmatmul.f32.gmra.mxu0 %v3233
        %v3422 = vpop.f32.mrf.mxu0
        %v3423 = vadd.f32 %v3394, %v3422
        %3424 = vmatmul.f32.gmra.mxu0 %v3237
        %v3425 = vpop.f32.mrf.mxu0
        %v3426 = vadd.f32 %v3397, %v3425
        %3427 = vmatmul.f32.gmra.mxu0 %v3241
        %v3428 = vpop.f32.mrf.mxu0
        %v3429 = vadd.f32 %v3400, %v3428
        %3430 = vmatmul.f32.gmra.mxu0 %v3245
        %v3431 = vpop.f32.mrf.mxu0
        %v3432 = vadd.f32 %v3403, %v3431
        %3433 = vdwg.mxu0
        %s3434 = scalar_lea.vmem %s24, 64
        %v3435 = vld [vmem:[%s3434] sm:$0xff]
        %v3436 = vld [vmem:[%s3434 + $0x8] sm:$0xff]
        %v3437 = vld [vmem:[%s3434 + $0x10] sm:$0xff]
        %v3438 = vld [vmem:[%s3434 + $0x18] sm:$0xff]
        %v3439 = vld [vmem:[%s3434 + $0x20] sm:$0xff]
        %v3440 = vld [vmem:[%s3434 + $0x28] sm:$0xff]
        %v3441 = vld [vmem:[%s3434 + $0x30] sm:$0xff]
        %v3442 = vld [vmem:[%s3434 + $0x38] sm:$0xff]
        %s3443 = scalar_lea.vmem [#allocation29], 512
        %v3444 = vld [vmem:[%s3443] sm:$0xff]
        %v3445 = vld [vmem:[%s3443 + $0x8] sm:$0xff]
        %v3446 = vld [vmem:[%s3443 + $0x10] sm:$0xff]
        %v3447 = vld [vmem:[%s3443 + $0x18] sm:$0xff]
        %v3448 = vld [vmem:[%s3443 + $0x20] sm:$0xff]
        %v3449 = vld [vmem:[%s3443 + $0x28] sm:$0xff]
        %v3450 = vld [vmem:[%s3443 + $0x30] sm:$0xff]
        %v3451 = vld [vmem:[%s3443 + $0x38] sm:$0xff]
        %v3452 = vld [vmem:[%s3443 + $0x40] sm:$0xff]
        %v3453 = vld [vmem:[%s3443 + $0x48] sm:$0xff]
        %v3454 = vld [vmem:[%s3443 + $0x50] sm:$0xff]
        %v3455 = vld [vmem:[%s3443 + $0x58] sm:$0xff]
        %v3456 = vld [vmem:[%s3443 + $0x60] sm:$0xff]
        %v3457 = vld [vmem:[%s3443 + $0x68] sm:$0xff]
        %v3458 = vld [vmem:[%s3443 + $0x70] sm:$0xff]
        %v3459 = vld [vmem:[%s3443 + $0x78] sm:$0xff]
        %v3460 = vld [vmem:[%s3443 + $0x80] sm:$0xff]
        %v3461 = vld [vmem:[%s3443 + $0x88] sm:$0xff]
        %v3462 = vld [vmem:[%s3443 + $0x90] sm:$0xff]
        %v3463 = vld [vmem:[%s3443 + $0x98] sm:$0xff]
        %v3464 = vld [vmem:[%s3443 + $0xa0] sm:$0xff]
        %v3465 = vld [vmem:[%s3443 + $0xa8] sm:$0xff]
        %v3466 = vld [vmem:[%s3443 + $0xb0] sm:$0xff]
        %v3467 = vld [vmem:[%s3443 + $0xb8] sm:$0xff]
        %v3468 = vld [vmem:[%s3443 + $0xc0] sm:$0xff]
        %v3469 = vld [vmem:[%s3443 + $0xc8] sm:$0xff]
        %v3470 = vld [vmem:[%s3443 + $0xd0] sm:$0xff]
        %v3471 = vld [vmem:[%s3443 + $0xd8] sm:$0xff]
        %v3472 = vld [vmem:[%s3443 + $0xe0] sm:$0xff]
        %v3473 = vld [vmem:[%s3443 + $0xe8] sm:$0xff]
        %v3474 = vld [vmem:[%s3443 + $0xf0] sm:$0xff]
        %v3475 = vld [vmem:[%s3443 + $0xf8] sm:$0xff]
        %v3476 = vld [vmem:[%s3443 + $0x100] sm:$0xff]
        %v3477 = vld [vmem:[%s3443 + $0x108] sm:$0xff]
        %v3478 = vld [vmem:[%s3443 + $0x110] sm:$0xff]
        %v3479 = vld [vmem:[%s3443 + $0x118] sm:$0xff]
        %v3480 = vld [vmem:[%s3443 + $0x120] sm:$0xff]
        %v3481 = vld [vmem:[%s3443 + $0x128] sm:$0xff]
        %v3482 = vld [vmem:[%s3443 + $0x130] sm:$0xff]
        %v3483 = vld [vmem:[%s3443 + $0x138] sm:$0xff]
        %v3484 = vld [vmem:[%s3443 + $0x140] sm:$0xff]
        %v3485 = vld [vmem:[%s3443 + $0x148] sm:$0xff]
        %v3486 = vld [vmem:[%s3443 + $0x150] sm:$0xff]
        %v3487 = vld [vmem:[%s3443 + $0x158] sm:$0xff]
        %v3488 = vld [vmem:[%s3443 + $0x160] sm:$0xff]
        %v3489 = vld [vmem:[%s3443 + $0x168] sm:$0xff]
        %v3490 = vld [vmem:[%s3443 + $0x170] sm:$0xff]
        %v3491 = vld [vmem:[%s3443 + $0x178] sm:$0xff]
        %v3492 = vld [vmem:[%s3443 + $0x180] sm:$0xff]
        %v3493 = vld [vmem:[%s3443 + $0x188] sm:$0xff]
        %v3494 = vld [vmem:[%s3443 + $0x190] sm:$0xff]
        %v3495 = vld [vmem:[%s3443 + $0x198] sm:$0xff]
        %v3496 = vld [vmem:[%s3443 + $0x1a0] sm:$0xff]
        %v3497 = vld [vmem:[%s3443 + $0x1a8] sm:$0xff]
        %v3498 = vld [vmem:[%s3443 + $0x1b0] sm:$0xff]
        %v3499 = vld [vmem:[%s3443 + $0x1b8] sm:$0xff]
        %v3500 = vld [vmem:[%s3443 + $0x1c0] sm:$0xff]
        %v3501 = vld [vmem:[%s3443 + $0x1c8] sm:$0xff]
        %v3502 = vld [vmem:[%s3443 + $0x1d0] sm:$0xff]
        %v3503 = vld [vmem:[%s3443 + $0x1d8] sm:$0xff]
        %v3504 = vld [vmem:[%s3443 + $0x1e0] sm:$0xff]
        %v3505 = vld [vmem:[%s3443 + $0x1e8] sm:$0xff]
        %v3506 = vld [vmem:[%s3443 + $0x1f0] sm:$0xff]
        %v3507 = vld [vmem:[%s3443 + $0x1f8] sm:$0xff]
        %3508 = vmatpush.msra.mxu0 %v3459
        %3509 = vmatpush.msra.mxu0 %v3458
        %3510 = vmatpush.msra.mxu0 %v3457
        %3511 = vmatpush.msra.mxu0 %v3456
        %3512 = vmatpush.msra.mxu0 %v3455
        %3513 = vmatpush.msra.mxu0 %v3454
        %3514 = vmatpush.msra.mxu0 %v3453
        %3515 = vmatpush.msra.mxu0 %v3452
        %3516 = vmatpush.msra.mxu0 %v3451
        %3517 = vmatpush.msra.mxu0 %v3450
        %3518 = vmatpush.msra.mxu0 %v3449
        %3519 = vmatpush.msra.mxu0 %v3448
        %3520 = vmatpush.msra.mxu0 %v3447
        %3521 = vmatpush.msra.mxu0 %v3446
        %3522 = vmatpush.msra.mxu0 %v3445
        %3523 = vmatpush.msra.mxu0 %v3444
        %3524 = vmatmul.f32.gmra.mxu0 %v3230
        %v3525 = vpop.f32.mrf.mxu0
        %v3526 = vadd.f32 0.0, %v3525
        %3527 = vmatmul.f32.gmra.mxu0 %v3234
        %v3528 = vpop.f32.mrf.mxu0
        %v3529 = vadd.f32 0.0, %v3528
        %3530 = vmatmul.f32.gmra.mxu0 %v3238
        %v3531 = vpop.f32.mrf.mxu0
        %v3532 = vadd.f32 0.0, %v3531
        %3533 = vmatmul.f32.gmra.mxu0 %v3242
        %v3534 = vpop.f32.mrf.mxu0
        %v3535 = vadd.f32 0.0, %v3534
        %3536 = vdwg.mxu0
        %3537 = vmatpush.msra.mxu0 %v3475
        %3538 = vmatpush.msra.mxu0 %v3474
        %3539 = vmatpush.msra.mxu0 %v3473
        %3540 = vmatpush.msra.mxu0 %v3472
        %3541 = vmatpush.msra.mxu0 %v3471
        %3542 = vmatpush.msra.mxu0 %v3470
        %3543 = vmatpush.msra.mxu0 %v3469
        %3544 = vmatpush.msra.mxu0 %v3468
        %3545 = vmatpush.msra.mxu0 %v3467
        %3546 = vmatpush.msra.mxu0 %v3466
        %3547 = vmatpush.msra.mxu0 %v3465
        %3548 = vmatpush.msra.mxu0 %v3464
        %3549 = vmatpush.msra.mxu0 %v3463
        %3550 = vmatpush.msra.mxu0 %v3462
        %3551 = vmatpush.msra.mxu0 %v3461
        %3552 = vmatpush.msra.mxu0 %v3460
        %3553 = vmatmul.f32.gmra.mxu0 %v3231
        %v3554 = vpop.f32.mrf.mxu0
        %v3555 = vadd.f32 %v3526, %v3554
        %3556 = vmatmul.f32.gmra.mxu0 %v3235
        %v3557 = vpop.f32.mrf.mxu0
        %v3558 = vadd.f32 %v3529, %v3557
        %3559 = vmatmul.f32.gmra.mxu0 %v3239
        %v3560 = vpop.f32.mrf.mxu0
        %v3561 = vadd.f32 %v3532, %v3560
        %3562 = vmatmul.f32.gmra.mxu0 %v3243
        %v3563 = vpop.f32.mrf.mxu0
        %v3564 = vadd.f32 %v3535, %v3563
        %3565 = vdwg.mxu0
        %3566 = vmatpush.msra.mxu0 %v3491
        %3567 = vmatpush.msra.mxu0 %v3490
        %3568 = vmatpush.msra.mxu0 %v3489
        %3569 = vmatpush.msra.mxu0 %v3488
        %3570 = vmatpush.msra.mxu0 %v3487
        %3571 = vmatpush.msra.mxu0 %v3486
        %3572 = vmatpush.msra.mxu0 %v3485
        %3573 = vmatpush.msra.mxu0 %v3484
        %3574 = vmatpush.msra.mxu0 %v3483
        %3575 = vmatpush.msra.mxu0 %v3482
        %3576 = vmatpush.msra.mxu0 %v3481
        %3577 = vmatpush.msra.mxu0 %v3480
        %3578 = vmatpush.msra.mxu0 %v3479
        %3579 = vmatpush.msra.mxu0 %v3478
        %3580 = vmatpush.msra.mxu0 %v3477
        %3581 = vmatpush.msra.mxu0 %v3476
        %3582 = vmatmul.f32.gmra.mxu0 %v3232
        %v3583 = vpop.f32.mrf.mxu0
        %v3584 = vadd.f32 %v3555, %v3583
        %3585 = vmatmul.f32.gmra.mxu0 %v3236
        %v3586 = vpop.f32.mrf.mxu0
        %v3587 = vadd.f32 %v3558, %v3586
        %3588 = vmatmul.f32.gmra.mxu0 %v3240
        %v3589 = vpop.f32.mrf.mxu0
        %v3590 = vadd.f32 %v3561, %v3589
        %3591 = vmatmul.f32.gmra.mxu0 %v3244
        %v3592 = vpop.f32.mrf.mxu0
        %v3593 = vadd.f32 %v3564, %v3592
        %3594 = vdwg.mxu0
        %3595 = vmatpush.msra.mxu0 %v3507
        %3596 = vmatpush.msra.mxu0 %v3506
        %3597 = vmatpush.msra.mxu0 %v3505
        %3598 = vmatpush.msra.mxu0 %v3504
        %3599 = vmatpush.msra.mxu0 %v3503
        %3600 = vmatpush.msra.mxu0 %v3502
        %3601 = vmatpush.msra.mxu0 %v3501
        %3602 = vmatpush.msra.mxu0 %v3500
        %3603 = vmatpush.msra.mxu0 %v3499
        %3604 = vmatpush.msra.mxu0 %v3498
        %3605 = vmatpush.msra.mxu0 %v3497
        %3606 = vmatpush.msra.mxu0 %v3496
        %3607 = vmatpush.msra.mxu0 %v3495
        %3608 = vmatpush.msra.mxu0 %v3494
        %3609 = vmatpush.msra.mxu0 %v3493
        %3610 = vmatpush.msra.mxu0 %v3492
        %3611 = vmatmul.f32.gmra.mxu0 %v3233
        %v3612 = vpop.f32.mrf.mxu0
        %v3613 = vadd.f32 %v3584, %v3612
        %3614 = vmatmul.f32.gmra.mxu0 %v3237
        %v3615 = vpop.f32.mrf.mxu0
        %v3616 = vadd.f32 %v3587, %v3615
        %3617 = vmatmul.f32.gmra.mxu0 %v3241
        %v3618 = vpop.f32.mrf.mxu0
        %v3619 = vadd.f32 %v3590, %v3618
        %3620 = vmatmul.f32.gmra.mxu0 %v3245
        %v3621 = vpop.f32.mrf.mxu0
        %v3622 = vadd.f32 %v3593, %v3621
        %3623 = vdwg.mxu0
        %v3625 = vsel %vm1204, %v3435, 0
        %v3628 = vsel %vm1204, %v3436, 0
        %v3631 = vsel %vm1204, %v3437, 0
        %v3634 = vsel %vm1204, %v3438, 0
        %v3637 = vsel %vm1204, %v3439, 0
        %v3640 = vsel %vm1204, %v3440, 0
        %v3643 = vsel %vm1204, %v3441, 0
        %v3646 = vsel %vm1204, %v3442, 0
        %3648 = vmatpush.msra.mxu0 0.0
        %3649 = vmatpush.msra.mxu0 0.0
        %3650 = vmatpush.msra.mxu0 0.0
        %3651 = vmatpush.msra.mxu0 0.0
        %3652 = vmatpush.msra.mxu0 0.0
        %3653 = vmatpush.msra.mxu0 0.0
        %3654 = vmatpush.msra.mxu0 0.0
        %3655 = vmatpush.msra.mxu0 0.0
        %3656 = vmatpush.msra.mxu0 0.0
        %3657 = vmatpush.msra.mxu0 0.0
        %3658 = vmatpush.msra.mxu0 0.0
        %3659 = vmatpush.msra.mxu0 0.0
        %3660 = vmatpush.msra.mxu0 %v3622
        %3661 = vmatpush.msra.mxu0 %v3619
        %3662 = vmatpush.msra.mxu0 %v3616
        %3663 = vmatpush.msra.mxu0 %v3613
        %3664 = vmatmul.f32.gmra.mxu0 %v3625
        %v3665 = vpop.f32.mrf.mxu0
        %v3666 = vadd.f32 0.0, %v3665
        %3667 = vmatmul.f32.gmra.mxu0 %v3628
        %v3668 = vpop.f32.mrf.mxu0
        %v3669 = vadd.f32 0.0, %v3668
        %3670 = vmatmul.f32.gmra.mxu0 %v3631
        %v3671 = vpop.f32.mrf.mxu0
        %v3672 = vadd.f32 0.0, %v3671
        %3673 = vmatmul.f32.gmra.mxu0 %v3634
        %v3674 = vpop.f32.mrf.mxu0
        %v3675 = vadd.f32 0.0, %v3674
        %3676 = vmatmul.f32.gmra.mxu0 %v3637
        %v3677 = vpop.f32.mrf.mxu0
        %v3678 = vadd.f32 0.0, %v3677
        %3679 = vmatmul.f32.gmra.mxu0 %v3640
        %v3680 = vpop.f32.mrf.mxu0
        %v3681 = vadd.f32 0.0, %v3680
        %3682 = vmatmul.f32.gmra.mxu0 %v3643
        %v3683 = vpop.f32.mrf.mxu0
        %v3684 = vadd.f32 0.0, %v3683
        %3685 = vmatmul.f32.gmra.mxu0 %v3646
        %v3686 = vpop.f32.mrf.mxu0
        %v3687 = vadd.f32 0.0, %v3686
        %3688 = vdwg.mxu0
        %v3690 = vsel %vm1204, %v3246, 0
        %v3693 = vsel %vm1204, %v3247, 0
        %v3696 = vsel %vm1204, %v3248, 0
        %v3699 = vsel %vm1204, %v3249, 0
        %v3702 = vsel %vm1204, %v3250, 0
        %v3705 = vsel %vm1204, %v3251, 0
        %v3708 = vsel %vm1204, %v3252, 0
        %v3711 = vsel %vm1204, %v3253, 0
        %3713 = vmatpush.msra.mxu0 0.0
        %3714 = vmatpush.msra.mxu0 0.0
        %3715 = vmatpush.msra.mxu0 0.0
        %3716 = vmatpush.msra.mxu0 0.0
        %3717 = vmatpush.msra.mxu0 0.0
        %3718 = vmatpush.msra.mxu0 0.0
        %3719 = vmatpush.msra.mxu0 0.0
        %3720 = vmatpush.msra.mxu0 0.0
        %3721 = vmatpush.msra.mxu0 0.0
        %3722 = vmatpush.msra.mxu0 0.0
        %3723 = vmatpush.msra.mxu0 0.0
        %3724 = vmatpush.msra.mxu0 0.0
        %3725 = vmatpush.msra.mxu0 %v3432
        %3726 = vmatpush.msra.mxu0 %v3429
        %3727 = vmatpush.msra.mxu0 %v3426
        %3728 = vmatpush.msra.mxu0 %v3423
        %3729 = vmatmul.f32.gmra.mxu0 %v3690
        %v3730 = vpop.f32.mrf.mxu0
        %v3731 = vadd.f32 %v3666, %v3730
        %3732 = vmatmul.f32.gmra.mxu0 %v3693
        %v3733 = vpop.f32.mrf.mxu0
        %v3734 = vadd.f32 %v3669, %v3733
        %3735 = vmatmul.f32.gmra.mxu0 %v3696
        %v3736 = vpop.f32.mrf.mxu0
        %v3737 = vadd.f32 %v3672, %v3736
        %3738 = vmatmul.f32.gmra.mxu0 %v3699
        %v3739 = vpop.f32.mrf.mxu0
        %v3740 = vadd.f32 %v3675, %v3739
        %3741 = vmatmul.f32.gmra.mxu0 %v3702
        %v3742 = vpop.f32.mrf.mxu0
        %v3743 = vadd.f32 %v3678, %v3742
        %3744 = vmatmul.f32.gmra.mxu0 %v3705
        %v3745 = vpop.f32.mrf.mxu0
        %v3746 = vadd.f32 %v3681, %v3745
        %3747 = vmatmul.f32.gmra.mxu0 %v3708
        %v3748 = vpop.f32.mrf.mxu0
        %v3749 = vadd.f32 %v3684, %v3748
        %3750 = vmatmul.f32.gmra.mxu0 %v3711
        %v3751 = vpop.f32.mrf.mxu0
        %v3752 = vadd.f32 %v3687, %v3751
        %3753 = vdwg.mxu0
        %s3754 = scalar_lea.vmem %s24, 128
        %v3755 = vld [vmem:[%s3754] sm:$0xff]
        %v3756 = vld [vmem:[%s3754 + $0x8] sm:$0xff]
        %v3757 = vld [vmem:[%s3754 + $0x10] sm:$0xff]
        %v3758 = vld [vmem:[%s3754 + $0x18] sm:$0xff]
        %v3759 = vld [vmem:[%s3754 + $0x20] sm:$0xff]
        %v3760 = vld [vmem:[%s3754 + $0x28] sm:$0xff]
        %v3761 = vld [vmem:[%s3754 + $0x30] sm:$0xff]
        %v3762 = vld [vmem:[%s3754 + $0x38] sm:$0xff]
        %s3763 = scalar_lea.vmem [#allocation29], 1024
        %v3764 = vld [vmem:[%s3763] sm:$0xff]
        %v3765 = vld [vmem:[%s3763 + $0x8] sm:$0xff]
        %v3766 = vld [vmem:[%s3763 + $0x10] sm:$0xff]
        %v3767 = vld [vmem:[%s3763 + $0x18] sm:$0xff]
        %v3768 = vld [vmem:[%s3763 + $0x20] sm:$0xff]
        %v3769 = vld [vmem:[%s3763 + $0x28] sm:$0xff]
        %v3770 = vld [vmem:[%s3763 + $0x30] sm:$0xff]
        %v3771 = vld [vmem:[%s3763 + $0x38] sm:$0xff]
        %v3772 = vld [vmem:[%s3763 + $0x40] sm:$0xff]
        %v3773 = vld [vmem:[%s3763 + $0x48] sm:$0xff]
        %v3774 = vld [vmem:[%s3763 + $0x50] sm:$0xff]
        %v3775 = vld [vmem:[%s3763 + $0x58] sm:$0xff]
        %v3776 = vld [vmem:[%s3763 + $0x60] sm:$0xff]
        %v3777 = vld [vmem:[%s3763 + $0x68] sm:$0xff]
        %v3778 = vld [vmem:[%s3763 + $0x70] sm:$0xff]
        %v3779 = vld [vmem:[%s3763 + $0x78] sm:$0xff]
        %v3780 = vld [vmem:[%s3763 + $0x80] sm:$0xff]
        %v3781 = vld [vmem:[%s3763 + $0x88] sm:$0xff]
        %v3782 = vld [vmem:[%s3763 + $0x90] sm:$0xff]
        %v3783 = vld [vmem:[%s3763 + $0x98] sm:$0xff]
        %v3784 = vld [vmem:[%s3763 + $0xa0] sm:$0xff]
        %v3785 = vld [vmem:[%s3763 + $0xa8] sm:$0xff]
        %v3786 = vld [vmem:[%s3763 + $0xb0] sm:$0xff]
        %v3787 = vld [vmem:[%s3763 + $0xb8] sm:$0xff]
        %v3788 = vld [vmem:[%s3763 + $0xc0] sm:$0xff]
        %v3789 = vld [vmem:[%s3763 + $0xc8] sm:$0xff]
        %v3790 = vld [vmem:[%s3763 + $0xd0] sm:$0xff]
        %v3791 = vld [vmem:[%s3763 + $0xd8] sm:$0xff]
        %v3792 = vld [vmem:[%s3763 + $0xe0] sm:$0xff]
        %v3793 = vld [vmem:[%s3763 + $0xe8] sm:$0xff]
        %v3794 = vld [vmem:[%s3763 + $0xf0] sm:$0xff]
        %v3795 = vld [vmem:[%s3763 + $0xf8] sm:$0xff]
        %v3796 = vld [vmem:[%s3763 + $0x100] sm:$0xff]
        %v3797 = vld [vmem:[%s3763 + $0x108] sm:$0xff]
        %v3798 = vld [vmem:[%s3763 + $0x110] sm:$0xff]
        %v3799 = vld [vmem:[%s3763 + $0x118] sm:$0xff]
        %v3800 = vld [vmem:[%s3763 + $0x120] sm:$0xff]
        %v3801 = vld [vmem:[%s3763 + $0x128] sm:$0xff]
        %v3802 = vld [vmem:[%s3763 + $0x130] sm:$0xff]
        %v3803 = vld [vmem:[%s3763 + $0x138] sm:$0xff]
        %v3804 = vld [vmem:[%s3763 + $0x140] sm:$0xff]
        %v3805 = vld [vmem:[%s3763 + $0x148] sm:$0xff]
        %v3806 = vld [vmem:[%s3763 + $0x150] sm:$0xff]
        %v3807 = vld [vmem:[%s3763 + $0x158] sm:$0xff]
        %v3808 = vld [vmem:[%s3763 + $0x160] sm:$0xff]
        %v3809 = vld [vmem:[%s3763 + $0x168] sm:$0xff]
        %v3810 = vld [vmem:[%s3763 + $0x170] sm:$0xff]
        %v3811 = vld [vmem:[%s3763 + $0x178] sm:$0xff]
        %v3812 = vld [vmem:[%s3763 + $0x180] sm:$0xff]
        %v3813 = vld [vmem:[%s3763 + $0x188] sm:$0xff]
        %v3814 = vld [vmem:[%s3763 + $0x190] sm:$0xff]
        %v3815 = vld [vmem:[%s3763 + $0x198] sm:$0xff]
        %v3816 = vld [vmem:[%s3763 + $0x1a0] sm:$0xff]
        %v3817 = vld [vmem:[%s3763 + $0x1a8] sm:$0xff]
        %v3818 = vld [vmem:[%s3763 + $0x1b0] sm:$0xff]
        %v3819 = vld [vmem:[%s3763 + $0x1b8] sm:$0xff]
        %v3820 = vld [vmem:[%s3763 + $0x1c0] sm:$0xff]
        %v3821 = vld [vmem:[%s3763 + $0x1c8] sm:$0xff]
        %v3822 = vld [vmem:[%s3763 + $0x1d0] sm:$0xff]
        %v3823 = vld [vmem:[%s3763 + $0x1d8] sm:$0xff]
        %v3824 = vld [vmem:[%s3763 + $0x1e0] sm:$0xff]
        %v3825 = vld [vmem:[%s3763 + $0x1e8] sm:$0xff]
        %v3826 = vld [vmem:[%s3763 + $0x1f0] sm:$0xff]
        %v3827 = vld [vmem:[%s3763 + $0x1f8] sm:$0xff]
        %3828 = vmatpush.msra.mxu0 %v3779
        %3829 = vmatpush.msra.mxu0 %v3778
        %3830 = vmatpush.msra.mxu0 %v3777
        %3831 = vmatpush.msra.mxu0 %v3776
        %3832 = vmatpush.msra.mxu0 %v3775
        %3833 = vmatpush.msra.mxu0 %v3774
        %3834 = vmatpush.msra.mxu0 %v3773
        %3835 = vmatpush.msra.mxu0 %v3772
        %3836 = vmatpush.msra.mxu0 %v3771
        %3837 = vmatpush.msra.mxu0 %v3770
        %3838 = vmatpush.msra.mxu0 %v3769
        %3839 = vmatpush.msra.mxu0 %v3768
        %3840 = vmatpush.msra.mxu0 %v3767
        %3841 = vmatpush.msra.mxu0 %v3766
        %3842 = vmatpush.msra.mxu0 %v3765
        %3843 = vmatpush.msra.mxu0 %v3764
        %3844 = vmatmul.f32.gmra.mxu0 %v3230
        %v3845 = vpop.f32.mrf.mxu0
        %v3846 = vadd.f32 0.0, %v3845
        %3847 = vmatmul.f32.gmra.mxu0 %v3234
        %v3848 = vpop.f32.mrf.mxu0
        %v3849 = vadd.f32 0.0, %v3848
        %3850 = vmatmul.f32.gmra.mxu0 %v3238
        %v3851 = vpop.f32.mrf.mxu0
        %v3852 = vadd.f32 0.0, %v3851
        %3853 = vmatmul.f32.gmra.mxu0 %v3242
        %v3854 = vpop.f32.mrf.mxu0
        %v3855 = vadd.f32 0.0, %v3854
        %3856 = vdwg.mxu0
        %3857 = vmatpush.msra.mxu0 %v3795
        %3858 = vmatpush.msra.mxu0 %v3794
        %3859 = vmatpush.msra.mxu0 %v3793
        %3860 = vmatpush.msra.mxu0 %v3792
        %3861 = vmatpush.msra.mxu0 %v3791
        %3862 = vmatpush.msra.mxu0 %v3790
        %3863 = vmatpush.msra.mxu0 %v3789
        %3864 = vmatpush.msra.mxu0 %v3788
        %3865 = vmatpush.msra.mxu0 %v3787
        %3866 = vmatpush.msra.mxu0 %v3786
        %3867 = vmatpush.msra.mxu0 %v3785
        %3868 = vmatpush.msra.mxu0 %v3784
        %3869 = vmatpush.msra.mxu0 %v3783
        %3870 = vmatpush.msra.mxu0 %v3782
        %3871 = vmatpush.msra.mxu0 %v3781
        %3872 = vmatpush.msra.mxu0 %v3780
        %3873 = vmatmul.f32.gmra.mxu0 %v3231
        %v3874 = vpop.f32.mrf.mxu0
        %v3875 = vadd.f32 %v3846, %v3874
        %3876 = vmatmul.f32.gmra.mxu0 %v3235
        %v3877 = vpop.f32.mrf.mxu0
        %v3878 = vadd.f32 %v3849, %v3877
        %3879 = vmatmul.f32.gmra.mxu0 %v3239
        %v3880 = vpop.f32.mrf.mxu0
        %v3881 = vadd.f32 %v3852, %v3880
        %3882 = vmatmul.f32.gmra.mxu0 %v3243
        %v3883 = vpop.f32.mrf.mxu0
        %v3884 = vadd.f32 %v3855, %v3883
        %3885 = vdwg.mxu0
        %3886 = vmatpush.msra.mxu0 %v3811
        %3887 = vmatpush.msra.mxu0 %v3810
        %3888 = vmatpush.msra.mxu0 %v3809
        %3889 = vmatpush.msra.mxu0 %v3808
        %3890 = vmatpush.msra.mxu0 %v3807
        %3891 = vmatpush.msra.mxu0 %v3806
        %3892 = vmatpush.msra.mxu0 %v3805
        %3893 = vmatpush.msra.mxu0 %v3804
        %3894 = vmatpush.msra.mxu0 %v3803
        %3895 = vmatpush.msra.mxu0 %v3802
        %3896 = vmatpush.msra.mxu0 %v3801
        %3897 = vmatpush.msra.mxu0 %v3800
        %3898 = vmatpush.msra.mxu0 %v3799
        %3899 = vmatpush.msra.mxu0 %v3798
        %3900 = vmatpush.msra.mxu0 %v3797
        %3901 = vmatpush.msra.mxu0 %v3796
        %3902 = vmatmul.f32.gmra.mxu0 %v3232
        %v3903 = vpop.f32.mrf.mxu0
        %v3904 = vadd.f32 %v3875, %v3903
        %3905 = vmatmul.f32.gmra.mxu0 %v3236
        %v3906 = vpop.f32.mrf.mxu0
        %v3907 = vadd.f32 %v3878, %v3906
        %3908 = vmatmul.f32.gmra.mxu0 %v3240
        %v3909 = vpop.f32.mrf.mxu0
        %v3910 = vadd.f32 %v3881, %v3909
        %3911 = vmatmul.f32.gmra.mxu0 %v3244
        %v3912 = vpop.f32.mrf.mxu0
        %v3913 = vadd.f32 %v3884, %v3912
        %3914 = vdwg.mxu0
        %3915 = vmatpush.msra.mxu0 %v3827
        %3916 = vmatpush.msra.mxu0 %v3826
        %3917 = vmatpush.msra.mxu0 %v3825
        %3918 = vmatpush.msra.mxu0 %v3824
        %3919 = vmatpush.msra.mxu0 %v3823
        %3920 = vmatpush.msra.mxu0 %v3822
        %3921 = vmatpush.msra.mxu0 %v3821
        %3922 = vmatpush.msra.mxu0 %v3820
        %3923 = vmatpush.msra.mxu0 %v3819
        %3924 = vmatpush.msra.mxu0 %v3818
        %3925 = vmatpush.msra.mxu0 %v3817
        %3926 = vmatpush.msra.mxu0 %v3816
        %3927 = vmatpush.msra.mxu0 %v3815
        %3928 = vmatpush.msra.mxu0 %v3814
        %3929 = vmatpush.msra.mxu0 %v3813
        %3930 = vmatpush.msra.mxu0 %v3812
        %3931 = vmatmul.f32.gmra.mxu0 %v3233
        %v3932 = vpop.f32.mrf.mxu0
        %v3933 = vadd.f32 %v3904, %v3932
        %3934 = vmatmul.f32.gmra.mxu0 %v3237
        %v3935 = vpop.f32.mrf.mxu0
        %v3936 = vadd.f32 %v3907, %v3935
        %3937 = vmatmul.f32.gmra.mxu0 %v3241
        %v3938 = vpop.f32.mrf.mxu0
        %v3939 = vadd.f32 %v3910, %v3938
        %3940 = vmatmul.f32.gmra.mxu0 %v3245
        %v3941 = vpop.f32.mrf.mxu0
        %v3942 = vadd.f32 %v3913, %v3941
        %3943 = vdwg.mxu0
        %v3945 = vsel %vm1204, %v3755, 0
        %v3948 = vsel %vm1204, %v3756, 0
        %v3951 = vsel %vm1204, %v3757, 0
        %v3954 = vsel %vm1204, %v3758, 0
        %v3957 = vsel %vm1204, %v3759, 0
        %v3960 = vsel %vm1204, %v3760, 0
        %v3963 = vsel %vm1204, %v3761, 0
        %v3966 = vsel %vm1204, %v3762, 0
        %3968 = vmatpush.msra.mxu0 0.0
        %3969 = vmatpush.msra.mxu0 0.0
        %3970 = vmatpush.msra.mxu0 0.0
        %3971 = vmatpush.msra.mxu0 0.0
        %3972 = vmatpush.msra.mxu0 0.0
        %3973 = vmatpush.msra.mxu0 0.0
        %3974 = vmatpush.msra.mxu0 0.0
        %3975 = vmatpush.msra.mxu0 0.0
        %3976 = vmatpush.msra.mxu0 0.0
        %3977 = vmatpush.msra.mxu0 0.0
        %3978 = vmatpush.msra.mxu0 0.0
        %3979 = vmatpush.msra.mxu0 0.0
        %3980 = vmatpush.msra.mxu0 %v3942
        %3981 = vmatpush.msra.mxu0 %v3939
        %3982 = vmatpush.msra.mxu0 %v3936
        %3983 = vmatpush.msra.mxu0 %v3933
        %3984 = vmatmul.f32.gmra.mxu0 %v3945
        %v3985 = vpop.f32.mrf.mxu0
        %v3986 = vadd.f32 0.0, %v3985
        %3987 = vmatmul.f32.gmra.mxu0 %v3948
        %v3988 = vpop.f32.mrf.mxu0
        %v3989 = vadd.f32 0.0, %v3988
        %3990 = vmatmul.f32.gmra.mxu0 %v3951
        %v3991 = vpop.f32.mrf.mxu0
        %v3992 = vadd.f32 0.0, %v3991
        %3993 = vmatmul.f32.gmra.mxu0 %v3954
        %v3994 = vpop.f32.mrf.mxu0
        %v3995 = vadd.f32 0.0, %v3994
        %3996 = vmatmul.f32.gmra.mxu0 %v3957
        %v3997 = vpop.f32.mrf.mxu0
        %v3998 = vadd.f32 0.0, %v3997
        %3999 = vmatmul.f32.gmra.mxu0 %v3960
        %v4000 = vpop.f32.mrf.mxu0
        %v4001 = vadd.f32 0.0, %v4000
        %4002 = vmatmul.f32.gmra.mxu0 %v3963
        %v4003 = vpop.f32.mrf.mxu0
        %v4004 = vadd.f32 0.0, %v4003
        %4005 = vmatmul.f32.gmra.mxu0 %v3966
        %v4006 = vpop.f32.mrf.mxu0
        %v4007 = vadd.f32 0.0, %v4006
        %4008 = vdwg.mxu0
        %v4009 = vadd.f32 %v3731, %v3986
        %v4010 = vadd.f32 %v3734, %v3989
        %v4011 = vadd.f32 %v3737, %v3992
        %v4012 = vadd.f32 %v3740, %v3995
        %v4013 = vadd.f32 %v3743, %v3998
        %v4014 = vadd.f32 %v3746, %v4001
        %v4015 = vadd.f32 %v3749, %v4004
        %v4016 = vadd.f32 %v3752, %v4007
        %v4017 = vld [vmem:[%s25] sm:$0x1]
        %v4019 = vperm.slane %v4017, 0
        %v4021 = vadd.f32 %v4009, %v4019
        %v4022 = vadd.f32 %v4010, %v4019
        %v4023 = vadd.f32 %v4011, %v4019
        %v4024 = vadd.f32 %v4012, %v4019
        %v4025 = vadd.f32 %v4013, %v4019
        %v4026 = vadd.f32 %v4014, %v4019
        %v4027 = vadd.f32 %v4015, %v4019
        %v4028 = vadd.f32 %v4016, %v4019
        %4029 = vst [vmem:[%s1165] sm:$0xff] %v4021
        %4030 = vst [vmem:[%s1165 + $0x8] sm:$0xff] %v4022
        %4031 = vst [vmem:[%s1165 + $0x10] sm:$0xff] %v4023
        %4032 = vst [vmem:[%s1165 + $0x18] sm:$0xff] %v4024
        %4033 = vst [vmem:[%s1165 + $0x20] sm:$0xff] %v4025
        %4034 = vst [vmem:[%s1165 + $0x28] sm:$0xff] %v4026
        %4035 = vst [vmem:[%s1165 + $0x30] sm:$0xff] %v4027
        %4036 = vst [vmem:[%s1165 + $0x38] sm:$0xff] %v4028
        %s4037 = sand.u32 %s635, 1
        %s4038 = scalar_lea.sflag [#allocation4], %s4037
        %s4039 = sand.u32 %s635, 1
        %s4040 = smul.addr %s4039, 64
        %s4041 = scalar_lea.vmem [#allocation31], %s4040
        // Predicated region
        $region197: #{tpu_custom_call.1} parent=123 // pred_check
          %p4042 = pneg %p645
        $region198: #{tpu_custom_call.1} parent=123 // pred_check_branch
          %4044 = sbr.rel (%p4042) target = $region200
        $region199: #{tpu_custom_call.1} parent=123 // pred_region
          %4046 = vsyncadd %s4038, 0
          %s4047 = smul.addr %s56, 8
          %s4048 = smul.addr %s4047, 8
          %s4049 = scalar_lea.hbm %s26, %s4048
          %s4050 = sshll.u32 %s4041, 4
          %s4051 = int_to_ptr.vmem [resolvable:$true] %s4050
          %s4052 = sshll.u32 %s4049, 4
          %s4053 = int_to_ptr.hbm [resolvable:$true] %s4052
          %4058 = dma.vmem_to_hbm [thread:$0]  %s4051, 1024, %s4053, %s4038, 128, 128, 8
        $region200: #{tpu_custom_call.1} parent=123 // pred_fallthru
          _
      $region124: #{tpu_custom_call.1} parent=5 // pred_fallthru
        _
      %p4059 = scmp.le.s32.totalorder 2, %s51
      // Predicated region
      $region201: #{tpu_custom_call.1} parent=5 // pred_check
        %p4060 = pneg %p4059
      $region202: #{tpu_custom_call.1} parent=5 // pred_check_branch
        %4062 = sbr.rel (%p4060) target = $region204
      $region203: #{tpu_custom_call.1} parent=5 // pred_region
        %s4063 = ssub.s32 %s51, 2
        // Predicated region
        $region205: #{tpu_custom_call.1} parent=203 // pred_check
          %p4064 = pneg %p651
        $region206: #{tpu_custom_call.1} parent=203 // pred_check_branch
          %4066 = sbr.rel (%p4064) target = $region208
        $region207: #{tpu_custom_call.1} parent=203 // pred_region
          %s4067 = sand.u32 %s636, 1
          %s4068 = scalar_lea.sflag [#allocation4], %s4067
          %s4069 = sand.u32 %s636, 1
          %s4070 = smul.addr %s4069, 64
          %s4071 = scalar_lea.vmem [#allocation31], %s4070
          %4073 = dma.done %s4068, 1024
        $region208: #{tpu_custom_call.1} parent=203 // pred_fallthru
          _
      $region204: #{tpu_custom_call.1} parent=5 // pred_fallthru
        _
    $region6: #{tpu_custom_call.1} parent=1 // loop_footer
      %s55 = sadd.s32 1, %s51
    $region7: #{tpu_custom_call.1} parent=1 // loop_footer_branch
      %50 = sbr.rel target = $region3
    $region8: #{tpu_custom_call.1} parent=1 // loop_exit
      _
    %4074 = vsyncpa [#allocation3], 1
    %s4075 = scalar_lea.sflag [#allocation3], 1
    %4076 = vsyncpa %s4075, 1
    %4077 = vsyncpa [#allocation6], 1
    %s4078 = scalar_lea.sflag [#allocation6], 1
    %4079 = vsyncpa %s4078, 1
    %4080 = vsyncpa [#allocation9], 1
    %s4081 = scalar_lea.sflag [#allocation9], 1
    %4082 = vsyncpa %s4081, 1
    %4083 = vsyncpa [#allocation12], 1
    %4084 = vsyncpa [#allocation15], 1
    %4085 = vsyncpa [#allocation18], 1
    %4086 = vsyncpa [#allocation21], 1
    %4087 = vsyncpa [#allocation24], 1
    %4088 = vsyncpa [#allocation27], 1
    %4089 = vsyncpa [#allocation30], 1
    %4090 = vsyncpa [#allocation4], 1
    %s4091 = scalar_lea.sflag [#allocation4], 1
    %4092 = vsyncpa %s4091, 1

</llo_original>
